<compile_context>
chip_gen: v5e
topology: v5e:2x2
jax: 0.10.0
libtpu: 0.0.40
codegen_flags: <defaults>
</compile_context>

<pallas_src>
import functools

import jax
import jax.numpy as jnp
import numpy as np
from jax import lax
from jax.experimental import pallas as pl
from jax.experimental.pallas import tpu as pltpu


def _round_up(x, m):
    return (x + m - 1) // m * m


def _pick_chunk(t, pref):
    """Largest multiple of 8 that divides `t` and is <= pref."""
    best = 8
    c = 8
    while c <= min(t, pref):
        if t % c == 0:
            best = c
        c += 8
    return best


def _dot_t_compensated(a, b):
    """a^T @ b with ~bf16x3 accuracy using default-precision MXU passes.

    The MXU rounds f32 operands to bf16 at default precision; splitting each
    operand into its bf16-representable hi part plus an f32 residual and
    summing the three dominant cross products recovers ~2^-17 relative
    accuracy while staying on the standard (always-lowering) matmul path.
    """
    dims = (((0,), (0,)), ((), ()))
    a_hi = a.astype(jnp.bfloat16).astype(jnp.float32)
    a_lo = a - a_hi
    b_hi = b.astype(jnp.bfloat16).astype(jnp.float32)
    b_lo = b - b_hi
    out = lax.dot_general(a_hi, b_hi, dims, preferred_element_type=jnp.float32)
    out = out + lax.dot_general(a_hi, b_lo, dims,
                                preferred_element_type=jnp.float32)
    out = out + lax.dot_general(a_lo, b_hi, dims,
                                preferred_element_type=jnp.float32)
    return out


# ----------------------------------------------------------------------------
# Fused kernel: sequential reservoir recurrence + Gram/cross-product
# accumulation over one time chunk.  Grid iterates over time chunks; the
# (1, Dp) reservoir state and the (Dp, Dp)/(O, Dp) accumulators are carried in
# VMEM scratch across grid steps.
#
#   u_ref      (Tc, inSize)   streamed input chunk
#   y_ref      (Tc, outSize)  streamed label chunk
#   winb_ref   (1, Dp)        Win bias row, padded lanes hold -1e9
#   wini_ref   (inSize, Dp)   Win input rows (padded with zeros)
#   wt_ref     (Dp, Dp)       W^T (padded with zeros)
#   uplace_ref (inSize, Dp)   0/1 matrix placing u_t at lane offset res+1
#   states_ref (Tc, resSize)  OUT: reservoir state trajectory chunk
#   g_ref      (Dp, Dp)       OUT: G = X X^T        (kernel feature order)
#   b_ref      (O, Dp)        OUT: B = Yt^T X^T     (kernel feature order)
#   x_state    (1, Dp)        VMEM scratch: reservoir state across grid steps
#   rows_ref   (Tc, Dp)       VMEM scratch: design rows [x | 1 | u | 0-pad]
#   pre_ref    (Tc, Dp)       VMEM scratch: hoisted input projection
#   g_acc      (Dp, Dp)       VMEM scratch: f32 Gram accumulator
#   b_acc      (O, Dp)        VMEM scratch: f32 cross-product accumulator
# ----------------------------------------------------------------------------
def _reservoir_gram_kernel(a, res_size,
                           u_ref, y_ref, winb_ref, wini_ref, wt_ref,
                           uplace_ref,
                           states_ref, g_ref, b_ref,
                           x_state, rows_ref, pre_ref, g_acc, b_acc):
    Tc = u_ref.shape[0]
    Dp = wt_ref.shape[1]

    # Zero the carried state / accumulators only on the first grid step.
    @pl.when(pl.program_id(0) == 0)
    def _():
        x_state[...] = jnp.zeros_like(x_state)
        g_acc[...] = jnp.zeros_like(g_acc)
        b_acc[...] = jnp.zeros_like(b_acc)

    u = u_ref[...]                                         # (Tc, inSize)

    # Hoisted input projection: one well-shaped MXU pass per chunk, off the
    # serial dependency chain.  Padded lanes get -1e9 (from winb) so the
    # nonlinearity keeps the padded state lanes at exactly 0.
    pre_ref[...] = winb_ref[...] + jnp.dot(
        u, wini_ref[...], preferred_element_type=jnp.float32)

    # Design-row prefix [0(res) | 1 | u_t | 0-pad], also off the serial chain:
    # u is placed at lane offset res+1 via a 0/1 placement matmul, the constant
    # "1" column via an iota compare (avoids lane-unaligned concatenation).
    lane = lax.broadcasted_iota(jnp.int32, (Tc, Dp), 1)
    rows_ref[...] = (jnp.dot(u, uplace_ref[...],
                             preferred_element_type=jnp.float32)
                     + (lane == res_size).astype(jnp.float32))

    # Keep W^T vreg-resident only while it is small (<= 16 f32 vregs);
    # otherwise re-read it from VMEM inside the loop (vld slots have slack,
    # spills around the serial chain would not).
    w_resident = Dp <= 128
    w_t_hoisted = wt_ref[...] if w_resident else None

    sub = lax.broadcasted_iota(jnp.int32, (8, Dp), 0)      # hoisted out of loop
    n_groups = Tc // 8

    def group(c, x):
        base = pl.multiple_of(c * 8, 8)
        w_t = w_t_hoisted if w_resident else wt_ref[...]
        pre8 = pre_ref[pl.ds(base, 8), :]        # one aligned tile load / 8 steps
        prefix8 = rows_ref[pl.ds(base, 8), :]
        xs = jnp.zeros((8, Dp), jnp.float32)
        for k in range(8):                       # unrolled serial steps
            pre = pre8[k:k + 1, :] + jnp.dot(
                x, w_t, preferred_element_type=jnp.float32)
            # sigmoid(p) == 0.5*(tanh(0.5*p)+1): one EUP op on the chain.
            # Pad lanes: pre = -1e9 -> tanh -> -1 -> contribution exactly 0.
            x = (1.0 - a) * x + (0.5 * a) * (jnp.tanh(0.5 * pre) + 1.0)
            xs = jnp.where(sub == k, x, xs)      # pack; off the serial chain
        # One sublane-aligned 8-row store per 8 serial steps.
        rows_ref[pl.ds(base, 8), :] = prefix8 + xs
        return x

    x_state[...] = lax.fori_loop(0, n_groups, group, x_state[...])

    # State trajectory output: x occupies lanes [0, res_size) of each row.
    states_ref[...] = rows_ref[:, pl.ds(0, res_size)]

    # Fused Gram / cross products (compensated precision, off the chain).
    rows = rows_ref[...]
    y = y_ref[...]
    g_acc[...] += _dot_t_compensated(rows, rows)
    b_acc[...] += _dot_t_compensated(y, rows)

    @pl.when(pl.program_id(0) == pl.num_programs(0) - 1)
    def _():
        g_ref[...] = g_acc[...]
        b_ref[...] = b_acc[...]


# ----------------------------------------------------------------------------
# Wrapper: ReservoirNet.forward(data, labels) -> (Wout, states)
# ----------------------------------------------------------------------------
def reservoir_forward(data, labels, Win, W, a, reg=1e-12, t_chunk=1024):
    data = jnp.asarray(data, jnp.float32)
    labels = jnp.asarray(labels, jnp.float32)
    Win = jnp.asarray(Win, jnp.float32)
    W = jnp.asarray(W, jnp.float32)

    T, in_size = data.shape
    res_size = W.shape[0]
    out_size = labels.shape[1]
    D = 1 + in_size + res_size
    Dp = _round_up(D, 128)                    # lane-dense padded feature width

    if T % 8 != 0:
        raise ValueError("T must be a multiple of 8")
        # TODO(synk): pad/mask the time tail for arbitrary T.

    # ---- padded weights; kernel-side feature order is [x | 1 | u | pad] ----
    win_t = Win.T                                            # (1+in, res)
    winb = jnp.full((1, Dp), -1e9, jnp.float32)              # pins pad lanes at 0
    winb = winb.at[:, :res_size].set(win_t[:1, :])
    wini = jnp.zeros((in_size, Dp), jnp.float32).at[:, :res_size].set(win_t[1:, :])
    wt = jnp.zeros((Dp, Dp), jnp.float32).at[:res_size, :res_size].set(W.T)
    uplace = jnp.zeros((in_size, Dp), jnp.float32)
    uplace = uplace.at[jnp.arange(in_size),
                       res_size + 1 + jnp.arange(in_size)].set(1.0)

    # ---- fused kernel: recurrence + Gram, grid over time chunks ------------
    Tc = _pick_chunk(T, t_chunk)              # Tc == T at the test size
    states, G_pad, B_pad = pl.pallas_call(
        functools.partial(_reservoir_gram_kernel, float(a), res_size),
        grid=(T // Tc,),
        in_specs=[
            pl.BlockSpec((Tc, in_size), lambda i: (i, 0)),   # u chunk (streamed)
            pl.BlockSpec((Tc, out_size), lambda i: (i, 0)),  # label chunk
            pl.BlockSpec((1, Dp), lambda i: (0, 0)),         # Win bias row
            pl.BlockSpec((in_size, Dp), lambda i: (0, 0)),   # Win input rows
            pl.BlockSpec((Dp, Dp), lambda i: (0, 0)),        # W^T (resident)
            pl.BlockSpec((in_size, Dp), lambda i: (0, 0)),   # u placement matrix
        ],
        out_specs=(
            pl.BlockSpec((Tc, res_size), lambda i: (i, 0)),  # states chunk
            pl.BlockSpec((Dp, Dp), lambda i: (0, 0)),        # G
            pl.BlockSpec((out_size, Dp), lambda i: (0, 0)),  # B
        ),
        out_shape=(
            jax.ShapeDtypeStruct((T, res_size), jnp.float32),
            jax.ShapeDtypeStruct((Dp, Dp), jnp.float32),
            jax.ShapeDtypeStruct((out_size, Dp), jnp.float32),
        ),
        scratch_shapes=[
            pltpu.VMEM((1, Dp), jnp.float32),          # carried reservoir state
            pltpu.VMEM((Tc, Dp), jnp.float32),         # design rows (chunk)
            pltpu.VMEM((Tc, Dp), jnp.float32),         # hoisted input projection
            pltpu.VMEM((Dp, Dp), jnp.float32),         # Gram accumulator
            pltpu.VMEM((out_size, Dp), jnp.float32),   # cross-product accumulator
        ],
        compiler_params=pltpu.CompilerParams(
            dimension_semantics=("arbitrary",),
            vmem_limit_bytes=32 * 1024 * 1024),
    )(data, labels, winb, wini, wt, uplace)

    # ---- tiny D x D ridge solve (plain JAX) ---------------------------------
    # TODO(synk): no Pallas primitive for a matrix solve/inverse; kept in XLA.
    G = G_pad[:D, :D]
    B = B_pad[:, :D]
    Wout_k = jnp.linalg.solve(G + reg * jnp.eye(D, dtype=jnp.float32), B.T).T
    # Reorder kernel feature order [x | 1 | u] -> PyTorch order [1 | u | x].
    order = np.concatenate([np.arange(res_size, res_size + 1 + in_size),
                            np.arange(res_size)])
    Wout = Wout_k[:, order]
    return Wout, states


# ----------------------------------------------------------------------------
# Pure-JAX reference for the recurrent trajectory (correctness check).
# ----------------------------------------------------------------------------
def _reference_states(data, Win, W, a):
    res_size = W.shape[0]

    def step(x, u):
        ou = jnp.concatenate([jnp.ones((1,), jnp.float32), u])
        pre = (jnp.dot(Win, ou, precision=jax.lax.Precision.HIGHEST)
               + jnp.dot(W, x, precision=jax.lax.Precision.HIGHEST))
        x_new = (1.0 - a) * x + a * jax.nn.sigmoid(pre)
        return x_new, x_new

    _, xs = lax.scan(step, jnp.zeros((res_size,), jnp.float32), data)
    return xs


if __name__ == "__main__":
    in_size, res_size, a = 4, 32, 0.3
    T, out_size = 512, 2
    reg = 1e-12

    key = jax.random.PRNGKey(0)
    k_win, k_w, k_u, k_y = jax.random.split(key, 4)

    # Deterministic parameter init mirroring ReservoirNet.__init__.
    Win = (jax.random.uniform(k_win, (res_size, 1 + in_size),
                              dtype=jnp.float32) - 0.5) * 2.4
    Win = jnp.where(jnp.abs(Win) > 0.6, 0.0, Win)
    W = jax.random.uniform(k_w, (res_size, res_size), dtype=jnp.float32) - 0.5
    rhoW = float(np.max(np.abs(np.linalg.eigvals(np.asarray(W)))))
    W = W * (1.25 / rhoW)

    data = jax.random.normal(k_u, (T, in_size), dtype=jnp.float32)
    labels = jax.random.normal(k_y, (T, out_size), dtype=jnp.float32)

    Wout, states = reservoir_forward(data, labels, Win, W, a, reg)
    Wout = jax.block_until_ready(Wout)
    states = jax.block_until_ready(states)

    # Sanity check against an f32 (HIGHEST) reference of the recurrence.  The
    # kernel's serial matmul uses default MXU precision (bf16 operands, f32
    # accumulation), so the tolerance is sized for that, not for bitwise math.
    ref = jax.block_until_ready(_reference_states(data, Win, W, a))
    assert Wout.shape == (out_size, 1 + in_size + res_size)
    assert states.shape == (T, res_size)
    assert np.allclose(np.asarray(states), np.asarray(ref), rtol=1e-2, atol=1e-2)
    assert bool(jnp.isfinite(Wout).all())

    print("KERNEL_OK")
</pallas_src>

<mosaic_0001>
module attributes {stable_mosaic.version = 11 : i64} {
  func.func @_reservoir_gram_kernel(%arg0: i32, %arg1: memref<512x4xf32, #tpu.memory_space<vmem>>, %arg2: memref<512x2xf32, #tpu.memory_space<vmem>>, %arg3: memref<1x128xf32, #tpu.memory_space<vmem>>, %arg4: memref<4x128xf32, #tpu.memory_space<vmem>>, %arg5: memref<128x128xf32, #tpu.memory_space<vmem>>, %arg6: memref<4x128xf32, #tpu.memory_space<vmem>>, %arg7: memref<512x32xf32, #tpu.memory_space<vmem>>, %arg8: memref<128x128xf32, #tpu.memory_space<vmem>>, %arg9: memref<2x128xf32, #tpu.memory_space<vmem>>, %arg10: memref<1x128xf32, #tpu.memory_space<vmem>>, %arg11: memref<512x128xf32, #tpu.memory_space<vmem>>, %arg12: memref<512x128xf32, #tpu.memory_space<vmem>>, %arg13: memref<128x128xf32, #tpu.memory_space<vmem>>, %arg14: memref<2x128xf32, #tpu.memory_space<vmem>>) attributes {dimension_semantics = [#tpu.dimension_semantics<arbitrary>], iteration_bounds = array<i64: 1>, scalar_prefetch = 0 : i64, scratch_operands = 5 : i64, tpu.core_type = #tpu.core_type<tc>, window_params = [{transform_indices = @transform_0, window_bounds = array<i64: 512, 4>}, {transform_indices = @transform_1, window_bounds = array<i64: 512, 2>}, {pipeline_mode = #tpu.pipeline_mode<synchronous>, transform_indices = @transform_2, window_bounds = array<i64: 1, 128>}, {pipeline_mode = #tpu.pipeline_mode<synchronous>, transform_indices = @transform_3, window_bounds = array<i64: 4, 128>}, {pipeline_mode = #tpu.pipeline_mode<synchronous>, transform_indices = @transform_4, window_bounds = array<i64: 128, 128>}, {pipeline_mode = #tpu.pipeline_mode<synchronous>, transform_indices = @transform_5, window_bounds = array<i64: 4, 128>}, {transform_indices = @transform_6, window_bounds = array<i64: 512, 32>}, {pipeline_mode = #tpu.pipeline_mode<synchronous>, transform_indices = @transform_7, window_bounds = array<i64: 128, 128>}, {pipeline_mode = #tpu.pipeline_mode<synchronous>, transform_indices = @transform_8, window_bounds = array<i64: 2, 128>}]} {
    %c0_i32 = arith.constant 0 : i32
    %0 = arith.cmpi eq, %arg0, %c0_i32 : i32
    %1 = arith.extui %0 : i1 to i32
    %c0_i32_0 = arith.constant 0 : i32
    %2 = arith.cmpi ne, %1, %c0_i32_0 : i32
    scf.if %2 {
      %cst_45 = arith.constant 0.000000e+00 : f32
      %60 = vector.broadcast %cst_45 : f32 to vector<1x128xf32>
      %c0_46 = arith.constant 0 : index
      %c0_47 = arith.constant 0 : index
      %61 = vector.load %arg10[%c0_46, %c0_47] : memref<1x128xf32, #tpu.memory_space<vmem>>, vector<1x128xf32>
      tpu.vector_store %arg10[%c0_46, %c0_47], %60 {strides = array<i32>} : memref<1x128xf32, #tpu.memory_space<vmem>>, vector<1x128xf32>,
      %cst_48 = arith.constant 0.000000e+00 : f32
      %62 = vector.broadcast %cst_48 : f32 to vector<128x128xf32>
      %c0_49 = arith.constant 0 : index
      %c0_50 = arith.constant 0 : index
      %63 = vector.load %arg13[%c0_49, %c0_50] : memref<128x128xf32, #tpu.memory_space<vmem>>, vector<128x128xf32>
      tpu.vector_store %arg13[%c0_49, %c0_50], %62 {strides = array<i32>} : memref<128x128xf32, #tpu.memory_space<vmem>>, vector<128x128xf32>,
      %cst_51 = arith.constant 0.000000e+00 : f32
      %64 = vector.broadcast %cst_51 : f32 to vector<2x128xf32>
      %c0_52 = arith.constant 0 : index
      %c0_53 = arith.constant 0 : index
      %65 = vector.load %arg14[%c0_52, %c0_53] : memref<2x128xf32, #tpu.memory_space<vmem>>, vector<2x128xf32>
      tpu.vector_store %arg14[%c0_52, %c0_53], %64 {strides = array<i32>} : memref<2x128xf32, #tpu.memory_space<vmem>>, vector<2x128xf32>,
    } else {
    }
    %c0 = arith.constant 0 : index
    %c0_1 = arith.constant 0 : index
    %3 = vector.load %arg1[%c0, %c0_1] : memref<512x4xf32, #tpu.memory_space<vmem>>, vector<512x4xf32>
    %c0_2 = arith.constant 0 : index
    %c0_3 = arith.constant 0 : index
    %4 = vector.load %arg3[%c0_2, %c0_3] : memref<1x128xf32, #tpu.memory_space<vmem>>, vector<1x128xf32>
    %c0_4 = arith.constant 0 : index
    %c0_5 = arith.constant 0 : index
    %5 = vector.load %arg4[%c0_4, %c0_5] : memref<4x128xf32, #tpu.memory_space<vmem>>, vector<4x128xf32>
    %cst = arith.constant dense<0.000000e+00> : vector<512x128xf32>
    %6 = tpu.matmul %3, %5, %cst {dimension_numbers = #tpu.dot_dimension_numbers<[1], [0], [0], [1], [0, 0, 1, 1], [], []>} : vector<512x4xf32>, vector<4x128xf32>, vector<512x128xf32> -> vector<512x128xf32>
    %7 = vector.broadcast %4 : vector<1x128xf32> to vector<512x128xf32>
    %8 = arith.addf %7, %6 : vector<512x128xf32>
    %c0_6 = arith.constant 0 : index
    %c0_7 = arith.constant 0 : index
    %9 = vector.load %arg12[%c0_6, %c0_7] : memref<512x128xf32, #tpu.memory_space<vmem>>, vector<512x128xf32>
    tpu.vector_store %arg12[%c0_6, %c0_7], %8 {strides = array<i32>} : memref<512x128xf32, #tpu.memory_space<vmem>>, vector<512x128xf32>,
    %10 = tpu.iota {dimensions = array<i32: 1>} : vector<512x128xi32>
    %c0_8 = arith.constant 0 : index
    %c0_9 = arith.constant 0 : index
    %11 = vector.load %arg6[%c0_8, %c0_9] : memref<4x128xf32, #tpu.memory_space<vmem>>, vector<4x128xf32>
    %cst_10 = arith.constant dense<0.000000e+00> : vector<512x128xf32>
    %12 = tpu.matmul %3, %11, %cst_10 {dimension_numbers = #tpu.dot_dimension_numbers<[1], [0], [0], [1], [0, 0, 1, 1], [], []>} : vector<512x4xf32>, vector<4x128xf32>, vector<512x128xf32> -> vector<512x128xf32>
    %c32_i32 = arith.constant 32 : i32
    %13 = vector.broadcast %c32_i32 : i32 to vector<512x128xi32>
    %14 = arith.cmpi eq, %10, %13 : vector<512x128xi32>
    %15 = arith.extui %14 : vector<512x128xi1> to vector<512x128xi32>
    %16 = arith.sitofp %15 : vector<512x128xi32> to vector<512x128xf32>
    %17 = arith.addf %12, %16 : vector<512x128xf32>
    %c0_11 = arith.constant 0 : index
    %c0_12 = arith.constant 0 : index
    %18 = vector.load %arg11[%c0_11, %c0_12] : memref<512x128xf32, #tpu.memory_space<vmem>>, vector<512x128xf32>
    tpu.vector_store %arg11[%c0_11, %c0_12], %17 {strides = array<i32>} : memref<512x128xf32, #tpu.memory_space<vmem>>, vector<512x128xf32>,
    %c0_13 = arith.constant 0 : index
    %c0_14 = arith.constant 0 : index
    %19 = vector.load %arg5[%c0_13, %c0_14] : memref<128x128xf32, #tpu.memory_space<vmem>>, vector<128x128xf32>
    %20 = tpu.iota {dimensions = array<i32: 0>} : vector<8x128xi32>
    %c0_15 = arith.constant 0 : index
    %c0_16 = arith.constant 0 : index
    %21 = vector.load %arg10[%c0_15, %c0_16] : memref<1x128xf32, #tpu.memory_space<vmem>>, vector<1x128xf32>
    %c0_i32_17 = arith.constant 0 : i32
    %c64_i32 = arith.constant 64 : i32
    %22 = arith.addi %c0_i32_17, %c64_i32 : i32
    %c1_i32 = arith.constant 1 : i32
    %23 = scf.for %arg15 = %c0_i32_17 to %22 step %c1_i32 iter_args(%arg16 = %21) -> (vector<1x128xf32>)  : i32 {
      %c8_i32 = arith.constant 8 : i32
      %60 = arith.muli %arg15, %c8_i32 : i32
      %61 = tpu.assume_multiple %60, 8 : i32
      %62 = arith.index_cast %61 : i32 to index
      %c0_45 = arith.constant 0 : index
      %63 = vector.load %arg12[%62, %c0_45] : memref<512x128xf32, #tpu.memory_space<vmem>>, vector<8x128xf32>
      %64 = arith.index_cast %61 : i32 to index
      %c0_46 = arith.constant 0 : index
      %65 = vector.load %arg11[%64, %c0_46] : memref<512x128xf32, #tpu.memory_space<vmem>>, vector<8x128xf32>
      %cst_47 = arith.constant 0.000000e+00 : f32
      %66 = vector.broadcast %cst_47 : f32 to vector<8x128xf32>
      %67 = vector.extract_strided_slice %63 {offsets = [0, 0], sizes = [1, 128], strides = [1, 1]} : vector<8x128xf32> to vector<1x128xf32>
      %cst_48 = arith.constant dense<0.000000e+00> : vector<1x128xf32>
      %68 = tpu.matmul %arg16, %19, %cst_48 {dimension_numbers = #tpu.dot_dimension_numbers<[1], [0], [0], [1], [0, 0, 1, 1], [], []>} : vector<1x128xf32>, vector<128x128xf32>, vector<1x128xf32> -> vector<1x128xf32>
      %69 = arith.addf %67, %68 : vector<1x128xf32>
      %cst_49 = arith.constant 0.699999988 : f32
      %70 = vector.broadcast %cst_49 : f32 to vector<1x128xf32>
      %71 = arith.mulf %70, %arg16 : vector<1x128xf32>
      %cst_50 = arith.constant 5.000000e-01 : f32
      %72 = vector.broadcast %cst_50 : f32 to vector<1x128xf32>
      %73 = arith.mulf %72, %69 : vector<1x128xf32>
      %74 = math.tanh %73 : vector<1x128xf32>
      %cst_51 = arith.constant 1.000000e+00 : f32
      %75 = vector.broadcast %cst_51 : f32 to vector<1x128xf32>
      %76 = arith.addf %74, %75 : vector<1x128xf32>
      %cst_52 = arith.constant 1.500000e-01 : f32
      %77 = vector.broadcast %cst_52 : f32 to vector<1x128xf32>
      %78 = arith.mulf %77, %76 : vector<1x128xf32>
      %79 = arith.addf %71, %78 : vector<1x128xf32>
      %c0_i32_53 = arith.constant 0 : i32
      %80 = vector.broadcast %c0_i32_53 : i32 to vector<8x128xi32>
      %81 = arith.cmpi eq, %20, %80 : vector<8x128xi32>
      %82 = vector.shape_cast %79 : vector<1x128xf32> to vector<1x128xf32>
      %83 = vector.broadcast %82 : vector<1x128xf32> to vector<8x128xf32>
      %84 = arith.select %81, %83, %66 : vector<8x128xi1>, vector<8x128xf32>
      %85 = vector.extract_strided_slice %63 {offsets = [1, 0], sizes = [1, 128], strides = [1, 1]} : vector<8x128xf32> to vector<1x128xf32>
      %cst_54 = arith.constant dense<0.000000e+00> : vector<1x128xf32>
      %86 = tpu.matmul %79, %19, %cst_54 {dimension_numbers = #tpu.dot_dimension_numbers<[1], [0], [0], [1], [0, 0, 1, 1], [], []>} : vector<1x128xf32>, vector<128x128xf32>, vector<1x128xf32> -> vector<1x128xf32>
      %87 = arith.addf %85, %86 : vector<1x128xf32>
      %cst_55 = arith.constant 0.699999988 : f32
      %88 = vector.broadcast %cst_55 : f32 to vector<1x128xf32>
      %89 = arith.mulf %88, %79 : vector<1x128xf32>
      %cst_56 = arith.constant 5.000000e-01 : f32
      %90 = vector.broadcast %cst_56 : f32 to vector<1x128xf32>
      %91 = arith.mulf %90, %87 : vector<1x128xf32>
      %92 = math.tanh %91 : vector<1x128xf32>
      %cst_57 = arith.constant 1.000000e+00 : f32
      %93 = vector.broadcast %cst_57 : f32 to vector<1x128xf32>
      %94 = arith.addf %92, %93 : vector<1x128xf32>
      %cst_58 = arith.constant 1.500000e-01 : f32
      %95 = vector.broadcast %cst_58 : f32 to vector<1x128xf32>
      %96 = arith.mulf %95, %94 : vector<1x128xf32>
      %97 = arith.addf %89, %96 : vector<1x128xf32>
      %c1_i32_59 = arith.constant 1 : i32
      %98 = vector.broadcast %c1_i32_59 : i32 to vector<8x128xi32>
      %99 = arith.cmpi eq, %20, %98 : vector<8x128xi32>
      %100 = vector.shape_cast %97 : vector<1x128xf32> to vector<1x128xf32>
      %101 = vector.broadcast %100 : vector<1x128xf32> to vector<8x128xf32>
      %102 = arith.select %99, %101, %84 : vector<8x128xi1>, vector<8x128xf32>
      %103 = vector.extract_strided_slice %63 {offsets = [2, 0], sizes = [1, 128], strides = [1, 1]} : vector<8x128xf32> to vector<1x128xf32>
      %cst_60 = arith.constant dense<0.000000e+00> : vector<1x128xf32>
      %104 = tpu.matmul %97, %19, %cst_60 {dimension_numbers = #tpu.dot_dimension_numbers<[1], [0], [0], [1], [0, 0, 1, 1], [], []>} : vector<1x128xf32>, vector<128x128xf32>, vector<1x128xf32> -> vector<1x128xf32>
      %105 = arith.addf %103, %104 : vector<1x128xf32>
      %cst_61 = arith.constant 0.699999988 : f32
      %106 = vector.broadcast %cst_61 : f32 to vector<1x128xf32>
      %107 = arith.mulf %106, %97 : vector<1x128xf32>
      %cst_62 = arith.constant 5.000000e-01 : f32
      %108 = vector.broadcast %cst_62 : f32 to vector<1x128xf32>
      %109 = arith.mulf %108, %105 : vector<1x128xf32>
      %110 = math.tanh %109 : vector<1x128xf32>
      %cst_63 = arith.constant 1.000000e+00 : f32
      %111 = vector.broadcast %cst_63 : f32 to vector<1x128xf32>
      %112 = arith.addf %110, %111 : vector<1x128xf32>
      %cst_64 = arith.constant 1.500000e-01 : f32
      %113 = vector.broadcast %cst_64 : f32 to vector<1x128xf32>
      %114 = arith.mulf %113, %112 : vector<1x128xf32>
      %115 = arith.addf %107, %114 : vector<1x128xf32>
      %c2_i32 = arith.constant 2 : i32
      %116 = vector.broadcast %c2_i32 : i32 to vector<8x128xi32>
      %117 = arith.cmpi eq, %20, %116 : vector<8x128xi32>
      %118 = vector.shape_cast %115 : vector<1x128xf32> to vector<1x128xf32>
      %119 = vector.broadcast %118 : vector<1x128xf32> to vector<8x128xf32>
      %120 = arith.select %117, %119, %102 : vector<8x128xi1>, vector<8x128xf32>
      %121 = vector.extract_strided_slice %63 {offsets = [3, 0], sizes = [1, 128], strides = [1, 1]} : vector<8x128xf32> to vector<1x128xf32>
      %cst_65 = arith.constant dense<0.000000e+00> : vector<1x128xf32>
      %122 = tpu.matmul %115, %19, %cst_65 {dimension_numbers = #tpu.dot_dimension_numbers<[1], [0], [0], [1], [0, 0, 1, 1], [], []>} : vector<1x128xf32>, vector<128x128xf32>, vector<1x128xf32> -> vector<1x128xf32>
      %123 = arith.addf %121, %122 : vector<1x128xf32>
      %cst_66 = arith.constant 0.699999988 : f32
      %124 = vector.broadcast %cst_66 : f32 to vector<1x128xf32>
      %125 = arith.mulf %124, %115 : vector<1x128xf32>
      %cst_67 = arith.constant 5.000000e-01 : f32
      %126 = vector.broadcast %cst_67 : f32 to vector<1x128xf32>
      %127 = arith.mulf %126, %123 : vector<1x128xf32>
      %128 = math.tanh %127 : vector<1x128xf32>
      %cst_68 = arith.constant 1.000000e+00 : f32
      %129 = vector.broadcast %cst_68 : f32 to vector<1x128xf32>
      %130 = arith.addf %128, %129 : vector<1x128xf32>
      %cst_69 = arith.constant 1.500000e-01 : f32
      %131 = vector.broadcast %cst_69 : f32 to vector<1x128xf32>
      %132 = arith.mulf %131, %130 : vector<1x128xf32>
      %133 = arith.addf %125, %132 : vector<1x128xf32>
      %c3_i32 = arith.constant 3 : i32
      %134 = vector.broadcast %c3_i32 : i32 to vector<8x128xi32>
      %135 = arith.cmpi eq, %20, %134 : vector<8x128xi32>
      %136 = vector.shape_cast %133 : vector<1x128xf32> to vector<1x128xf32>
      %137 = vector.broadcast %136 : vector<1x128xf32> to vector<8x128xf32>
      %138 = arith.select %135, %137, %120 : vector<8x128xi1>, vector<8x128xf32>
      %139 = vector.extract_strided_slice %63 {offsets = [4, 0], sizes = [1, 128], strides = [1, 1]} : vector<8x128xf32> to vector<1x128xf32>
      %cst_70 = arith.constant dense<0.000000e+00> : vector<1x128xf32>
      %140 = tpu.matmul %133, %19, %cst_70 {dimension_numbers = #tpu.dot_dimension_numbers<[1], [0], [0], [1], [0, 0, 1, 1], [], []>} : vector<1x128xf32>, vector<128x128xf32>, vector<1x128xf32> -> vector<1x128xf32>
      %141 = arith.addf %139, %140 : vector<1x128xf32>
      %cst_71 = arith.constant 0.699999988 : f32
      %142 = vector.broadcast %cst_71 : f32 to vector<1x128xf32>
      %143 = arith.mulf %142, %133 : vector<1x128xf32>
      %cst_72 = arith.constant 5.000000e-01 : f32
      %144 = vector.broadcast %cst_72 : f32 to vector<1x128xf32>
      %145 = arith.mulf %144, %141 : vector<1x128xf32>
      %146 = math.tanh %145 : vector<1x128xf32>
      %cst_73 = arith.constant 1.000000e+00 : f32
      %147 = vector.broadcast %cst_73 : f32 to vector<1x128xf32>
      %148 = arith.addf %146, %147 : vector<1x128xf32>
      %cst_74 = arith.constant 1.500000e-01 : f32
      %149 = vector.broadcast %cst_74 : f32 to vector<1x128xf32>
      %150 = arith.mulf %149, %148 : vector<1x128xf32>
      %151 = arith.addf %143, %150 : vector<1x128xf32>
      %c4_i32 = arith.constant 4 : i32
      %152 = vector.broadcast %c4_i32 : i32 to vector<8x128xi32>
      %153 = arith.cmpi eq, %20, %152 : vector<8x128xi32>
      %154 = vector.shape_cast %151 : vector<1x128xf32> to vector<1x128xf32>
      %155 = vector.broadcast %154 : vector<1x128xf32> to vector<8x128xf32>
      %156 = arith.select %153, %155, %138 : vector<8x128xi1>, vector<8x128xf32>
      %157 = vector.extract_strided_slice %63 {offsets = [5, 0], sizes = [1, 128], strides = [1, 1]} : vector<8x128xf32> to vector<1x128xf32>
      %cst_75 = arith.constant dense<0.000000e+00> : vector<1x128xf32>
      %158 = tpu.matmul %151, %19, %cst_75 {dimension_numbers = #tpu.dot_dimension_numbers<[1], [0], [0], [1], [0, 0, 1, 1], [], []>} : vector<1x128xf32>, vector<128x128xf32>, vector<1x128xf32> -> vector<1x128xf32>
      %159 = arith.addf %157, %158 : vector<1x128xf32>
      %cst_76 = arith.constant 0.699999988 : f32
      %160 = vector.broadcast %cst_76 : f32 to vector<1x128xf32>
      %161 = arith.mulf %160, %151 : vector<1x128xf32>
      %cst_77 = arith.constant 5.000000e-01 : f32
      %162 = vector.broadcast %cst_77 : f32 to vector<1x128xf32>
      %163 = arith.mulf %162, %159 : vector<1x128xf32>
      %164 = math.tanh %163 : vector<1x128xf32>
      %cst_78 = arith.constant 1.000000e+00 : f32
      %165 = vector.broadcast %cst_78 : f32 to vector<1x128xf32>
      %166 = arith.addf %164, %165 : vector<1x128xf32>
      %cst_79 = arith.constant 1.500000e-01 : f32
      %167 = vector.broadcast %cst_79 : f32 to vector<1x128xf32>
      %168 = arith.mulf %167, %166 : vector<1x128xf32>
      %169 = arith.addf %161, %168 : vector<1x128xf32>
      %c5_i32 = arith.constant 5 : i32
      %170 = vector.broadcast %c5_i32 : i32 to vector<8x128xi32>
      %171 = arith.cmpi eq, %20, %170 : vector<8x128xi32>
      %172 = vector.shape_cast %169 : vector<1x128xf32> to vector<1x128xf32>
      %173 = vector.broadcast %172 : vector<1x128xf32> to vector<8x128xf32>
      %174 = arith.select %171, %173, %156 : vector<8x128xi1>, vector<8x128xf32>
      %175 = vector.extract_strided_slice %63 {offsets = [6, 0], sizes = [1, 128], strides = [1, 1]} : vector<8x128xf32> to vector<1x128xf32>
      %cst_80 = arith.constant dense<0.000000e+00> : vector<1x128xf32>
      %176 = tpu.matmul %169, %19, %cst_80 {dimension_numbers = #tpu.dot_dimension_numbers<[1], [0], [0], [1], [0, 0, 1, 1], [], []>} : vector<1x128xf32>, vector<128x128xf32>, vector<1x128xf32> -> vector<1x128xf32>
      %177 = arith.addf %175, %176 : vector<1x128xf32>
      %cst_81 = arith.constant 0.699999988 : f32
      %178 = vector.broadcast %cst_81 : f32 to vector<1x128xf32>
      %179 = arith.mulf %178, %169 : vector<1x128xf32>
      %cst_82 = arith.constant 5.000000e-01 : f32
      %180 = vector.broadcast %cst_82 : f32 to vector<1x128xf32>
      %181 = arith.mulf %180, %177 : vector<1x128xf32>
      %182 = math.tanh %181 : vector<1x128xf32>
      %cst_83 = arith.constant 1.000000e+00 : f32
      %183 = vector.broadcast %cst_83 : f32 to vector<1x128xf32>
      %184 = arith.addf %182, %183 : vector<1x128xf32>
      %cst_84 = arith.constant 1.500000e-01 : f32
      %185 = vector.broadcast %cst_84 : f32 to vector<1x128xf32>
      %186 = arith.mulf %185, %184 : vector<1x128xf32>
      %187 = arith.addf %179, %186 : vector<1x128xf32>
      %c6_i32 = arith.constant 6 : i32
      %188 = vector.broadcast %c6_i32 : i32 to vector<8x128xi32>
      %189 = arith.cmpi eq, %20, %188 : vector<8x128xi32>
      %190 = vector.shape_cast %187 : vector<1x128xf32> to vector<1x128xf32>
      %191 = vector.broadcast %190 : vector<1x128xf32> to vector<8x128xf32>
      %192 = arith.select %189, %191, %174 : vector<8x128xi1>, vector<8x128xf32>
      %193 = vector.extract_strided_slice %63 {offsets = [7, 0], sizes = [1, 128], strides = [1, 1]} : vector<8x128xf32> to vector<1x128xf32>
      %cst_85 = arith.constant dense<0.000000e+00> : vector<1x128xf32>
      %194 = tpu.matmul %187, %19, %cst_85 {dimension_numbers = #tpu.dot_dimension_numbers<[1], [0], [0], [1], [0, 0, 1, 1], [], []>} : vector<1x128xf32>, vector<128x128xf32>, vector<1x128xf32> -> vector<1x128xf32>
      %195 = arith.addf %193, %194 : vector<1x128xf32>
      %cst_86 = arith.constant 0.699999988 : f32
      %196 = vector.broadcast %cst_86 : f32 to vector<1x128xf32>
      %197 = arith.mulf %196, %187 : vector<1x128xf32>
      %cst_87 = arith.constant 5.000000e-01 : f32
      %198 = vector.broadcast %cst_87 : f32 to vector<1x128xf32>
      %199 = arith.mulf %198, %195 : vector<1x128xf32>
      %200 = math.tanh %199 : vector<1x128xf32>
      %cst_88 = arith.constant 1.000000e+00 : f32
      %201 = vector.broadcast %cst_88 : f32 to vector<1x128xf32>
      %202 = arith.addf %200, %201 : vector<1x128xf32>
      %cst_89 = arith.constant 1.500000e-01 : f32
      %203 = vector.broadcast %cst_89 : f32 to vector<1x128xf32>
      %204 = arith.mulf %203, %202 : vector<1x128xf32>
      %205 = arith.addf %197, %204 : vector<1x128xf32>
      %c7_i32 = arith.constant 7 : i32
      %206 = vector.broadcast %c7_i32 : i32 to vector<8x128xi32>
      %207 = arith.cmpi eq, %20, %206 : vector<8x128xi32>
      %208 = vector.shape_cast %205 : vector<1x128xf32> to vector<1x128xf32>
      %209 = vector.broadcast %208 : vector<1x128xf32> to vector<8x128xf32>
      %210 = arith.select %207, %209, %192 : vector<8x128xi1>, vector<8x128xf32>
      %211 = arith.addf %65, %210 : vector<8x128xf32>
      %212 = arith.index_cast %61 : i32 to index
      %c0_90 = arith.constant 0 : index
      %213 = vector.load %arg11[%212, %c0_90] : memref<512x128xf32, #tpu.memory_space<vmem>>, vector<8x128xf32>
      tpu.vector_store %arg11[%212, %c0_90], %211 {strides = array<i32>} : memref<512x128xf32, #tpu.memory_space<vmem>>, vector<8x128xf32>,
      scf.yield %205 : vector<1x128xf32>
    }
    %c64_i32_18 = arith.constant 64 : i32
    %c0_19 = arith.constant 0 : index
    %c0_20 = arith.constant 0 : index
    %24 = vector.load %arg10[%c0_19, %c0_20] : memref<1x128xf32, #tpu.memory_space<vmem>>, vector<1x128xf32>
    tpu.vector_store %arg10[%c0_19, %c0_20], %23 {strides = array<i32>} : memref<1x128xf32, #tpu.memory_space<vmem>>, vector<1x128xf32>,
    %c0_21 = arith.constant 0 : index
    %c0_22 = arith.constant 0 : index
    %25 = vector.load %arg11[%c0_21, %c0_22] : memref<512x128xf32, #tpu.memory_space<vmem>>, vector<512x32xf32>
    %c0_23 = arith.constant 0 : index
    %c0_24 = arith.constant 0 : index
    %26 = vector.load %arg7[%c0_23, %c0_24] : memref<512x32xf32, #tpu.memory_space<vmem>>, vector<512x32xf32>
    tpu.vector_store %arg7[%c0_23, %c0_24], %25 {strides = array<i32>} : memref<512x32xf32, #tpu.memory_space<vmem>>, vector<512x32xf32>,
    %c0_25 = arith.constant 0 : index
    %c0_26 = arith.constant 0 : index
    %27 = vector.load %arg11[%c0_25, %c0_26] : memref<512x128xf32, #tpu.memory_space<vmem>>, vector<512x128xf32>
    %c0_27 = arith.constant 0 : index
    %c0_28 = arith.constant 0 : index
    %28 = vector.load %arg2[%c0_27, %c0_28] : memref<512x2xf32, #tpu.memory_space<vmem>>, vector<512x2xf32>
    %c0_29 = arith.constant 0 : index
    %c0_30 = arith.constant 0 : index
    %29 = vector.load %arg13[%c0_29, %c0_30] : memref<128x128xf32, #tpu.memory_space<vmem>>, vector<128x128xf32>
    %30 = arith.truncf %27 : vector<512x128xf32> to vector<512x128xbf16>
    %31 = arith.extf %30 : vector<512x128xbf16> to vector<512x128xf32>
    %32 = arith.subf %27, %31 : vector<512x128xf32>
    %33 = arith.truncf %27 : vector<512x128xf32> to vector<512x128xbf16>
    %34 = arith.extf %33 : vector<512x128xbf16> to vector<512x128xf32>
    %35 = arith.subf %27, %34 : vector<512x128xf32>
    %cst_31 = arith.constant dense<0.000000e+00> : vector<128x128xf32>
    %36 = tpu.matmul %31, %34, %cst_31 {dimension_numbers = #tpu.dot_dimension_numbers<[0], [0], [1], [1], [0, 1, 1, 1], [], []>} : vector<512x128xf32>, vector<512x128xf32>, vector<128x128xf32> -> vector<128x128xf32>
    %cst_32 = arith.constant dense<0.000000e+00> : vector<128x128xf32>
    %37 = tpu.matmul %31, %35, %cst_32 {dimension_numbers = #tpu.dot_dimension_numbers<[0], [0], [1], [1], [0, 1, 1, 1], [], []>} : vector<512x128xf32>, vector<512x128xf32>, vector<128x128xf32> -> vector<128x128xf32>
    %38 = arith.addf %36, %37 : vector<128x128xf32>
    %cst_33 = arith.constant dense<0.000000e+00> : vector<128x128xf32>
    %39 = tpu.matmul %32, %34, %cst_33 {dimension_numbers = #tpu.dot_dimension_numbers<[0], [0], [1], [1], [0, 1, 1, 1], [], []>} : vector<512x128xf32>, vector<512x128xf32>, vector<128x128xf32> -> vector<128x128xf32>
    %40 = arith.addf %38, %39 : vector<128x128xf32>
    %41 = arith.addf %29, %40 : vector<128x128xf32>
    %c0_34 = arith.constant 0 : index
    %c0_35 = arith.constant 0 : index
    %42 = vector.load %arg13[%c0_34, %c0_35] : memref<128x128xf32, #tpu.memory_space<vmem>>, vector<128x128xf32>
    tpu.vector_store %arg13[%c0_34, %c0_35], %41 {strides = array<i32>} : memref<128x128xf32, #tpu.memory_space<vmem>>, vector<128x128xf32>,
    %c0_36 = arith.constant 0 : index
    %c0_37 = arith.constant 0 : index
    %43 = vector.load %arg14[%c0_36, %c0_37] : memref<2x128xf32, #tpu.memory_space<vmem>>, vector<2x128xf32>
    %44 = arith.truncf %28 : vector<512x2xf32> to vector<512x2xbf16>
    %45 = arith.extf %44 : vector<512x2xbf16> to vector<512x2xf32>
    %46 = arith.subf %28, %45 : vector<512x2xf32>
    %47 = arith.truncf %27 : vector<512x128xf32> to vector<512x128xbf16>
    %48 = arith.extf %47 : vector<512x128xbf16> to vector<512x128xf32>
    %49 = arith.subf %27, %48 : vector<512x128xf32>
    %cst_38 = arith.constant dense<0.000000e+00> : vector<2x128xf32>
    %50 = tpu.matmul %45, %48, %cst_38 {dimension_numbers = #tpu.dot_dimension_numbers<[0], [0], [1], [1], [0, 1, 1, 1], [], []>} : vector<512x2xf32>, vector<512x128xf32>, vector<2x128xf32> -> vector<2x128xf32>
    %cst_39 = arith.constant dense<0.000000e+00> : vector<2x128xf32>
    %51 = tpu.matmul %45, %49, %cst_39 {dimension_numbers = #tpu.dot_dimension_numbers<[0], [0], [1], [1], [0, 1, 1, 1], [], []>} : vector<512x2xf32>, vector<512x128xf32>, vector<2x128xf32> -> vector<2x128xf32>
    %52 = arith.addf %50, %51 : vector<2x128xf32>
    %cst_40 = arith.constant dense<0.000000e+00> : vector<2x128xf32>
    %53 = tpu.matmul %46, %48, %cst_40 {dimension_numbers = #tpu.dot_dimension_numbers<[0], [0], [1], [1], [0, 1, 1, 1], [], []>} : vector<512x2xf32>, vector<512x128xf32>, vector<2x128xf32> -> vector<2x128xf32>
    %54 = arith.addf %52, %53 : vector<2x128xf32>
    %55 = arith.addf %43, %54 : vector<2x128xf32>
    %c0_41 = arith.constant 0 : index
    %c0_42 = arith.constant 0 : index
    %56 = vector.load %arg14[%c0_41, %c0_42] : memref<2x128xf32, #tpu.memory_space<vmem>>, vector<2x128xf32>
    tpu.vector_store %arg14[%c0_41, %c0_42], %55 {strides = array<i32>} : memref<2x128xf32, #tpu.memory_space<vmem>>, vector<2x128xf32>,
    %c0_i32_43 = arith.constant 0 : i32
    %57 = arith.cmpi eq, %arg0, %c0_i32_43 : i32
    %58 = arith.extui %57 : i1 to i32
    %c0_i32_44 = arith.constant 0 : i32
    %59 = arith.cmpi ne, %58, %c0_i32_44 : i32
    scf.if %59 {
      %c0_45 = arith.constant 0 : index
      %c0_46 = arith.constant 0 : index
      %60 = vector.load %arg13[%c0_45, %c0_46] : memref<128x128xf32, #tpu.memory_space<vmem>>, vector<128x128xf32>
      %c0_47 = arith.constant 0 : index
      %c0_48 = arith.constant 0 : index
      %61 = vector.load %arg8[%c0_47, %c0_48] : memref<128x128xf32, #tpu.memory_space<vmem>>, vector<128x128xf32>
      tpu.vector_store %arg8[%c0_47, %c0_48], %60 {strides = array<i32>} : memref<128x128xf32, #tpu.memory_space<vmem>>, vector<128x128xf32>,
      %c0_49 = arith.constant 0 : index
      %c0_50 = arith.constant 0 : index
      %62 = vector.load %arg14[%c0_49, %c0_50] : memref<2x128xf32, #tpu.memory_space<vmem>>, vector<2x128xf32>
      %c0_51 = arith.constant 0 : index
      %c0_52 = arith.constant 0 : index
      %63 = vector.load %arg9[%c0_51, %c0_52] : memref<2x128xf32, #tpu.memory_space<vmem>>, vector<2x128xf32>
      tpu.vector_store %arg9[%c0_51, %c0_52], %62 {strides = array<i32>} : memref<2x128xf32, #tpu.memory_space<vmem>>, vector<2x128xf32>,
    } else {
    }
    return
  }
  func.func @transform_0(%arg0: i32) -> (i32, i32) {
    %c0_i32 = arith.constant 0 : i32
    %c0_i32_0 = arith.constant 0 : i32
    return %arg0, %c0_i32 : i32, i32
  }
  func.func @transform_1(%arg0: i32) -> (i32, i32) {
    %c0_i32 = arith.constant 0 : i32
    %c0_i32_0 = arith.constant 0 : i32
    return %arg0, %c0_i32 : i32, i32
  }
  func.func @transform_2(%arg0: i32) -> (i32, i32) {
    %c0_i32 = arith.constant 0 : i32
    %c0_i32_0 = arith.constant 0 : i32
    %c0_i32_1 = arith.constant 0 : i32
    return %c0_i32, %c0_i32_0 : i32, i32
  }
  func.func @transform_3(%arg0: i32) -> (i32, i32) {
    %c0_i32 = arith.constant 0 : i32
    %c0_i32_0 = arith.constant 0 : i32
    %c0_i32_1 = arith.constant 0 : i32
    return %c0_i32, %c0_i32_0 : i32, i32
  }
  func.func @transform_4(%arg0: i32) -> (i32, i32) {
    %c0_i32 = arith.constant 0 : i32
    %c0_i32_0 = arith.constant 0 : i32
    %c0_i32_1 = arith.constant 0 : i32
    return %c0_i32, %c0_i32_0 : i32, i32
  }
  func.func @transform_5(%arg0: i32) -> (i32, i32) {
    %c0_i32 = arith.constant 0 : i32
    %c0_i32_0 = arith.constant 0 : i32
    %c0_i32_1 = arith.constant 0 : i32
    return %c0_i32, %c0_i32_0 : i32, i32
  }
  func.func @transform_6(%arg0: i32) -> (i32, i32) {
    %c0_i32 = arith.constant 0 : i32
    %c0_i32_0 = arith.constant 0 : i32
    return %arg0, %c0_i32 : i32, i32
  }
  func.func @transform_7(%arg0: i32) -> (i32, i32) {
    %c0_i32 = arith.constant 0 : i32
    %c0_i32_0 = arith.constant 0 : i32
    %c0_i32_1 = arith.constant 0 : i32
    return %c0_i32, %c0_i32_0 : i32, i32
  }
  func.func @transform_8(%arg0: i32) -> (i32, i32) {
    %c0_i32 = arith.constant 0 : i32
    %c0_i32_0 = arith.constant 0 : i32
    %c0_i32_1 = arith.constant 0 : i32
    return %c0_i32, %c0_i32_0 : i32, i32
  }
}

</mosaic_0001>

<llo_original>
// kernel: tpu_custom_call.1
$region0: #{tpu_custom_call.1}
  #allocation0 [shape = 'u32[]', space=smem, size = 0x4, offset = 0x4, fixed_abs, tag = 'smem constant byte address 0x4 - core index']
  #allocation1 [shape = 'u32[72,128]{1,0:T(1,128)}', space=vmem, size = 0x9000, scoped, tag = 'internal scratch']
  #allocation2 [shape = 'f32[1,128]{1,0:T(1,128)}', space=vmem, size = 0x200, scoped, tag = 'scratch operand']
  #allocation3 [shape = 'f32[512,128]{1,0:T(8,128)}', space=vmem, size = 0x40000, scoped, tag = 'scratch operand']
  #allocation4 [shape = 'f32[512,128]{1,0:T(8,128)}', space=vmem, size = 0x40000, scoped, tag = 'scratch operand']
  #allocation5 [shape = 'f32[128,128]{1,0:T(8,128)}', space=vmem, size = 0x10000, scoped, tag = 'scratch operand']
  #allocation6 [shape = 'f32[2,128]{1,0:T(2,128)}', space=vmem, size = 0x400, scoped, tag = 'scratch operand']
  %s0 = inlined_call_operand.vmem [shape: f32[512,4], index: 0, kind: input, shape index: {}]
  %s1 = inlined_call_operand.vmem [shape: f32[512,2], index: 1, kind: input, shape index: {}]
  %s2 = inlined_call_operand.vmem [shape: f32[1,128], index: 2, kind: input, shape index: {}]
  %s3 = inlined_call_operand.vmem [shape: f32[4,128], index: 3, kind: input, shape index: {}]
  %s4 = inlined_call_operand.vmem [shape: f32[128,128], index: 4, kind: input, shape index: {}]
  %s5 = inlined_call_operand.vmem [shape: f32[4,128], index: 5, kind: input, shape index: {}]
  %s6 = inlined_call_operand.vmem [shape: f32[512,32], index: 6, kind: output, shape index: {0}]
  %s7 = inlined_call_operand.hbm [shape: f32[128,128], index: 7, kind: output, shape index: {1}]
  %s8 = inlined_call_operand.hbm [shape: f32[2,128], index: 8, kind: output, shape index: {2}]
  %9 = xla_tuple %s6, %s7, %s8
  %s10 = sld [smem:[#allocation0]]
  $region65: #{tpu_custom_call.1} parent=0
    _
  %s12 = ssub.s32 1, %s10
  %s13 = scalar_select 0, %s12, %s10
  $region1: #{tpu_custom_call.1} parent=0
    #allocation7 [shape = 'u8[65536]{0}', space=vmem, size = 0x10000, scoped, tag = 'output window, operand 1, single buffered']
    #allocation8 [shape = 's32[1]{0}', space=sflag, size = 0x4, scoped, tag = 'scoped memory for tpu_custom_call.1']
    #allocation9 [shape = 'u8[1024]{0}', space=vmem, size = 0x400, scoped, tag = 'output window, operand 2, single buffered']
    #allocation10 [shape = 's32[1]{0}', space=sflag, size = 0x4, scoped, tag = 'scoped memory for tpu_custom_call.1']
    %14 = vsyncpa [#allocation8], 0
    %15 = vsyncpa [#allocation10], 0
    // Predicated region
    $region2: #{tpu_custom_call.1} parent=1 // pred_check
      _
    $region3: #{tpu_custom_call.1} parent=1 // pred_check_branch
      %17 = sbr.rel (0) target = $region5
    $region4: #{tpu_custom_call.1} parent=1 // pred_region
      _
    $region5: #{tpu_custom_call.1} parent=1 // pred_fallthru
      _
    // Predicated region
    $region6: #{tpu_custom_call.1} parent=1 // pred_check
      _
    $region7: #{tpu_custom_call.1} parent=1 // pred_check_branch
      %19 = sbr.rel (0) target = $region9
    $region8: #{tpu_custom_call.1} parent=1 // pred_region
      _
    $region9: #{tpu_custom_call.1} parent=1 // pred_fallthru
      _
    // Predicated region
    $region10: #{tpu_custom_call.1} parent=1 // pred_check
      _
    $region11: #{tpu_custom_call.1} parent=1 // pred_check_branch
      %21 = sbr.rel (0) target = $region13
    $region12: #{tpu_custom_call.1} parent=1 // pred_region
      _
    $region13: #{tpu_custom_call.1} parent=1 // pred_fallthru
      _
    // Predicated region
    $region14: #{tpu_custom_call.1} parent=1 // pred_check
      _
    $region15: #{tpu_custom_call.1} parent=1 // pred_check_branch
      %23 = sbr.rel (0) target = $region17
    $region16: #{tpu_custom_call.1} parent=1 // pred_region
      _
    $region17: #{tpu_custom_call.1} parent=1 // pred_fallthru
      _
    // Predicated region
    $region18: #{tpu_custom_call.1} parent=1 // pred_check
      _
    $region19: #{tpu_custom_call.1} parent=1 // pred_check_branch
      %25 = sbr.rel (0) target = $region21
    $region20: #{tpu_custom_call.1} parent=1 // pred_region
      _
    $region21: #{tpu_custom_call.1} parent=1 // pred_fallthru
      _
    // Predicated region
    $region22: #{tpu_custom_call.1} parent=1 // pred_check
      _
    $region23: #{tpu_custom_call.1} parent=1 // pred_check_branch
      %27 = sbr.rel (0) target = $region25
    $region24: #{tpu_custom_call.1} parent=1 // pred_region
      _
    $region25: #{tpu_custom_call.1} parent=1 // pred_fallthru
      _
    %p28 = scmp.eq.s32.totalorder 0, 0
    // Predicated region
    $region26: #{tpu_custom_call.1} parent=1 // pred_check
      %p29 = pneg %p28
    $region27: #{tpu_custom_call.1} parent=1 // pred_check_branch
      %31 = sbr.rel (%p29) target = $region29
    $region28: #{tpu_custom_call.1} parent=1 // pred_region
      %32 = vst [vmem:[#allocation2] sm:$0x1] 0.0
      %33 = vst [vmem:[#allocation5] sm:$0xff] 0.0
      %34 = vst [vmem:[#allocation5 + $0x8] sm:$0xff] 0.0
      %35 = vst [vmem:[#allocation5 + $0x10] sm:$0xff] 0.0
      %36 = vst [vmem:[#allocation5 + $0x18] sm:$0xff] 0.0
      %37 = vst [vmem:[#allocation5 + $0x20] sm:$0xff] 0.0
      %38 = vst [vmem:[#allocation5 + $0x28] sm:$0xff] 0.0
      %39 = vst [vmem:[#allocation5 + $0x30] sm:$0xff] 0.0
      %40 = vst [vmem:[#allocation5 + $0x38] sm:$0xff] 0.0
      %41 = vst [vmem:[#allocation5 + $0x40] sm:$0xff] 0.0
      %42 = vst [vmem:[#allocation5 + $0x48] sm:$0xff] 0.0
      %43 = vst [vmem:[#allocation5 + $0x50] sm:$0xff] 0.0
      %44 = vst [vmem:[#allocation5 + $0x58] sm:$0xff] 0.0
      %45 = vst [vmem:[#allocation5 + $0x60] sm:$0xff] 0.0
      %46 = vst [vmem:[#allocation5 + $0x68] sm:$0xff] 0.0
      %47 = vst [vmem:[#allocation5 + $0x70] sm:$0xff] 0.0
      %48 = vst [vmem:[#allocation5 + $0x78] sm:$0xff] 0.0
      %49 = vst [vmem:[#allocation6] sm:$0x3] 0.0
    $region29: #{tpu_custom_call.1} parent=1 // pred_fallthru
      _
    %v50 = vld [vmem:[%s0] sm:$0xff]
    %v51 = vld [vmem:[%s0 + $0x8] sm:$0xff]
    %v52 = vld [vmem:[%s0 + $0x10] sm:$0xff]
    %v53 = vld [vmem:[%s0 + $0x18] sm:$0xff]
    %v54 = vld [vmem:[%s0 + $0x20] sm:$0xff]
    %v55 = vld [vmem:[%s0 + $0x28] sm:$0xff]
    %v56 = vld [vmem:[%s0 + $0x30] sm:$0xff]
    %v57 = vld [vmem:[%s0 + $0x38] sm:$0xff]
    %v58 = vld [vmem:[%s0 + $0x40] sm:$0xff]
    %v59 = vld [vmem:[%s0 + $0x48] sm:$0xff]
    %v60 = vld [vmem:[%s0 + $0x50] sm:$0xff]
    %v61 = vld [vmem:[%s0 + $0x58] sm:$0xff]
    %v62 = vld [vmem:[%s0 + $0x60] sm:$0xff]
    %v63 = vld [vmem:[%s0 + $0x68] sm:$0xff]
    %v64 = vld [vmem:[%s0 + $0x70] sm:$0xff]
    %v65 = vld [vmem:[%s0 + $0x78] sm:$0xff]
    %v66 = vld [vmem:[%s0 + $0x80] sm:$0xff]
    %v67 = vld [vmem:[%s0 + $0x88] sm:$0xff]
    %v68 = vld [vmem:[%s0 + $0x90] sm:$0xff]
    %v69 = vld [vmem:[%s0 + $0x98] sm:$0xff]
    %v70 = vld [vmem:[%s0 + $0xa0] sm:$0xff]
    %v71 = vld [vmem:[%s0 + $0xa8] sm:$0xff]
    %v72 = vld [vmem:[%s0 + $0xb0] sm:$0xff]
    %v73 = vld [vmem:[%s0 + $0xb8] sm:$0xff]
    %v74 = vld [vmem:[%s0 + $0xc0] sm:$0xff]
    %v75 = vld [vmem:[%s0 + $0xc8] sm:$0xff]
    %v76 = vld [vmem:[%s0 + $0xd0] sm:$0xff]
    %v77 = vld [vmem:[%s0 + $0xd8] sm:$0xff]
    %v78 = vld [vmem:[%s0 + $0xe0] sm:$0xff]
    %v79 = vld [vmem:[%s0 + $0xe8] sm:$0xff]
    %v80 = vld [vmem:[%s0 + $0xf0] sm:$0xff]
    %v81 = vld [vmem:[%s0 + $0xf8] sm:$0xff]
    %v82 = vld [vmem:[%s0 + $0x100] sm:$0xff]
    %v83 = vld [vmem:[%s0 + $0x108] sm:$0xff]
    %v84 = vld [vmem:[%s0 + $0x110] sm:$0xff]
    %v85 = vld [vmem:[%s0 + $0x118] sm:$0xff]
    %v86 = vld [vmem:[%s0 + $0x120] sm:$0xff]
    %v87 = vld [vmem:[%s0 + $0x128] sm:$0xff]
    %v88 = vld [vmem:[%s0 + $0x130] sm:$0xff]
    %v89 = vld [vmem:[%s0 + $0x138] sm:$0xff]
    %v90 = vld [vmem:[%s0 + $0x140] sm:$0xff]
    %v91 = vld [vmem:[%s0 + $0x148] sm:$0xff]
    %v92 = vld [vmem:[%s0 + $0x150] sm:$0xff]
    %v93 = vld [vmem:[%s0 + $0x158] sm:$0xff]
    %v94 = vld [vmem:[%s0 + $0x160] sm:$0xff]
    %v95 = vld [vmem:[%s0 + $0x168] sm:$0xff]
    %v96 = vld [vmem:[%s0 + $0x170] sm:$0xff]
    %v97 = vld [vmem:[%s0 + $0x178] sm:$0xff]
    %v98 = vld [vmem:[%s0 + $0x180] sm:$0xff]
    %v99 = vld [vmem:[%s0 + $0x188] sm:$0xff]
    %v100 = vld [vmem:[%s0 + $0x190] sm:$0xff]
    %v101 = vld [vmem:[%s0 + $0x198] sm:$0xff]
    %v102 = vld [vmem:[%s0 + $0x1a0] sm:$0xff]
    %v103 = vld [vmem:[%s0 + $0x1a8] sm:$0xff]
    %v104 = vld [vmem:[%s0 + $0x1b0] sm:$0xff]
    %v105 = vld [vmem:[%s0 + $0x1b8] sm:$0xff]
    %v106 = vld [vmem:[%s0 + $0x1c0] sm:$0xff]
    %v107 = vld [vmem:[%s0 + $0x1c8] sm:$0xff]
    %v108 = vld [vmem:[%s0 + $0x1d0] sm:$0xff]
    %v109 = vld [vmem:[%s0 + $0x1d8] sm:$0xff]
    %v110 = vld [vmem:[%s0 + $0x1e0] sm:$0xff]
    %v111 = vld [vmem:[%s0 + $0x1e8] sm:$0xff]
    %v112 = vld [vmem:[%s0 + $0x1f0] sm:$0xff]
    %v113 = vld [vmem:[%s0 + $0x1f8] sm:$0xff]
    %v114 = vld [vmem:[%s2] sm:$0x1]
    %v115 = vld [vmem:[%s3] sm:$0xf]
    %vm116 = vcmask 31744
    %v118 = vsel %vm116, %v50, 0
    %v121 = vsel %vm116, %v51, 0
    %v124 = vsel %vm116, %v52, 0
    %v127 = vsel %vm116, %v53, 0
    %v130 = vsel %vm116, %v54, 0
    %v133 = vsel %vm116, %v55, 0
    %v136 = vsel %vm116, %v56, 0
    %v139 = vsel %vm116, %v57, 0
    %v142 = vsel %vm116, %v58, 0
    %v145 = vsel %vm116, %v59, 0
    %v148 = vsel %vm116, %v60, 0
    %v151 = vsel %vm116, %v61, 0
    %v154 = vsel %vm116, %v62, 0
    %v157 = vsel %vm116, %v63, 0
    %v160 = vsel %vm116, %v64, 0
    %v163 = vsel %vm116, %v65, 0
    %v166 = vsel %vm116, %v66, 0
    %v169 = vsel %vm116, %v67, 0
    %v172 = vsel %vm116, %v68, 0
    %v175 = vsel %vm116, %v69, 0
    %v178 = vsel %vm116, %v70, 0
    %v181 = vsel %vm116, %v71, 0
    %v184 = vsel %vm116, %v72, 0
    %v187 = vsel %vm116, %v73, 0
    %v190 = vsel %vm116, %v74, 0
    %v193 = vsel %vm116, %v75, 0
    %v196 = vsel %vm116, %v76, 0
    %v199 = vsel %vm116, %v77, 0
    %v202 = vsel %vm116, %v78, 0
    %v205 = vsel %vm116, %v79, 0
    %v208 = vsel %vm116, %v80, 0
    %v211 = vsel %vm116, %v81, 0
    %v214 = vsel %vm116, %v82, 0
    %v217 = vsel %vm116, %v83, 0
    %v220 = vsel %vm116, %v84, 0
    %v223 = vsel %vm116, %v85, 0
    %v226 = vsel %vm116, %v86, 0
    %v229 = vsel %vm116, %v87, 0
    %v232 = vsel %vm116, %v88, 0
    %v235 = vsel %vm116, %v89, 0
    %v238 = vsel %vm116, %v90, 0
    %v241 = vsel %vm116, %v91, 0
    %v244 = vsel %vm116, %v92, 0
    %v247 = vsel %vm116, %v93, 0
    %v250 = vsel %vm116, %v94, 0
    %v253 = vsel %vm116, %v95, 0
    %v256 = vsel %vm116, %v96, 0
    %v259 = vsel %vm116, %v97, 0
    %v262 = vsel %vm116, %v98, 0
    %v265 = vsel %vm116, %v99, 0
    %v268 = vsel %vm116, %v100, 0
    %v271 = vsel %vm116, %v101, 0
    %v274 = vsel %vm116, %v102, 0
    %v277 = vsel %vm116, %v103, 0
    %v280 = vsel %vm116, %v104, 0
    %v283 = vsel %vm116, %v105, 0
    %v286 = vsel %vm116, %v106, 0
    %v289 = vsel %vm116, %v107, 0
    %v292 = vsel %vm116, %v108, 0
    %v295 = vsel %vm116, %v109, 0
    %v298 = vsel %vm116, %v110, 0
    %v301 = vsel %vm116, %v111, 0
    %v304 = vsel %vm116, %v112, 0
    %v307 = vsel %vm116, %v113, 0
    %vm309 = vcmask 1043456
    %v311 = vsel %vm309, %v115, 0
    %313 = vmatpush.msra.mxu0 0.0
    %314 = vmatpush.msra.mxu0 0.0
    %315 = vmatpush.msra.mxu0 0.0
    %316 = vmatpush.msra.mxu0 0.0
    %317 = vmatpush.msra.mxu0 0.0
    %318 = vmatpush.msra.mxu0 0.0
    %319 = vmatpush.msra.mxu0 0.0
    %320 = vmatpush.msra.mxu0 0.0
    %321 = vmatpush.msra.mxu0 0.0
    %322 = vmatpush.msra.mxu0 0.0
    %323 = vmatpush.msra.mxu0 0.0
    %324 = vmatpush.msra.mxu0 0.0
    %325 = vmatpush.msra.mxu0 0.0
    %326 = vmatpush.msra.mxu0 0.0
    %327 = vmatpush.msra.mxu0 0.0
    %328 = vmatpush.msra.mxu0 %v311
    %329 = vmatmul.f32.gmra.mxu0 %v118
    %v330 = vpop.f32.mrf.mxu0
    %v331 = vadd.f32 0.0, %v330
    %332 = vmatmul.f32.gmra.mxu0 %v121
    %v333 = vpop.f32.mrf.mxu0
    %v334 = vadd.f32 0.0, %v333
    %335 = vmatmul.f32.gmra.mxu0 %v124
    %v336 = vpop.f32.mrf.mxu0
    %v337 = vadd.f32 0.0, %v336
    %338 = vmatmul.f32.gmra.mxu0 %v127
    %v339 = vpop.f32.mrf.mxu0
    %v340 = vadd.f32 0.0, %v339
    %341 = vmatmul.f32.gmra.mxu0 %v130
    %v342 = vpop.f32.mrf.mxu0
    %v343 = vadd.f32 0.0, %v342
    %344 = vmatmul.f32.gmra.mxu0 %v133
    %v345 = vpop.f32.mrf.mxu0
    %v346 = vadd.f32 0.0, %v345
    %347 = vmatmul.f32.gmra.mxu0 %v136
    %v348 = vpop.f32.mrf.mxu0
    %v349 = vadd.f32 0.0, %v348
    %350 = vmatmul.f32.gmra.mxu0 %v139
    %v351 = vpop.f32.mrf.mxu0
    %v352 = vadd.f32 0.0, %v351
    %353 = vmatmul.f32.gmra.mxu0 %v142
    %v354 = vpop.f32.mrf.mxu0
    %v355 = vadd.f32 0.0, %v354
    %356 = vmatmul.f32.gmra.mxu0 %v145
    %v357 = vpop.f32.mrf.mxu0
    %v358 = vadd.f32 0.0, %v357
    %359 = vmatmul.f32.gmra.mxu0 %v148
    %v360 = vpop.f32.mrf.mxu0
    %v361 = vadd.f32 0.0, %v360
    %362 = vmatmul.f32.gmra.mxu0 %v151
    %v363 = vpop.f32.mrf.mxu0
    %v364 = vadd.f32 0.0, %v363
    %365 = vmatmul.f32.gmra.mxu0 %v154
    %v366 = vpop.f32.mrf.mxu0
    %v367 = vadd.f32 0.0, %v366
    %368 = vmatmul.f32.gmra.mxu0 %v157
    %v369 = vpop.f32.mrf.mxu0
    %v370 = vadd.f32 0.0, %v369
    %371 = vmatmul.f32.gmra.mxu0 %v160
    %v372 = vpop.f32.mrf.mxu0
    %v373 = vadd.f32 0.0, %v372
    %374 = vmatmul.f32.gmra.mxu0 %v163
    %v375 = vpop.f32.mrf.mxu0
    %v376 = vadd.f32 0.0, %v375
    %377 = vmatmul.f32.gmra.mxu0 %v166
    %v378 = vpop.f32.mrf.mxu0
    %v379 = vadd.f32 0.0, %v378
    %380 = vmatmul.f32.gmra.mxu0 %v169
    %v381 = vpop.f32.mrf.mxu0
    %v382 = vadd.f32 0.0, %v381
    %383 = vmatmul.f32.gmra.mxu0 %v172
    %v384 = vpop.f32.mrf.mxu0
    %v385 = vadd.f32 0.0, %v384
    %386 = vmatmul.f32.gmra.mxu0 %v175
    %v387 = vpop.f32.mrf.mxu0
    %v388 = vadd.f32 0.0, %v387
    %389 = vmatmul.f32.gmra.mxu0 %v178
    %v390 = vpop.f32.mrf.mxu0
    %v391 = vadd.f32 0.0, %v390
    %392 = vmatmul.f32.gmra.mxu0 %v181
    %v393 = vpop.f32.mrf.mxu0
    %v394 = vadd.f32 0.0, %v393
    %395 = vmatmul.f32.gmra.mxu0 %v184
    %v396 = vpop.f32.mrf.mxu0
    %v397 = vadd.f32 0.0, %v396
    %398 = vmatmul.f32.gmra.mxu0 %v187
    %v399 = vpop.f32.mrf.mxu0
    %v400 = vadd.f32 0.0, %v399
    %401 = vmatmul.f32.gmra.mxu0 %v190
    %v402 = vpop.f32.mrf.mxu0
    %v403 = vadd.f32 0.0, %v402
    %404 = vmatmul.f32.gmra.mxu0 %v193
    %v405 = vpop.f32.mrf.mxu0
    %v406 = vadd.f32 0.0, %v405
    %407 = vmatmul.f32.gmra.mxu0 %v196
    %v408 = vpop.f32.mrf.mxu0
    %v409 = vadd.f32 0.0, %v408
    %410 = vmatmul.f32.gmra.mxu0 %v199
    %v411 = vpop.f32.mrf.mxu0
    %v412 = vadd.f32 0.0, %v411
    %413 = vmatmul.f32.gmra.mxu0 %v202
    %v414 = vpop.f32.mrf.mxu0
    %v415 = vadd.f32 0.0, %v414
    %416 = vmatmul.f32.gmra.mxu0 %v205
    %v417 = vpop.f32.mrf.mxu0
    %v418 = vadd.f32 0.0, %v417
    %419 = vmatmul.f32.gmra.mxu0 %v208
    %v420 = vpop.f32.mrf.mxu0
    %v421 = vadd.f32 0.0, %v420
    %422 = vmatmul.f32.gmra.mxu0 %v211
    %v423 = vpop.f32.mrf.mxu0
    %v424 = vadd.f32 0.0, %v423
    %425 = vmatmul.f32.gmra.mxu0 %v214
    %v426 = vpop.f32.mrf.mxu0
    %v427 = vadd.f32 0.0, %v426
    %428 = vmatmul.f32.gmra.mxu0 %v217
    %v429 = vpop.f32.mrf.mxu0
    %v430 = vadd.f32 0.0, %v429
    %431 = vmatmul.f32.gmra.mxu0 %v220
    %v432 = vpop.f32.mrf.mxu0
    %v433 = vadd.f32 0.0, %v432
    %434 = vmatmul.f32.gmra.mxu0 %v223
    %v435 = vpop.f32.mrf.mxu0
    %v436 = vadd.f32 0.0, %v435
    %437 = vmatmul.f32.gmra.mxu0 %v226
    %v438 = vpop.f32.mrf.mxu0
    %v439 = vadd.f32 0.0, %v438
    %440 = vmatmul.f32.gmra.mxu0 %v229
    %v441 = vpop.f32.mrf.mxu0
    %v442 = vadd.f32 0.0, %v441
    %443 = vmatmul.f32.gmra.mxu0 %v232
    %v444 = vpop.f32.mrf.mxu0
    %v445 = vadd.f32 0.0, %v444
    %446 = vmatmul.f32.gmra.mxu0 %v235
    %v447 = vpop.f32.mrf.mxu0
    %v448 = vadd.f32 0.0, %v447
    %449 = vmatmul.f32.gmra.mxu0 %v238
    %v450 = vpop.f32.mrf.mxu0
    %v451 = vadd.f32 0.0, %v450
    %452 = vmatmul.f32.gmra.mxu0 %v241
    %v453 = vpop.f32.mrf.mxu0
    %v454 = vadd.f32 0.0, %v453
    %455 = vmatmul.f32.gmra.mxu0 %v244
    %v456 = vpop.f32.mrf.mxu0
    %v457 = vadd.f32 0.0, %v456
    %458 = vmatmul.f32.gmra.mxu0 %v247
    %v459 = vpop.f32.mrf.mxu0
    %v460 = vadd.f32 0.0, %v459
    %461 = vmatmul.f32.gmra.mxu0 %v250
    %v462 = vpop.f32.mrf.mxu0
    %v463 = vadd.f32 0.0, %v462
    %464 = vmatmul.f32.gmra.mxu0 %v253
    %v465 = vpop.f32.mrf.mxu0
    %v466 = vadd.f32 0.0, %v465
    %467 = vmatmul.f32.gmra.mxu0 %v256
    %v468 = vpop.f32.mrf.mxu0
    %v469 = vadd.f32 0.0, %v468
    %470 = vmatmul.f32.gmra.mxu0 %v259
    %v471 = vpop.f32.mrf.mxu0
    %v472 = vadd.f32 0.0, %v471
    %473 = vmatmul.f32.gmra.mxu0 %v262
    %v474 = vpop.f32.mrf.mxu0
    %v475 = vadd.f32 0.0, %v474
    %476 = vmatmul.f32.gmra.mxu0 %v265
    %v477 = vpop.f32.mrf.mxu0
    %v478 = vadd.f32 0.0, %v477
    %479 = vmatmul.f32.gmra.mxu0 %v268
    %v480 = vpop.f32.mrf.mxu0
    %v481 = vadd.f32 0.0, %v480
    %482 = vmatmul.f32.gmra.mxu0 %v271
    %v483 = vpop.f32.mrf.mxu0
    %v484 = vadd.f32 0.0, %v483
    %485 = vmatmul.f32.gmra.mxu0 %v274
    %v486 = vpop.f32.mrf.mxu0
    %v487 = vadd.f32 0.0, %v486
    %488 = vmatmul.f32.gmra.mxu0 %v277
    %v489 = vpop.f32.mrf.mxu0
    %v490 = vadd.f32 0.0, %v489
    %491 = vmatmul.f32.gmra.mxu0 %v280
    %v492 = vpop.f32.mrf.mxu0
    %v493 = vadd.f32 0.0, %v492
    %494 = vmatmul.f32.gmra.mxu0 %v283
    %v495 = vpop.f32.mrf.mxu0
    %v496 = vadd.f32 0.0, %v495
    %497 = vmatmul.f32.gmra.mxu0 %v286
    %v498 = vpop.f32.mrf.mxu0
    %v499 = vadd.f32 0.0, %v498
    %500 = vmatmul.f32.gmra.mxu0 %v289
    %v501 = vpop.f32.mrf.mxu0
    %v502 = vadd.f32 0.0, %v501
    %503 = vmatmul.f32.gmra.mxu0 %v292
    %v504 = vpop.f32.mrf.mxu0
    %v505 = vadd.f32 0.0, %v504
    %506 = vmatmul.f32.gmra.mxu0 %v295
    %v507 = vpop.f32.mrf.mxu0
    %v508 = vadd.f32 0.0, %v507
    %509 = vmatmul.f32.gmra.mxu0 %v298
    %v510 = vpop.f32.mrf.mxu0
    %v511 = vadd.f32 0.0, %v510
    %512 = vmatmul.f32.gmra.mxu0 %v301
    %v513 = vpop.f32.mrf.mxu0
    %v514 = vadd.f32 0.0, %v513
    %515 = vmatmul.f32.gmra.mxu0 %v304
    %v516 = vpop.f32.mrf.mxu0
    %v517 = vadd.f32 0.0, %v516
    %518 = vmatmul.f32.gmra.mxu0 %v307
    %v519 = vpop.f32.mrf.mxu0
    %v520 = vadd.f32 0.0, %v519
    %521 = vdwg.mxu0
    %v523 = vperm.slane %v114, 0
    %v525 = vadd.f32 %v523, %v331
    %v526 = vadd.f32 %v523, %v334
    %v527 = vadd.f32 %v523, %v337
    %v528 = vadd.f32 %v523, %v340
    %v529 = vadd.f32 %v523, %v343
    %v530 = vadd.f32 %v523, %v346
    %v531 = vadd.f32 %v523, %v349
    %v532 = vadd.f32 %v523, %v352
    %v533 = vadd.f32 %v523, %v355
    %v534 = vadd.f32 %v523, %v358
    %v535 = vadd.f32 %v523, %v361
    %v536 = vadd.f32 %v523, %v364
    %v537 = vadd.f32 %v523, %v367
    %v538 = vadd.f32 %v523, %v370
    %v539 = vadd.f32 %v523, %v373
    %v540 = vadd.f32 %v523, %v376
    %v541 = vadd.f32 %v523, %v379
    %v542 = vadd.f32 %v523, %v382
    %v543 = vadd.f32 %v523, %v385
    %v544 = vadd.f32 %v523, %v388
    %v545 = vadd.f32 %v523, %v391
    %v546 = vadd.f32 %v523, %v394
    %v547 = vadd.f32 %v523, %v397
    %v548 = vadd.f32 %v523, %v400
    %v549 = vadd.f32 %v523, %v403
    %v550 = vadd.f32 %v523, %v406
    %v551 = vadd.f32 %v523, %v409
    %v552 = vadd.f32 %v523, %v412
    %v553 = vadd.f32 %v523, %v415
    %v554 = vadd.f32 %v523, %v418
    %v555 = vadd.f32 %v523, %v421
    %v556 = vadd.f32 %v523, %v424
    %v557 = vadd.f32 %v523, %v427
    %v558 = vadd.f32 %v523, %v430
    %v559 = vadd.f32 %v523, %v433
    %v560 = vadd.f32 %v523, %v436
    %v561 = vadd.f32 %v523, %v439
    %v562 = vadd.f32 %v523, %v442
    %v563 = vadd.f32 %v523, %v445
    %v564 = vadd.f32 %v523, %v448
    %v565 = vadd.f32 %v523, %v451
    %v566 = vadd.f32 %v523, %v454
    %v567 = vadd.f32 %v523, %v457
    %v568 = vadd.f32 %v523, %v460
    %v569 = vadd.f32 %v523, %v463
    %v570 = vadd.f32 %v523, %v466
    %v571 = vadd.f32 %v523, %v469
    %v572 = vadd.f32 %v523, %v472
    %v573 = vadd.f32 %v523, %v475
    %v574 = vadd.f32 %v523, %v478
    %v575 = vadd.f32 %v523, %v481
    %v576 = vadd.f32 %v523, %v484
    %v577 = vadd.f32 %v523, %v487
    %v578 = vadd.f32 %v523, %v490
    %v579 = vadd.f32 %v523, %v493
    %v580 = vadd.f32 %v523, %v496
    %v581 = vadd.f32 %v523, %v499
    %v582 = vadd.f32 %v523, %v502
    %v583 = vadd.f32 %v523, %v505
    %v584 = vadd.f32 %v523, %v508
    %v585 = vadd.f32 %v523, %v511
    %v586 = vadd.f32 %v523, %v514
    %v587 = vadd.f32 %v523, %v517
    %v588 = vadd.f32 %v523, %v520
    %589 = vst [vmem:[#allocation4] sm:$0xff] %v525
    %590 = vst [vmem:[#allocation4 + $0x8] sm:$0xff] %v526
    %591 = vst [vmem:[#allocation4 + $0x10] sm:$0xff] %v527
    %592 = vst [vmem:[#allocation4 + $0x18] sm:$0xff] %v528
    %593 = vst [vmem:[#allocation4 + $0x20] sm:$0xff] %v529
    %594 = vst [vmem:[#allocation4 + $0x28] sm:$0xff] %v530
    %595 = vst [vmem:[#allocation4 + $0x30] sm:$0xff] %v531
    %596 = vst [vmem:[#allocation4 + $0x38] sm:$0xff] %v532
    %597 = vst [vmem:[#allocation4 + $0x40] sm:$0xff] %v533
    %598 = vst [vmem:[#allocation4 + $0x48] sm:$0xff] %v534
    %599 = vst [vmem:[#allocation4 + $0x50] sm:$0xff] %v535
    %600 = vst [vmem:[#allocation4 + $0x58] sm:$0xff] %v536
    %601 = vst [vmem:[#allocation4 + $0x60] sm:$0xff] %v537
    %602 = vst [vmem:[#allocation4 + $0x68] sm:$0xff] %v538
    %603 = vst [vmem:[#allocation4 + $0x70] sm:$0xff] %v539
    %604 = vst [vmem:[#allocation4 + $0x78] sm:$0xff] %v540
    %605 = vst [vmem:[#allocation4 + $0x80] sm:$0xff] %v541
    %606 = vst [vmem:[#allocation4 + $0x88] sm:$0xff] %v542
    %607 = vst [vmem:[#allocation4 + $0x90] sm:$0xff] %v543
    %608 = vst [vmem:[#allocation4 + $0x98] sm:$0xff] %v544
    %609 = vst [vmem:[#allocation4 + $0xa0] sm:$0xff] %v545
    %610 = vst [vmem:[#allocation4 + $0xa8] sm:$0xff] %v546
    %611 = vst [vmem:[#allocation4 + $0xb0] sm:$0xff] %v547
    %612 = vst [vmem:[#allocation4 + $0xb8] sm:$0xff] %v548
    %613 = vst [vmem:[#allocation4 + $0xc0] sm:$0xff] %v549
    %614 = vst [vmem:[#allocation4 + $0xc8] sm:$0xff] %v550
    %615 = vst [vmem:[#allocation4 + $0xd0] sm:$0xff] %v551
    %616 = vst [vmem:[#allocation4 + $0xd8] sm:$0xff] %v552
    %617 = vst [vmem:[#allocation4 + $0xe0] sm:$0xff] %v553
    %618 = vst [vmem:[#allocation4 + $0xe8] sm:$0xff] %v554
    %619 = vst [vmem:[#allocation4 + $0xf0] sm:$0xff] %v555
    %620 = vst [vmem:[#allocation4 + $0xf8] sm:$0xff] %v556
    %621 = vst [vmem:[#allocation4 + $0x100] sm:$0xff] %v557
    %622 = vst [vmem:[#allocation4 + $0x108] sm:$0xff] %v558
    %623 = vst [vmem:[#allocation4 + $0x110] sm:$0xff] %v559
    %624 = vst [vmem:[#allocation4 + $0x118] sm:$0xff] %v560
    %625 = vst [vmem:[#allocation4 + $0x120] sm:$0xff] %v561
    %626 = vst [vmem:[#allocation4 + $0x128] sm:$0xff] %v562
    %627 = vst [vmem:[#allocation4 + $0x130] sm:$0xff] %v563
    %628 = vst [vmem:[#allocation4 + $0x138] sm:$0xff] %v564
    %629 = vst [vmem:[#allocation4 + $0x140] sm:$0xff] %v565
    %630 = vst [vmem:[#allocation4 + $0x148] sm:$0xff] %v566
    %631 = vst [vmem:[#allocation4 + $0x150] sm:$0xff] %v567
    %632 = vst [vmem:[#allocation4 + $0x158] sm:$0xff] %v568
    %633 = vst [vmem:[#allocation4 + $0x160] sm:$0xff] %v569
    %634 = vst [vmem:[#allocation4 + $0x168] sm:$0xff] %v570
    %635 = vst [vmem:[#allocation4 + $0x170] sm:$0xff] %v571
    %636 = vst [vmem:[#allocation4 + $0x178] sm:$0xff] %v572
    %637 = vst [vmem:[#allocation4 + $0x180] sm:$0xff] %v573
    %638 = vst [vmem:[#allocation4 + $0x188] sm:$0xff] %v574
    %639 = vst [vmem:[#allocation4 + $0x190] sm:$0xff] %v575
    %640 = vst [vmem:[#allocation4 + $0x198] sm:$0xff] %v576
    %641 = vst [vmem:[#allocation4 + $0x1a0] sm:$0xff] %v577
    %642 = vst [vmem:[#allocation4 + $0x1a8] sm:$0xff] %v578
    %643 = vst [vmem:[#allocation4 + $0x1b0] sm:$0xff] %v579
    %644 = vst [vmem:[#allocation4 + $0x1b8] sm:$0xff] %v580
    %645 = vst [vmem:[#allocation4 + $0x1c0] sm:$0xff] %v581
    %646 = vst [vmem:[#allocation4 + $0x1c8] sm:$0xff] %v582
    %647 = vst [vmem:[#allocation4 + $0x1d0] sm:$0xff] %v583
    %648 = vst [vmem:[#allocation4 + $0x1d8] sm:$0xff] %v584
    %649 = vst [vmem:[#allocation4 + $0x1e0] sm:$0xff] %v585
    %650 = vst [vmem:[#allocation4 + $0x1e8] sm:$0xff] %v586
    %651 = vst [vmem:[#allocation4 + $0x1f0] sm:$0xff] %v587
    %652 = vst [vmem:[#allocation4 + $0x1f8] sm:$0xff] %v588
    %v653 = vlaneseq
    %v654 = vand.u32 %v653, 127
    %v655 = vld [vmem:[%s5] sm:$0xf]
    %vm656 = vcmp.eq.s32.totalorder %v654, 32
    %v657 = vsel %vm656, 1, 0
    %v658 = vcvt.s32.f32 %v657
    %v660 = vsel %vm309, %v655, 0
    %662 = vmatpush.msra.mxu0 0.0
    %663 = vmatpush.msra.mxu0 0.0
    %664 = vmatpush.msra.mxu0 0.0
    %665 = vmatpush.msra.mxu0 0.0
    %666 = vmatpush.msra.mxu0 0.0
    %667 = vmatpush.msra.mxu0 0.0
    %668 = vmatpush.msra.mxu0 0.0
    %669 = vmatpush.msra.mxu0 0.0
    %670 = vmatpush.msra.mxu0 0.0
    %671 = vmatpush.msra.mxu0 0.0
    %672 = vmatpush.msra.mxu0 0.0
    %673 = vmatpush.msra.mxu0 0.0
    %674 = vmatpush.msra.mxu0 0.0
    %675 = vmatpush.msra.mxu0 0.0
    %676 = vmatpush.msra.mxu0 0.0
    %677 = vmatpush.msra.mxu0 %v660
    %678 = vmatmul.f32.gmra.mxu0 %v118
    %v679 = vpop.f32.mrf.mxu0
    %v680 = vadd.f32 %v658, %v679
    %681 = vmatmul.f32.gmra.mxu0 %v121
    %v682 = vpop.f32.mrf.mxu0
    %v683 = vadd.f32 %v658, %v682
    %684 = vmatmul.f32.gmra.mxu0 %v124
    %v685 = vpop.f32.mrf.mxu0
    %v686 = vadd.f32 %v658, %v685
    %687 = vmatmul.f32.gmra.mxu0 %v127
    %v688 = vpop.f32.mrf.mxu0
    %v689 = vadd.f32 %v658, %v688
    %690 = vmatmul.f32.gmra.mxu0 %v130
    %v691 = vpop.f32.mrf.mxu0
    %v692 = vadd.f32 %v658, %v691
    %693 = vmatmul.f32.gmra.mxu0 %v133
    %v694 = vpop.f32.mrf.mxu0
    %v695 = vadd.f32 %v658, %v694
    %696 = vmatmul.f32.gmra.mxu0 %v136
    %v697 = vpop.f32.mrf.mxu0
    %v698 = vadd.f32 %v658, %v697
    %699 = vmatmul.f32.gmra.mxu0 %v139
    %v700 = vpop.f32.mrf.mxu0
    %v701 = vadd.f32 %v658, %v700
    %702 = vmatmul.f32.gmra.mxu0 %v142
    %v703 = vpop.f32.mrf.mxu0
    %v704 = vadd.f32 %v658, %v703
    %705 = vmatmul.f32.gmra.mxu0 %v145
    %v706 = vpop.f32.mrf.mxu0
    %v707 = vadd.f32 %v658, %v706
    %708 = vmatmul.f32.gmra.mxu0 %v148
    %v709 = vpop.f32.mrf.mxu0
    %v710 = vadd.f32 %v658, %v709
    %711 = vmatmul.f32.gmra.mxu0 %v151
    %v712 = vpop.f32.mrf.mxu0
    %v713 = vadd.f32 %v658, %v712
    %714 = vmatmul.f32.gmra.mxu0 %v154
    %v715 = vpop.f32.mrf.mxu0
    %v716 = vadd.f32 %v658, %v715
    %717 = vmatmul.f32.gmra.mxu0 %v157
    %v718 = vpop.f32.mrf.mxu0
    %v719 = vadd.f32 %v658, %v718
    %720 = vmatmul.f32.gmra.mxu0 %v160
    %v721 = vpop.f32.mrf.mxu0
    %v722 = vadd.f32 %v658, %v721
    %723 = vmatmul.f32.gmra.mxu0 %v163
    %v724 = vpop.f32.mrf.mxu0
    %v725 = vadd.f32 %v658, %v724
    %726 = vmatmul.f32.gmra.mxu0 %v166
    %v727 = vpop.f32.mrf.mxu0
    %v728 = vadd.f32 %v658, %v727
    %729 = vmatmul.f32.gmra.mxu0 %v169
    %v730 = vpop.f32.mrf.mxu0
    %v731 = vadd.f32 %v658, %v730
    %732 = vmatmul.f32.gmra.mxu0 %v172
    %v733 = vpop.f32.mrf.mxu0
    %v734 = vadd.f32 %v658, %v733
    %735 = vmatmul.f32.gmra.mxu0 %v175
    %v736 = vpop.f32.mrf.mxu0
    %v737 = vadd.f32 %v658, %v736
    %738 = vmatmul.f32.gmra.mxu0 %v178
    %v739 = vpop.f32.mrf.mxu0
    %v740 = vadd.f32 %v658, %v739
    %741 = vmatmul.f32.gmra.mxu0 %v181
    %v742 = vpop.f32.mrf.mxu0
    %v743 = vadd.f32 %v658, %v742
    %744 = vmatmul.f32.gmra.mxu0 %v184
    %v745 = vpop.f32.mrf.mxu0
    %v746 = vadd.f32 %v658, %v745
    %747 = vmatmul.f32.gmra.mxu0 %v187
    %v748 = vpop.f32.mrf.mxu0
    %v749 = vadd.f32 %v658, %v748
    %750 = vmatmul.f32.gmra.mxu0 %v190
    %v751 = vpop.f32.mrf.mxu0
    %v752 = vadd.f32 %v658, %v751
    %753 = vmatmul.f32.gmra.mxu0 %v193
    %v754 = vpop.f32.mrf.mxu0
    %v755 = vadd.f32 %v658, %v754
    %756 = vmatmul.f32.gmra.mxu0 %v196
    %v757 = vpop.f32.mrf.mxu0
    %v758 = vadd.f32 %v658, %v757
    %759 = vmatmul.f32.gmra.mxu0 %v199
    %v760 = vpop.f32.mrf.mxu0
    %v761 = vadd.f32 %v658, %v760
    %762 = vmatmul.f32.gmra.mxu0 %v202
    %v763 = vpop.f32.mrf.mxu0
    %v764 = vadd.f32 %v658, %v763
    %765 = vmatmul.f32.gmra.mxu0 %v205
    %v766 = vpop.f32.mrf.mxu0
    %v767 = vadd.f32 %v658, %v766
    %768 = vmatmul.f32.gmra.mxu0 %v208
    %v769 = vpop.f32.mrf.mxu0
    %v770 = vadd.f32 %v658, %v769
    %771 = vmatmul.f32.gmra.mxu0 %v211
    %v772 = vpop.f32.mrf.mxu0
    %v773 = vadd.f32 %v658, %v772
    %774 = vmatmul.f32.gmra.mxu0 %v214
    %v775 = vpop.f32.mrf.mxu0
    %v776 = vadd.f32 %v658, %v775
    %777 = vmatmul.f32.gmra.mxu0 %v217
    %v778 = vpop.f32.mrf.mxu0
    %v779 = vadd.f32 %v658, %v778
    %780 = vmatmul.f32.gmra.mxu0 %v220
    %v781 = vpop.f32.mrf.mxu0
    %v782 = vadd.f32 %v658, %v781
    %783 = vmatmul.f32.gmra.mxu0 %v223
    %v784 = vpop.f32.mrf.mxu0
    %v785 = vadd.f32 %v658, %v784
    %786 = vmatmul.f32.gmra.mxu0 %v226
    %v787 = vpop.f32.mrf.mxu0
    %v788 = vadd.f32 %v658, %v787
    %789 = vmatmul.f32.gmra.mxu0 %v229
    %v790 = vpop.f32.mrf.mxu0
    %v791 = vadd.f32 %v658, %v790
    %792 = vmatmul.f32.gmra.mxu0 %v232
    %v793 = vpop.f32.mrf.mxu0
    %v794 = vadd.f32 %v658, %v793
    %795 = vmatmul.f32.gmra.mxu0 %v235
    %v796 = vpop.f32.mrf.mxu0
    %v797 = vadd.f32 %v658, %v796
    %798 = vmatmul.f32.gmra.mxu0 %v238
    %v799 = vpop.f32.mrf.mxu0
    %v800 = vadd.f32 %v658, %v799
    %801 = vmatmul.f32.gmra.mxu0 %v241
    %v802 = vpop.f32.mrf.mxu0
    %v803 = vadd.f32 %v658, %v802
    %804 = vmatmul.f32.gmra.mxu0 %v244
    %v805 = vpop.f32.mrf.mxu0
    %v806 = vadd.f32 %v658, %v805
    %807 = vmatmul.f32.gmra.mxu0 %v247
    %v808 = vpop.f32.mrf.mxu0
    %v809 = vadd.f32 %v658, %v808
    %810 = vmatmul.f32.gmra.mxu0 %v250
    %v811 = vpop.f32.mrf.mxu0
    %v812 = vadd.f32 %v658, %v811
    %813 = vmatmul.f32.gmra.mxu0 %v253
    %v814 = vpop.f32.mrf.mxu0
    %v815 = vadd.f32 %v658, %v814
    %816 = vmatmul.f32.gmra.mxu0 %v256
    %v817 = vpop.f32.mrf.mxu0
    %v818 = vadd.f32 %v658, %v817
    %819 = vmatmul.f32.gmra.mxu0 %v259
    %v820 = vpop.f32.mrf.mxu0
    %v821 = vadd.f32 %v658, %v820
    %822 = vmatmul.f32.gmra.mxu0 %v262
    %v823 = vpop.f32.mrf.mxu0
    %v824 = vadd.f32 %v658, %v823
    %825 = vmatmul.f32.gmra.mxu0 %v265
    %v826 = vpop.f32.mrf.mxu0
    %v827 = vadd.f32 %v658, %v826
    %828 = vmatmul.f32.gmra.mxu0 %v268
    %v829 = vpop.f32.mrf.mxu0
    %v830 = vadd.f32 %v658, %v829
    %831 = vmatmul.f32.gmra.mxu0 %v271
    %v832 = vpop.f32.mrf.mxu0
    %v833 = vadd.f32 %v658, %v832
    %834 = vmatmul.f32.gmra.mxu0 %v274
    %v835 = vpop.f32.mrf.mxu0
    %v836 = vadd.f32 %v658, %v835
    %837 = vmatmul.f32.gmra.mxu0 %v277
    %v838 = vpop.f32.mrf.mxu0
    %v839 = vadd.f32 %v658, %v838
    %840 = vmatmul.f32.gmra.mxu0 %v280
    %v841 = vpop.f32.mrf.mxu0
    %v842 = vadd.f32 %v658, %v841
    %843 = vmatmul.f32.gmra.mxu0 %v283
    %v844 = vpop.f32.mrf.mxu0
    %v845 = vadd.f32 %v658, %v844
    %846 = vmatmul.f32.gmra.mxu0 %v286
    %v847 = vpop.f32.mrf.mxu0
    %v848 = vadd.f32 %v658, %v847
    %849 = vmatmul.f32.gmra.mxu0 %v289
    %v850 = vpop.f32.mrf.mxu0
    %v851 = vadd.f32 %v658, %v850
    %852 = vmatmul.f32.gmra.mxu0 %v292
    %v853 = vpop.f32.mrf.mxu0
    %v854 = vadd.f32 %v658, %v853
    %855 = vmatmul.f32.gmra.mxu0 %v295
    %v856 = vpop.f32.mrf.mxu0
    %v857 = vadd.f32 %v658, %v856
    %858 = vmatmul.f32.gmra.mxu0 %v298
    %v859 = vpop.f32.mrf.mxu0
    %v860 = vadd.f32 %v658, %v859
    %861 = vmatmul.f32.gmra.mxu0 %v301
    %v862 = vpop.f32.mrf.mxu0
    %v863 = vadd.f32 %v658, %v862
    %864 = vmatmul.f32.gmra.mxu0 %v304
    %v865 = vpop.f32.mrf.mxu0
    %v866 = vadd.f32 %v658, %v865
    %867 = vmatmul.f32.gmra.mxu0 %v307
    %v868 = vpop.f32.mrf.mxu0
    %v869 = vadd.f32 %v658, %v868
    %870 = vdwg.mxu0
    %871 = vst [vmem:[#allocation3] sm:$0xff] %v680
    %872 = vst [vmem:[#allocation3 + $0x8] sm:$0xff] %v683
    %873 = vst [vmem:[#allocation3 + $0x10] sm:$0xff] %v686
    %874 = vst [vmem:[#allocation3 + $0x18] sm:$0xff] %v689
    %875 = vst [vmem:[#allocation3 + $0x20] sm:$0xff] %v692
    %876 = vst [vmem:[#allocation3 + $0x28] sm:$0xff] %v695
    %877 = vst [vmem:[#allocation3 + $0x30] sm:$0xff] %v698
    %878 = vst [vmem:[#allocation3 + $0x38] sm:$0xff] %v701
    %879 = vst [vmem:[#allocation3 + $0x40] sm:$0xff] %v704
    %880 = vst [vmem:[#allocation3 + $0x48] sm:$0xff] %v707
    %881 = vst [vmem:[#allocation3 + $0x50] sm:$0xff] %v710
    %882 = vst [vmem:[#allocation3 + $0x58] sm:$0xff] %v713
    %883 = vst [vmem:[#allocation3 + $0x60] sm:$0xff] %v716
    %884 = vst [vmem:[#allocation3 + $0x68] sm:$0xff] %v719
    %885 = vst [vmem:[#allocation3 + $0x70] sm:$0xff] %v722
    %886 = vst [vmem:[#allocation3 + $0x78] sm:$0xff] %v725
    %887 = vst [vmem:[#allocation3 + $0x80] sm:$0xff] %v728
    %888 = vst [vmem:[#allocation3 + $0x88] sm:$0xff] %v731
    %889 = vst [vmem:[#allocation3 + $0x90] sm:$0xff] %v734
    %890 = vst [vmem:[#allocation3 + $0x98] sm:$0xff] %v737
    %891 = vst [vmem:[#allocation3 + $0xa0] sm:$0xff] %v740
    %892 = vst [vmem:[#allocation3 + $0xa8] sm:$0xff] %v743
    %893 = vst [vmem:[#allocation3 + $0xb0] sm:$0xff] %v746
    %894 = vst [vmem:[#allocation3 + $0xb8] sm:$0xff] %v749
    %895 = vst [vmem:[#allocation3 + $0xc0] sm:$0xff] %v752
    %896 = vst [vmem:[#allocation3 + $0xc8] sm:$0xff] %v755
    %897 = vst [vmem:[#allocation3 + $0xd0] sm:$0xff] %v758
    %898 = vst [vmem:[#allocation3 + $0xd8] sm:$0xff] %v761
    %899 = vst [vmem:[#allocation3 + $0xe0] sm:$0xff] %v764
    %900 = vst [vmem:[#allocation3 + $0xe8] sm:$0xff] %v767
    %901 = vst [vmem:[#allocation3 + $0xf0] sm:$0xff] %v770
    %902 = vst [vmem:[#allocation3 + $0xf8] sm:$0xff] %v773
    %903 = vst [vmem:[#allocation3 + $0x100] sm:$0xff] %v776
    %904 = vst [vmem:[#allocation3 + $0x108] sm:$0xff] %v779
    %905 = vst [vmem:[#allocation3 + $0x110] sm:$0xff] %v782
    %906 = vst [vmem:[#allocation3 + $0x118] sm:$0xff] %v785
    %907 = vst [vmem:[#allocation3 + $0x120] sm:$0xff] %v788
    %908 = vst [vmem:[#allocation3 + $0x128] sm:$0xff] %v791
    %909 = vst [vmem:[#allocation3 + $0x130] sm:$0xff] %v794
    %910 = vst [vmem:[#allocation3 + $0x138] sm:$0xff] %v797
    %911 = vst [vmem:[#allocation3 + $0x140] sm:$0xff] %v800
    %912 = vst [vmem:[#allocation3 + $0x148] sm:$0xff] %v803
    %913 = vst [vmem:[#allocation3 + $0x150] sm:$0xff] %v806
    %914 = vst [vmem:[#allocation3 + $0x158] sm:$0xff] %v809
    %915 = vst [vmem:[#allocation3 + $0x160] sm:$0xff] %v812
    %916 = vst [vmem:[#allocation3 + $0x168] sm:$0xff] %v815
    %917 = vst [vmem:[#allocation3 + $0x170] sm:$0xff] %v818
    %918 = vst [vmem:[#allocation3 + $0x178] sm:$0xff] %v821
    %919 = vst [vmem:[#allocation3 + $0x180] sm:$0xff] %v824
    %920 = vst [vmem:[#allocation3 + $0x188] sm:$0xff] %v827
    %921 = vst [vmem:[#allocation3 + $0x190] sm:$0xff] %v830
    %922 = vst [vmem:[#allocation3 + $0x198] sm:$0xff] %v833
    %923 = vst [vmem:[#allocation3 + $0x1a0] sm:$0xff] %v836
    %924 = vst [vmem:[#allocation3 + $0x1a8] sm:$0xff] %v839
    %925 = vst [vmem:[#allocation3 + $0x1b0] sm:$0xff] %v842
    %926 = vst [vmem:[#allocation3 + $0x1b8] sm:$0xff] %v845
    %927 = vst [vmem:[#allocation3 + $0x1c0] sm:$0xff] %v848
    %928 = vst [vmem:[#allocation3 + $0x1c8] sm:$0xff] %v851
    %929 = vst [vmem:[#allocation3 + $0x1d0] sm:$0xff] %v854
    %930 = vst [vmem:[#allocation3 + $0x1d8] sm:$0xff] %v857
    %931 = vst [vmem:[#allocation3 + $0x1e0] sm:$0xff] %v860
    %932 = vst [vmem:[#allocation3 + $0x1e8] sm:$0xff] %v863
    %933 = vst [vmem:[#allocation3 + $0x1f0] sm:$0xff] %v866
    %934 = vst [vmem:[#allocation3 + $0x1f8] sm:$0xff] %v869
    %v935 = vld [vmem:[%s4] sm:$0xff]
    %v936 = vld [vmem:[%s4 + $0x8] sm:$0xff]
    %v937 = vld [vmem:[%s4 + $0x10] sm:$0xff]
    %v938 = vld [vmem:[%s4 + $0x18] sm:$0xff]
    %v939 = vld [vmem:[%s4 + $0x20] sm:$0xff]
    %v940 = vld [vmem:[%s4 + $0x28] sm:$0xff]
    %v941 = vld [vmem:[%s4 + $0x30] sm:$0xff]
    %v942 = vld [vmem:[%s4 + $0x38] sm:$0xff]
    %v943 = vld [vmem:[%s4 + $0x40] sm:$0xff]
    %v944 = vld [vmem:[%s4 + $0x48] sm:$0xff]
    %v945 = vld [vmem:[%s4 + $0x50] sm:$0xff]
    %v946 = vld [vmem:[%s4 + $0x58] sm:$0xff]
    %v947 = vld [vmem:[%s4 + $0x60] sm:$0xff]
    %v948 = vld [vmem:[%s4 + $0x68] sm:$0xff]
    %v949 = vld [vmem:[%s4 + $0x70] sm:$0xff]
    %v950 = vld [vmem:[%s4 + $0x78] sm:$0xff]
    %v951 = vlaneseq
    %v952 = vshrl.u32 %v951, 7
    %v953 = vld [vmem:[#allocation2] sm:$0x1]
    loop: start=0, step=1, limit=64
    $region30: #{tpu_custom_call.1} parent=1 // loop_pre_header
      _
    $region31: #{tpu_custom_call.1} parent=1 // loop_header
      %s955 = sphi 0, %s959
      %p956 = scmp.ge.s32.totalorder %s955, 64
      %v960 = vphi %v953, %v1272
    $region32: #{tpu_custom_call.1} parent=1 // loop_header_branch
      %958 = sbr.rel (%p956) target = $region36
    $region33: #{tpu_custom_call.1} parent=1 // loop_body
      %s961 = smul.u32 %s955, 8
      %s962 = scalar_lea.vmem [#allocation4], %s961
      %v963 = vld [vmem:[%s962] sm:$0xff]
      %s964 = scalar_lea.vmem [#allocation3], %s961
      %v965 = vld [vmem:[%s964] sm:$0xff]
      %966 = vmatpush.msra.mxu0 %v950
      %967 = vmatpush.msra.mxu0 %v949
      %968 = vmatpush.msra.mxu0 %v948
      %969 = vmatpush.msra.mxu0 %v947
      %970 = vmatpush.msra.mxu0 %v946
      %971 = vmatpush.msra.mxu0 %v945
      %972 = vmatpush.msra.mxu0 %v944
      %973 = vmatpush.msra.mxu0 %v943
      %974 = vmatpush.msra.mxu0 %v942
      %975 = vmatpush.msra.mxu0 %v941
      %976 = vmatpush.msra.mxu0 %v940
      %977 = vmatpush.msra.mxu0 %v939
      %978 = vmatpush.msra.mxu0 %v938
      %979 = vmatpush.msra.mxu0 %v937
      %980 = vmatpush.msra.mxu0 %v936
      %981 = vmatpush.msra.mxu0 %v935
      %982 = vmatmul.f32.gmra.mxu0 %v960
      %v983 = vpop.f32.mrf.mxu0
      %v984 = vadd.f32 0.0, %v983
      %985 = vdwg.mxu0
      %v986 = vadd.f32 %v963, %v984
      %v987 = vmul.f32 %v960, 0.7
      %v988 = vmul.f32 %v986, 0.5
      %v989 = vtanh.pop %v988
      %v990 = vadd.f32 %v989, 1.0
      %v991 = vmul.f32 %v990, 0.15
      %v992 = vadd.f32 %v987, %v991
      %vm993 = vcmp.eq.s32.totalorder %v952, 0
      %v995 = vperm.slane %v992, 0
      %v997 = vsel %vm993, %v995, 0.0
      %998 = vmatpush.msra.mxu0 %v950
      %999 = vmatpush.msra.mxu0 %v949
      %1000 = vmatpush.msra.mxu0 %v948
      %1001 = vmatpush.msra.mxu0 %v947
      %1002 = vmatpush.msra.mxu0 %v946
      %1003 = vmatpush.msra.mxu0 %v945
      %1004 = vmatpush.msra.mxu0 %v944
      %1005 = vmatpush.msra.mxu0 %v943
      %1006 = vmatpush.msra.mxu0 %v942
      %1007 = vmatpush.msra.mxu0 %v941
      %1008 = vmatpush.msra.mxu0 %v940
      %1009 = vmatpush.msra.mxu0 %v939
      %1010 = vmatpush.msra.mxu0 %v938
      %1011 = vmatpush.msra.mxu0 %v937
      %1012 = vmatpush.msra.mxu0 %v936
      %1013 = vmatpush.msra.mxu0 %v935
      %1014 = vmatmul.f32.gmra.mxu0 %v992
      %v1015 = vpop.f32.mrf.mxu0
      %v1016 = vadd.f32 0.0, %v1015
      %1017 = vdwg.mxu0
      %v1019 = vrot.slane %v1016, 7
      %v1021 = vadd.f32 %v963, %v1019
      %v1022 = vmul.f32 %v992, 0.7
      %v1023 = vmul.f32 %v1021, 0.5
      %v1024 = vtanh.pop %v1023
      %v1025 = vadd.f32 %v1024, 1.0
      %v1026 = vmul.f32 %v1025, 0.15
      %1028 = vst [vmem:[#allocation1] sm:$0xff] %v1026
      %s1029 = scalar_lea.vmem [#allocation1], 1
      %v1030 = vld [vmem:[%s1029] ss:$9 sm:$0xff]
      %v1032 = vadd.f32 %v1022, %v1030
      %vm1033 = vcmp.eq.s32.totalorder %v952, 1
      %v1035 = vperm.slane %v1032, 0
      %v1037 = vsel %vm1033, %v1035, %v997
      %1038 = vmatpush.msra.mxu0 %v950
      %1039 = vmatpush.msra.mxu0 %v949
      %1040 = vmatpush.msra.mxu0 %v948
      %1041 = vmatpush.msra.mxu0 %v947
      %1042 = vmatpush.msra.mxu0 %v946
      %1043 = vmatpush.msra.mxu0 %v945
      %1044 = vmatpush.msra.mxu0 %v944
      %1045 = vmatpush.msra.mxu0 %v943
      %1046 = vmatpush.msra.mxu0 %v942
      %1047 = vmatpush.msra.mxu0 %v941
      %1048 = vmatpush.msra.mxu0 %v940
      %1049 = vmatpush.msra.mxu0 %v939
      %1050 = vmatpush.msra.mxu0 %v938
      %1051 = vmatpush.msra.mxu0 %v937
      %1052 = vmatpush.msra.mxu0 %v936
      %1053 = vmatpush.msra.mxu0 %v935
      %1054 = vmatmul.f32.gmra.mxu0 %v1032
      %v1055 = vpop.f32.mrf.mxu0
      %v1056 = vadd.f32 0.0, %v1055
      %1057 = vdwg.mxu0
      %v1059 = vrot.slane %v1056, 6
      %v1061 = vadd.f32 %v963, %v1059
      %v1062 = vmul.f32 %v1032, 0.7
      %v1063 = vmul.f32 %v1061, 0.5
      %v1064 = vtanh.pop %v1063
      %v1065 = vadd.f32 %v1064, 1.0
      %v1066 = vmul.f32 %v1065, 0.15
      %1068 = vst [vmem:[#allocation1] sm:$0xff] %v1066
      %s1069 = scalar_lea.vmem [#allocation1], 2
      %v1070 = vld [vmem:[%s1069] ss:$9 sm:$0xff]
      %v1072 = vadd.f32 %v1062, %v1070
      %vm1073 = vcmp.eq.s32.totalorder %v952, 2
      %v1075 = vperm.slane %v1072, 0
      %v1077 = vsel %vm1073, %v1075, %v1037
      %1078 = vmatpush.msra.mxu0 %v950
      %1079 = vmatpush.msra.mxu0 %v949
      %1080 = vmatpush.msra.mxu0 %v948
      %1081 = vmatpush.msra.mxu0 %v947
      %1082 = vmatpush.msra.mxu0 %v946
      %1083 = vmatpush.msra.mxu0 %v945
      %1084 = vmatpush.msra.mxu0 %v944
      %1085 = vmatpush.msra.mxu0 %v943
      %1086 = vmatpush.msra.mxu0 %v942
      %1087 = vmatpush.msra.mxu0 %v941
      %1088 = vmatpush.msra.mxu0 %v940
      %1089 = vmatpush.msra.mxu0 %v939
      %1090 = vmatpush.msra.mxu0 %v938
      %1091 = vmatpush.msra.mxu0 %v937
      %1092 = vmatpush.msra.mxu0 %v936
      %1093 = vmatpush.msra.mxu0 %v935
      %1094 = vmatmul.f32.gmra.mxu0 %v1072
      %v1095 = vpop.f32.mrf.mxu0
      %v1096 = vadd.f32 0.0, %v1095
      %1097 = vdwg.mxu0
      %v1099 = vrot.slane %v1096, 5
      %v1101 = vadd.f32 %v963, %v1099
      %v1102 = vmul.f32 %v1072, 0.7
      %v1103 = vmul.f32 %v1101, 0.5
      %v1104 = vtanh.pop %v1103
      %v1105 = vadd.f32 %v1104, 1.0
      %v1106 = vmul.f32 %v1105, 0.15
      %1108 = vst [vmem:[#allocation1] sm:$0xff] %v1106
      %s1109 = scalar_lea.vmem [#allocation1], 3
      %v1110 = vld [vmem:[%s1109] ss:$9 sm:$0xff]
      %v1112 = vadd.f32 %v1102, %v1110
      %vm1113 = vcmp.eq.s32.totalorder %v952, 3
      %v1115 = vperm.slane %v1112, 0
      %v1117 = vsel %vm1113, %v1115, %v1077
      %1118 = vmatpush.msra.mxu0 %v950
      %1119 = vmatpush.msra.mxu0 %v949
      %1120 = vmatpush.msra.mxu0 %v948
      %1121 = vmatpush.msra.mxu0 %v947
      %1122 = vmatpush.msra.mxu0 %v946
      %1123 = vmatpush.msra.mxu0 %v945
      %1124 = vmatpush.msra.mxu0 %v944
      %1125 = vmatpush.msra.mxu0 %v943
      %1126 = vmatpush.msra.mxu0 %v942
      %1127 = vmatpush.msra.mxu0 %v941
      %1128 = vmatpush.msra.mxu0 %v940
      %1129 = vmatpush.msra.mxu0 %v939
      %1130 = vmatpush.msra.mxu0 %v938
      %1131 = vmatpush.msra.mxu0 %v937
      %1132 = vmatpush.msra.mxu0 %v936
      %1133 = vmatpush.msra.mxu0 %v935
      %1134 = vmatmul.f32.gmra.mxu0 %v1112
      %v1135 = vpop.f32.mrf.mxu0
      %v1136 = vadd.f32 0.0, %v1135
      %1137 = vdwg.mxu0
      %v1139 = vrot.slane %v1136, 4
      %v1141 = vadd.f32 %v963, %v1139
      %v1142 = vmul.f32 %v1112, 0.7
      %v1143 = vmul.f32 %v1141, 0.5
      %v1144 = vtanh.pop %v1143
      %v1145 = vadd.f32 %v1144, 1.0
      %v1146 = vmul.f32 %v1145, 0.15
      %1148 = vst [vmem:[#allocation1] sm:$0xff] %v1146
      %s1149 = scalar_lea.vmem [#allocation1], 4
      %v1150 = vld [vmem:[%s1149] ss:$9 sm:$0xff]
      %v1152 = vadd.f32 %v1142, %v1150
      %vm1153 = vcmp.eq.s32.totalorder %v952, 4
      %v1155 = vperm.slane %v1152, 0
      %v1157 = vsel %vm1153, %v1155, %v1117
      %1158 = vmatpush.msra.mxu0 %v950
      %1159 = vmatpush.msra.mxu0 %v949
      %1160 = vmatpush.msra.mxu0 %v948
      %1161 = vmatpush.msra.mxu0 %v947
      %1162 = vmatpush.msra.mxu0 %v946
      %1163 = vmatpush.msra.mxu0 %v945
      %1164 = vmatpush.msra.mxu0 %v944
      %1165 = vmatpush.msra.mxu0 %v943
      %1166 = vmatpush.msra.mxu0 %v942
      %1167 = vmatpush.msra.mxu0 %v941
      %1168 = vmatpush.msra.mxu0 %v940
      %1169 = vmatpush.msra.mxu0 %v939
      %1170 = vmatpush.msra.mxu0 %v938
      %1171 = vmatpush.msra.mxu0 %v937
      %1172 = vmatpush.msra.mxu0 %v936
      %1173 = vmatpush.msra.mxu0 %v935
      %1174 = vmatmul.f32.gmra.mxu0 %v1152
      %v1175 = vpop.f32.mrf.mxu0
      %v1176 = vadd.f32 0.0, %v1175
      %1177 = vdwg.mxu0
      %v1179 = vrot.slane %v1176, 3
      %v1181 = vadd.f32 %v963, %v1179
      %v1182 = vmul.f32 %v1152, 0.7
      %v1183 = vmul.f32 %v1181, 0.5
      %v1184 = vtanh.pop %v1183
      %v1185 = vadd.f32 %v1184, 1.0
      %v1186 = vmul.f32 %v1185, 0.15
      %1188 = vst [vmem:[#allocation1] sm:$0xff] %v1186
      %s1189 = scalar_lea.vmem [#allocation1], 5
      %v1190 = vld [vmem:[%s1189] ss:$9 sm:$0xff]
      %v1192 = vadd.f32 %v1182, %v1190
      %vm1193 = vcmp.eq.s32.totalorder %v952, 5
      %v1195 = vperm.slane %v1192, 0
      %v1197 = vsel %vm1193, %v1195, %v1157
      %1198 = vmatpush.msra.mxu0 %v950
      %1199 = vmatpush.msra.mxu0 %v949
      %1200 = vmatpush.msra.mxu0 %v948
      %1201 = vmatpush.msra.mxu0 %v947
      %1202 = vmatpush.msra.mxu0 %v946
      %1203 = vmatpush.msra.mxu0 %v945
      %1204 = vmatpush.msra.mxu0 %v944
      %1205 = vmatpush.msra.mxu0 %v943
      %1206 = vmatpush.msra.mxu0 %v942
      %1207 = vmatpush.msra.mxu0 %v941
      %1208 = vmatpush.msra.mxu0 %v940
      %1209 = vmatpush.msra.mxu0 %v939
      %1210 = vmatpush.msra.mxu0 %v938
      %1211 = vmatpush.msra.mxu0 %v937
      %1212 = vmatpush.msra.mxu0 %v936
      %1213 = vmatpush.msra.mxu0 %v935
      %1214 = vmatmul.f32.gmra.mxu0 %v1192
      %v1215 = vpop.f32.mrf.mxu0
      %v1216 = vadd.f32 0.0, %v1215
      %1217 = vdwg.mxu0
      %v1219 = vrot.slane %v1216, 2
      %v1221 = vadd.f32 %v963, %v1219
      %v1222 = vmul.f32 %v1192, 0.7
      %v1223 = vmul.f32 %v1221, 0.5
      %v1224 = vtanh.pop %v1223
      %v1225 = vadd.f32 %v1224, 1.0
      %v1226 = vmul.f32 %v1225, 0.15
      %1228 = vst [vmem:[#allocation1] sm:$0xff] %v1226
      %s1229 = scalar_lea.vmem [#allocation1], 6
      %v1230 = vld [vmem:[%s1229] ss:$9 sm:$0xff]
      %v1232 = vadd.f32 %v1222, %v1230
      %vm1233 = vcmp.eq.s32.totalorder %v952, 6
      %v1235 = vperm.slane %v1232, 0
      %v1237 = vsel %vm1233, %v1235, %v1197
      %1238 = vmatpush.msra.mxu0 %v950
      %1239 = vmatpush.msra.mxu0 %v949
      %1240 = vmatpush.msra.mxu0 %v948
      %1241 = vmatpush.msra.mxu0 %v947
      %1242 = vmatpush.msra.mxu0 %v946
      %1243 = vmatpush.msra.mxu0 %v945
      %1244 = vmatpush.msra.mxu0 %v944
      %1245 = vmatpush.msra.mxu0 %v943
      %1246 = vmatpush.msra.mxu0 %v942
      %1247 = vmatpush.msra.mxu0 %v941
      %1248 = vmatpush.msra.mxu0 %v940
      %1249 = vmatpush.msra.mxu0 %v939
      %1250 = vmatpush.msra.mxu0 %v938
      %1251 = vmatpush.msra.mxu0 %v937
      %1252 = vmatpush.msra.mxu0 %v936
      %1253 = vmatpush.msra.mxu0 %v935
      %1254 = vmatmul.f32.gmra.mxu0 %v1232
      %v1255 = vpop.f32.mrf.mxu0
      %v1256 = vadd.f32 0.0, %v1255
      %1257 = vdwg.mxu0
      %v1259 = vrot.slane %v1256, 1
      %v1261 = vadd.f32 %v963, %v1259
      %v1262 = vmul.f32 %v1232, 0.7
      %v1263 = vmul.f32 %v1261, 0.5
      %v1264 = vtanh.pop %v1263
      %v1265 = vadd.f32 %v1264, 1.0
      %v1266 = vmul.f32 %v1265, 0.15
      %1268 = vst [vmem:[#allocation1] sm:$0xff] %v1266
      %s1269 = scalar_lea.vmem [#allocation1], 7
      %v1270 = vld [vmem:[%s1269] ss:$9 sm:$0xff]
      %v1272 = vadd.f32 %v1262, %v1270
      %vm1273 = vcmp.eq.s32.totalorder %v952, 7
      %v1275 = vperm.slane %v1272, 0
      %v1277 = vsel %vm1273, %v1275, %v1237
      %v1278 = vadd.f32 %v965, %v1277
      %1279 = vst [vmem:[%s964] sm:$0xff] %v1278
    $region34: #{tpu_custom_call.1} parent=1 // loop_footer
      %s959 = sadd.s32 1, %s955
    $region35: #{tpu_custom_call.1} parent=1 // loop_footer_branch
      %954 = sbr.rel target = $region31
    $region36: #{tpu_custom_call.1} parent=1 // loop_exit
      _
    %1280 = vst [vmem:[#allocation2] sm:$0x1] %v960
    %v1281 = vld [vmem:[#allocation3] sm:$0xff]
    %v1282 = vld [vmem:[#allocation3 + $0x8] sm:$0xff]
    %v1283 = vld [vmem:[#allocation3 + $0x10] sm:$0xff]
    %v1284 = vld [vmem:[#allocation3 + $0x18] sm:$0xff]
    %v1285 = vld [vmem:[#allocation3 + $0x20] sm:$0xff]
    %v1286 = vld [vmem:[#allocation3 + $0x28] sm:$0xff]
    %v1287 = vld [vmem:[#allocation3 + $0x30] sm:$0xff]
    %v1288 = vld [vmem:[#allocation3 + $0x38] sm:$0xff]
    %v1289 = vld [vmem:[#allocation3 + $0x40] sm:$0xff]
    %v1290 = vld [vmem:[#allocation3 + $0x48] sm:$0xff]
    %v1291 = vld [vmem:[#allocation3 + $0x50] sm:$0xff]
    %v1292 = vld [vmem:[#allocation3 + $0x58] sm:$0xff]
    %v1293 = vld [vmem:[#allocation3 + $0x60] sm:$0xff]
    %v1294 = vld [vmem:[#allocation3 + $0x68] sm:$0xff]
    %v1295 = vld [vmem:[#allocation3 + $0x70] sm:$0xff]
    %v1296 = vld [vmem:[#allocation3 + $0x78] sm:$0xff]
    %v1297 = vld [vmem:[#allocation3 + $0x80] sm:$0xff]
    %v1298 = vld [vmem:[#allocation3 + $0x88] sm:$0xff]
    %v1299 = vld [vmem:[#allocation3 + $0x90] sm:$0xff]
    %v1300 = vld [vmem:[#allocation3 + $0x98] sm:$0xff]
    %v1301 = vld [vmem:[#allocation3 + $0xa0] sm:$0xff]
    %v1302 = vld [vmem:[#allocation3 + $0xa8] sm:$0xff]
    %v1303 = vld [vmem:[#allocation3 + $0xb0] sm:$0xff]
    %v1304 = vld [vmem:[#allocation3 + $0xb8] sm:$0xff]
    %v1305 = vld [vmem:[#allocation3 + $0xc0] sm:$0xff]
    %v1306 = vld [vmem:[#allocation3 + $0xc8] sm:$0xff]
    %v1307 = vld [vmem:[#allocation3 + $0xd0] sm:$0xff]
    %v1308 = vld [vmem:[#allocation3 + $0xd8] sm:$0xff]
    %v1309 = vld [vmem:[#allocation3 + $0xe0] sm:$0xff]
    %v1310 = vld [vmem:[#allocation3 + $0xe8] sm:$0xff]
    %v1311 = vld [vmem:[#allocation3 + $0xf0] sm:$0xff]
    %v1312 = vld [vmem:[#allocation3 + $0xf8] sm:$0xff]
    %v1313 = vld [vmem:[#allocation3 + $0x100] sm:$0xff]
    %v1314 = vld [vmem:[#allocation3 + $0x108] sm:$0xff]
    %v1315 = vld [vmem:[#allocation3 + $0x110] sm:$0xff]
    %v1316 = vld [vmem:[#allocation3 + $0x118] sm:$0xff]
    %v1317 = vld [vmem:[#allocation3 + $0x120] sm:$0xff]
    %v1318 = vld [vmem:[#allocation3 + $0x128] sm:$0xff]
    %v1319 = vld [vmem:[#allocation3 + $0x130] sm:$0xff]
    %v1320 = vld [vmem:[#allocation3 + $0x138] sm:$0xff]
    %v1321 = vld [vmem:[#allocation3 + $0x140] sm:$0xff]
    %v1322 = vld [vmem:[#allocation3 + $0x148] sm:$0xff]
    %v1323 = vld [vmem:[#allocation3 + $0x150] sm:$0xff]
    %v1324 = vld [vmem:[#allocation3 + $0x158] sm:$0xff]
    %v1325 = vld [vmem:[#allocation3 + $0x160] sm:$0xff]
    %v1326 = vld [vmem:[#allocation3 + $0x168] sm:$0xff]
    %v1327 = vld [vmem:[#allocation3 + $0x170] sm:$0xff]
    %v1328 = vld [vmem:[#allocation3 + $0x178] sm:$0xff]
    %v1329 = vld [vmem:[#allocation3 + $0x180] sm:$0xff]
    %v1330 = vld [vmem:[#allocation3 + $0x188] sm:$0xff]
    %v1331 = vld [vmem:[#allocation3 + $0x190] sm:$0xff]
    %v1332 = vld [vmem:[#allocation3 + $0x198] sm:$0xff]
    %v1333 = vld [vmem:[#allocation3 + $0x1a0] sm:$0xff]
    %v1334 = vld [vmem:[#allocation3 + $0x1a8] sm:$0xff]
    %v1335 = vld [vmem:[#allocation3 + $0x1b0] sm:$0xff]
    %v1336 = vld [vmem:[#allocation3 + $0x1b8] sm:$0xff]
    %v1337 = vld [vmem:[#allocation3 + $0x1c0] sm:$0xff]
    %v1338 = vld [vmem:[#allocation3 + $0x1c8] sm:$0xff]
    %v1339 = vld [vmem:[#allocation3 + $0x1d0] sm:$0xff]
    %v1340 = vld [vmem:[#allocation3 + $0x1d8] sm:$0xff]
    %v1341 = vld [vmem:[#allocation3 + $0x1e0] sm:$0xff]
    %v1342 = vld [vmem:[#allocation3 + $0x1e8] sm:$0xff]
    %v1343 = vld [vmem:[#allocation3 + $0x1f0] sm:$0xff]
    %v1344 = vld [vmem:[#allocation3 + $0x1f8] sm:$0xff]
    %vm1345 = vcmask 261120
    %1346 = vst.msk [vmem:[%s6] sm:$0xff] %vm1345, %v1281
    %1347 = vst.msk [vmem:[%s6 + $0x8] sm:$0xff] %vm1345, %v1282
    %1348 = vst.msk [vmem:[%s6 + $0x10] sm:$0xff] %vm1345, %v1283
    %1349 = vst.msk [vmem:[%s6 + $0x18] sm:$0xff] %vm1345, %v1284
    %1350 = vst.msk [vmem:[%s6 + $0x20] sm:$0xff] %vm1345, %v1285
    %1351 = vst.msk [vmem:[%s6 + $0x28] sm:$0xff] %vm1345, %v1286
    %1352 = vst.msk [vmem:[%s6 + $0x30] sm:$0xff] %vm1345, %v1287
    %1353 = vst.msk [vmem:[%s6 + $0x38] sm:$0xff] %vm1345, %v1288
    %1354 = vst.msk [vmem:[%s6 + $0x40] sm:$0xff] %vm1345, %v1289
    %1355 = vst.msk [vmem:[%s6 + $0x48] sm:$0xff] %vm1345, %v1290
    %1356 = vst.msk [vmem:[%s6 + $0x50] sm:$0xff] %vm1345, %v1291
    %1357 = vst.msk [vmem:[%s6 + $0x58] sm:$0xff] %vm1345, %v1292
    %1358 = vst.msk [vmem:[%s6 + $0x60] sm:$0xff] %vm1345, %v1293
    %1359 = vst.msk [vmem:[%s6 + $0x68] sm:$0xff] %vm1345, %v1294
    %1360 = vst.msk [vmem:[%s6 + $0x70] sm:$0xff] %vm1345, %v1295
    %1361 = vst.msk [vmem:[%s6 + $0x78] sm:$0xff] %vm1345, %v1296
    %1362 = vst.msk [vmem:[%s6 + $0x80] sm:$0xff] %vm1345, %v1297
    %1363 = vst.msk [vmem:[%s6 + $0x88] sm:$0xff] %vm1345, %v1298
    %1364 = vst.msk [vmem:[%s6 + $0x90] sm:$0xff] %vm1345, %v1299
    %1365 = vst.msk [vmem:[%s6 + $0x98] sm:$0xff] %vm1345, %v1300
    %1366 = vst.msk [vmem:[%s6 + $0xa0] sm:$0xff] %vm1345, %v1301
    %1367 = vst.msk [vmem:[%s6 + $0xa8] sm:$0xff] %vm1345, %v1302
    %1368 = vst.msk [vmem:[%s6 + $0xb0] sm:$0xff] %vm1345, %v1303
    %1369 = vst.msk [vmem:[%s6 + $0xb8] sm:$0xff] %vm1345, %v1304
    %1370 = vst.msk [vmem:[%s6 + $0xc0] sm:$0xff] %vm1345, %v1305
    %1371 = vst.msk [vmem:[%s6 + $0xc8] sm:$0xff] %vm1345, %v1306
    %1372 = vst.msk [vmem:[%s6 + $0xd0] sm:$0xff] %vm1345, %v1307
    %1373 = vst.msk [vmem:[%s6 + $0xd8] sm:$0xff] %vm1345, %v1308
    %1374 = vst.msk [vmem:[%s6 + $0xe0] sm:$0xff] %vm1345, %v1309
    %1375 = vst.msk [vmem:[%s6 + $0xe8] sm:$0xff] %vm1345, %v1310
    %1376 = vst.msk [vmem:[%s6 + $0xf0] sm:$0xff] %vm1345, %v1311
    %1377 = vst.msk [vmem:[%s6 + $0xf8] sm:$0xff] %vm1345, %v1312
    %1378 = vst.msk [vmem:[%s6 + $0x100] sm:$0xff] %vm1345, %v1313
    %1379 = vst.msk [vmem:[%s6 + $0x108] sm:$0xff] %vm1345, %v1314
    %1380 = vst.msk [vmem:[%s6 + $0x110] sm:$0xff] %vm1345, %v1315
    %1381 = vst.msk [vmem:[%s6 + $0x118] sm:$0xff] %vm1345, %v1316
    %1382 = vst.msk [vmem:[%s6 + $0x120] sm:$0xff] %vm1345, %v1317
    %1383 = vst.msk [vmem:[%s6 + $0x128] sm:$0xff] %vm1345, %v1318
    %1384 = vst.msk [vmem:[%s6 + $0x130] sm:$0xff] %vm1345, %v1319
    %1385 = vst.msk [vmem:[%s6 + $0x138] sm:$0xff] %vm1345, %v1320
    %1386 = vst.msk [vmem:[%s6 + $0x140] sm:$0xff] %vm1345, %v1321
    %1387 = vst.msk [vmem:[%s6 + $0x148] sm:$0xff] %vm1345, %v1322
    %1388 = vst.msk [vmem:[%s6 + $0x150] sm:$0xff] %vm1345, %v1323
    %1389 = vst.msk [vmem:[%s6 + $0x158] sm:$0xff] %vm1345, %v1324
    %1390 = vst.msk [vmem:[%s6 + $0x160] sm:$0xff] %vm1345, %v1325
    %1391 = vst.msk [vmem:[%s6 + $0x168] sm:$0xff] %vm1345, %v1326
    %1392 = vst.msk [vmem:[%s6 + $0x170] sm:$0xff] %vm1345, %v1327
    %1393 = vst.msk [vmem:[%s6 + $0x178] sm:$0xff] %vm1345, %v1328
    %1394 = vst.msk [vmem:[%s6 + $0x180] sm:$0xff] %vm1345, %v1329
    %1395 = vst.msk [vmem:[%s6 + $0x188] sm:$0xff] %vm1345, %v1330
    %1396 = vst.msk [vmem:[%s6 + $0x190] sm:$0xff] %vm1345, %v1331
    %1397 = vst.msk [vmem:[%s6 + $0x198] sm:$0xff] %vm1345, %v1332
    %1398 = vst.msk [vmem:[%s6 + $0x1a0] sm:$0xff] %vm1345, %v1333
    %1399 = vst.msk [vmem:[%s6 + $0x1a8] sm:$0xff] %vm1345, %v1334
    %1400 = vst.msk [vmem:[%s6 + $0x1b0] sm:$0xff] %vm1345, %v1335
    %1401 = vst.msk [vmem:[%s6 + $0x1b8] sm:$0xff] %vm1345, %v1336
    %1402 = vst.msk [vmem:[%s6 + $0x1c0] sm:$0xff] %vm1345, %v1337
    %1403 = vst.msk [vmem:[%s6 + $0x1c8] sm:$0xff] %vm1345, %v1338
    %1404 = vst.msk [vmem:[%s6 + $0x1d0] sm:$0xff] %vm1345, %v1339
    %1405 = vst.msk [vmem:[%s6 + $0x1d8] sm:$0xff] %vm1345, %v1340
    %1406 = vst.msk [vmem:[%s6 + $0x1e0] sm:$0xff] %vm1345, %v1341
    %1407 = vst.msk [vmem:[%s6 + $0x1e8] sm:$0xff] %vm1345, %v1342
    %1408 = vst.msk [vmem:[%s6 + $0x1f0] sm:$0xff] %vm1345, %v1343
    %1409 = vst.msk [vmem:[%s6 + $0x1f8] sm:$0xff] %vm1345, %v1344
    %v1410 = vld [vmem:[#allocation3] sm:$0xff]
    %v1411 = vld [vmem:[#allocation3 + $0x8] sm:$0xff]
    %v1412 = vld [vmem:[#allocation3 + $0x10] sm:$0xff]
    %v1413 = vld [vmem:[#allocation3 + $0x18] sm:$0xff]
    %v1414 = vld [vmem:[#allocation3 + $0x20] sm:$0xff]
    %v1415 = vld [vmem:[#allocation3 + $0x28] sm:$0xff]
    %v1416 = vld [vmem:[#allocation3 + $0x30] sm:$0xff]
    %v1417 = vld [vmem:[#allocation3 + $0x38] sm:$0xff]
    %v1418 = vld [vmem:[#allocation3 + $0x40] sm:$0xff]
    %v1419 = vld [vmem:[#allocation3 + $0x48] sm:$0xff]
    %v1420 = vld [vmem:[#allocation3 + $0x50] sm:$0xff]
    %v1421 = vld [vmem:[#allocation3 + $0x58] sm:$0xff]
    %v1422 = vld [vmem:[#allocation3 + $0x60] sm:$0xff]
    %v1423 = vld [vmem:[#allocation3 + $0x68] sm:$0xff]
    %v1424 = vld [vmem:[#allocation3 + $0x70] sm:$0xff]
    %v1425 = vld [vmem:[#allocation3 + $0x78] sm:$0xff]
    %v1426 = vld [vmem:[#allocation3 + $0x80] sm:$0xff]
    %v1427 = vld [vmem:[#allocation3 + $0x88] sm:$0xff]
    %v1428 = vld [vmem:[#allocation3 + $0x90] sm:$0xff]
    %v1429 = vld [vmem:[#allocation3 + $0x98] sm:$0xff]
    %v1430 = vld [vmem:[#allocation3 + $0xa0] sm:$0xff]
    %v1431 = vld [vmem:[#allocation3 + $0xa8] sm:$0xff]
    %v1432 = vld [vmem:[#allocation3 + $0xb0] sm:$0xff]
    %v1433 = vld [vmem:[#allocation3 + $0xb8] sm:$0xff]
    %v1434 = vld [vmem:[#allocation3 + $0xc0] sm:$0xff]
    %v1435 = vld [vmem:[#allocation3 + $0xc8] sm:$0xff]
    %v1436 = vld [vmem:[#allocation3 + $0xd0] sm:$0xff]
    %v1437 = vld [vmem:[#allocation3 + $0xd8] sm:$0xff]
    %v1438 = vld [vmem:[#allocation3 + $0xe0] sm:$0xff]
    %v1439 = vld [vmem:[#allocation3 + $0xe8] sm:$0xff]
    %v1440 = vld [vmem:[#allocation3 + $0xf0] sm:$0xff]
    %v1441 = vld [vmem:[#allocation3 + $0xf8] sm:$0xff]
    %v1442 = vld [vmem:[#allocation3 + $0x100] sm:$0xff]
    %v1443 = vld [vmem:[#allocation3 + $0x108] sm:$0xff]
    %v1444 = vld [vmem:[#allocation3 + $0x110] sm:$0xff]
    %v1445 = vld [vmem:[#allocation3 + $0x118] sm:$0xff]
    %v1446 = vld [vmem:[#allocation3 + $0x120] sm:$0xff]
    %v1447 = vld [vmem:[#allocation3 + $0x128] sm:$0xff]
    %v1448 = vld [vmem:[#allocation3 + $0x130] sm:$0xff]
    %v1449 = vld [vmem:[#allocation3 + $0x138] sm:$0xff]
    %v1450 = vld [vmem:[#allocation3 + $0x140] sm:$0xff]
    %v1451 = vld [vmem:[#allocation3 + $0x148] sm:$0xff]
    %v1452 = vld [vmem:[#allocation3 + $0x150] sm:$0xff]
    %v1453 = vld [vmem:[#allocation3 + $0x158] sm:$0xff]
    %v1454 = vld [vmem:[#allocation3 + $0x160] sm:$0xff]
    %v1455 = vld [vmem:[#allocation3 + $0x168] sm:$0xff]
    %v1456 = vld [vmem:[#allocation3 + $0x170] sm:$0xff]
    %v1457 = vld [vmem:[#allocation3 + $0x178] sm:$0xff]
    %v1458 = vld [vmem:[#allocation3 + $0x180] sm:$0xff]
    %v1459 = vld [vmem:[#allocation3 + $0x188] sm:$0xff]
    %v1460 = vld [vmem:[#allocation3 + $0x190] sm:$0xff]
    %v1461 = vld [vmem:[#allocation3 + $0x198] sm:$0xff]
    %v1462 = vld [vmem:[#allocation3 + $0x1a0] sm:$0xff]
    %v1463 = vld [vmem:[#allocation3 + $0x1a8] sm:$0xff]
    %v1464 = vld [vmem:[#allocation3 + $0x1b0] sm:$0xff]
    %v1465 = vld [vmem:[#allocation3 + $0x1b8] sm:$0xff]
    %v1466 = vld [vmem:[#allocation3 + $0x1c0] sm:$0xff]
    %v1467 = vld [vmem:[#allocation3 + $0x1c8] sm:$0xff]
    %v1468 = vld [vmem:[#allocation3 + $0x1d0] sm:$0xff]
    %v1469 = vld [vmem:[#allocation3 + $0x1d8] sm:$0xff]
    %v1470 = vld [vmem:[#allocation3 + $0x1e0] sm:$0xff]
    %v1471 = vld [vmem:[#allocation3 + $0x1e8] sm:$0xff]
    %v1472 = vld [vmem:[#allocation3 + $0x1f0] sm:$0xff]
    %v1473 = vld [vmem:[#allocation3 + $0x1f8] sm:$0xff]
    %v1474 = vld [vmem:[%s1] sm:$0xff]
    %v1475 = vld [vmem:[%s1 + $0x8] sm:$0xff]
    %v1476 = vld [vmem:[%s1 + $0x10] sm:$0xff]
    %v1477 = vld [vmem:[%s1 + $0x18] sm:$0xff]
    %v1478 = vld [vmem:[%s1 + $0x20] sm:$0xff]
    %v1479 = vld [vmem:[%s1 + $0x28] sm:$0xff]
    %v1480 = vld [vmem:[%s1 + $0x30] sm:$0xff]
    %v1481 = vld [vmem:[%s1 + $0x38] sm:$0xff]
    %v1482 = vld [vmem:[%s1 + $0x40] sm:$0xff]
    %v1483 = vld [vmem:[%s1 + $0x48] sm:$0xff]
    %v1484 = vld [vmem:[%s1 + $0x50] sm:$0xff]
    %v1485 = vld [vmem:[%s1 + $0x58] sm:$0xff]
    %v1486 = vld [vmem:[%s1 + $0x60] sm:$0xff]
    %v1487 = vld [vmem:[%s1 + $0x68] sm:$0xff]
    %v1488 = vld [vmem:[%s1 + $0x70] sm:$0xff]
    %v1489 = vld [vmem:[%s1 + $0x78] sm:$0xff]
    %v1490 = vld [vmem:[%s1 + $0x80] sm:$0xff]
    %v1491 = vld [vmem:[%s1 + $0x88] sm:$0xff]
    %v1492 = vld [vmem:[%s1 + $0x90] sm:$0xff]
    %v1493 = vld [vmem:[%s1 + $0x98] sm:$0xff]
    %v1494 = vld [vmem:[%s1 + $0xa0] sm:$0xff]
    %v1495 = vld [vmem:[%s1 + $0xa8] sm:$0xff]
    %v1496 = vld [vmem:[%s1 + $0xb0] sm:$0xff]
    %v1497 = vld [vmem:[%s1 + $0xb8] sm:$0xff]
    %v1498 = vld [vmem:[%s1 + $0xc0] sm:$0xff]
    %v1499 = vld [vmem:[%s1 + $0xc8] sm:$0xff]
    %v1500 = vld [vmem:[%s1 + $0xd0] sm:$0xff]
    %v1501 = vld [vmem:[%s1 + $0xd8] sm:$0xff]
    %v1502 = vld [vmem:[%s1 + $0xe0] sm:$0xff]
    %v1503 = vld [vmem:[%s1 + $0xe8] sm:$0xff]
    %v1504 = vld [vmem:[%s1 + $0xf0] sm:$0xff]
    %v1505 = vld [vmem:[%s1 + $0xf8] sm:$0xff]
    %v1506 = vld [vmem:[%s1 + $0x100] sm:$0xff]
    %v1507 = vld [vmem:[%s1 + $0x108] sm:$0xff]
    %v1508 = vld [vmem:[%s1 + $0x110] sm:$0xff]
    %v1509 = vld [vmem:[%s1 + $0x118] sm:$0xff]
    %v1510 = vld [vmem:[%s1 + $0x120] sm:$0xff]
    %v1511 = vld [vmem:[%s1 + $0x128] sm:$0xff]
    %v1512 = vld [vmem:[%s1 + $0x130] sm:$0xff]
    %v1513 = vld [vmem:[%s1 + $0x138] sm:$0xff]
    %v1514 = vld [vmem:[%s1 + $0x140] sm:$0xff]
    %v1515 = vld [vmem:[%s1 + $0x148] sm:$0xff]
    %v1516 = vld [vmem:[%s1 + $0x150] sm:$0xff]
    %v1517 = vld [vmem:[%s1 + $0x158] sm:$0xff]
    %v1518 = vld [vmem:[%s1 + $0x160] sm:$0xff]
    %v1519 = vld [vmem:[%s1 + $0x168] sm:$0xff]
    %v1520 = vld [vmem:[%s1 + $0x170] sm:$0xff]
    %v1521 = vld [vmem:[%s1 + $0x178] sm:$0xff]
    %v1522 = vld [vmem:[%s1 + $0x180] sm:$0xff]
    %v1523 = vld [vmem:[%s1 + $0x188] sm:$0xff]
    %v1524 = vld [vmem:[%s1 + $0x190] sm:$0xff]
    %v1525 = vld [vmem:[%s1 + $0x198] sm:$0xff]
    %v1526 = vld [vmem:[%s1 + $0x1a0] sm:$0xff]
    %v1527 = vld [vmem:[%s1 + $0x1a8] sm:$0xff]
    %v1528 = vld [vmem:[%s1 + $0x1b0] sm:$0xff]
    %v1529 = vld [vmem:[%s1 + $0x1b8] sm:$0xff]
    %v1530 = vld [vmem:[%s1 + $0x1c0] sm:$0xff]
    %v1531 = vld [vmem:[%s1 + $0x1c8] sm:$0xff]
    %v1532 = vld [vmem:[%s1 + $0x1d0] sm:$0xff]
    %v1533 = vld [vmem:[%s1 + $0x1d8] sm:$0xff]
    %v1534 = vld [vmem:[%s1 + $0x1e0] sm:$0xff]
    %v1535 = vld [vmem:[%s1 + $0x1e8] sm:$0xff]
    %v1536 = vld [vmem:[%s1 + $0x1f0] sm:$0xff]
    %v1537 = vld [vmem:[%s1 + $0x1f8] sm:$0xff]
    %v1538 = vld [vmem:[#allocation5] sm:$0xff]
    %v1539 = vld [vmem:[#allocation5 + $0x8] sm:$0xff]
    %v1540 = vld [vmem:[#allocation5 + $0x10] sm:$0xff]
    %v1541 = vld [vmem:[#allocation5 + $0x18] sm:$0xff]
    %v1542 = vld [vmem:[#allocation5 + $0x20] sm:$0xff]
    %v1543 = vld [vmem:[#allocation5 + $0x28] sm:$0xff]
    %v1544 = vld [vmem:[#allocation5 + $0x30] sm:$0xff]
    %v1545 = vld [vmem:[#allocation5 + $0x38] sm:$0xff]
    %v1546 = vld [vmem:[#allocation5 + $0x40] sm:$0xff]
    %v1547 = vld [vmem:[#allocation5 + $0x48] sm:$0xff]
    %v1548 = vld [vmem:[#allocation5 + $0x50] sm:$0xff]
    %v1549 = vld [vmem:[#allocation5 + $0x58] sm:$0xff]
    %v1550 = vld [vmem:[#allocation5 + $0x60] sm:$0xff]
    %v1551 = vld [vmem:[#allocation5 + $0x68] sm:$0xff]
    %v1552 = vld [vmem:[#allocation5 + $0x70] sm:$0xff]
    %v1553 = vld [vmem:[#allocation5 + $0x78] sm:$0xff]
    %v1554 = vpack.c.bf16 %v1410, %v1410
    %v1555 = vpack.c.bf16 %v1411, %v1411
    %v1556 = vpack.c.bf16 %v1412, %v1412
    %v1557 = vpack.c.bf16 %v1413, %v1413
    %v1558 = vpack.c.bf16 %v1414, %v1414
    %v1559 = vpack.c.bf16 %v1415, %v1415
    %v1560 = vpack.c.bf16 %v1416, %v1416
    %v1561 = vpack.c.bf16 %v1417, %v1417
    %v1562 = vpack.c.bf16 %v1418, %v1418
    %v1563 = vpack.c.bf16 %v1419, %v1419
    %v1564 = vpack.c.bf16 %v1420, %v1420
    %v1565 = vpack.c.bf16 %v1421, %v1421
    %v1566 = vpack.c.bf16 %v1422, %v1422
    %v1567 = vpack.c.bf16 %v1423, %v1423
    %v1568 = vpack.c.bf16 %v1424, %v1424
    %v1569 = vpack.c.bf16 %v1425, %v1425
    %v1570 = vpack.c.bf16 %v1426, %v1426
    %v1571 = vpack.c.bf16 %v1427, %v1427
    %v1572 = vpack.c.bf16 %v1428, %v1428
    %v1573 = vpack.c.bf16 %v1429, %v1429
    %v1574 = vpack.c.bf16 %v1430, %v1430
    %v1575 = vpack.c.bf16 %v1431, %v1431
    %v1576 = vpack.c.bf16 %v1432, %v1432
    %v1577 = vpack.c.bf16 %v1433, %v1433
    %v1578 = vpack.c.bf16 %v1434, %v1434
    %v1579 = vpack.c.bf16 %v1435, %v1435
    %v1580 = vpack.c.bf16 %v1436, %v1436
    %v1581 = vpack.c.bf16 %v1437, %v1437
    %v1582 = vpack.c.bf16 %v1438, %v1438
    %v1583 = vpack.c.bf16 %v1439, %v1439
    %v1584 = vpack.c.bf16 %v1440, %v1440
    %v1585 = vpack.c.bf16 %v1441, %v1441
    %v1586 = vpack.c.bf16 %v1442, %v1442
    %v1587 = vpack.c.bf16 %v1443, %v1443
    %v1588 = vpack.c.bf16 %v1444, %v1444
    %v1589 = vpack.c.bf16 %v1445, %v1445
    %v1590 = vpack.c.bf16 %v1446, %v1446
    %v1591 = vpack.c.bf16 %v1447, %v1447
    %v1592 = vpack.c.bf16 %v1448, %v1448
    %v1593 = vpack.c.bf16 %v1449, %v1449
    %v1594 = vpack.c.bf16 %v1450, %v1450
    %v1595 = vpack.c.bf16 %v1451, %v1451
    %v1596 = vpack.c.bf16 %v1452, %v1452
    %v1597 = vpack.c.bf16 %v1453, %v1453
    %v1598 = vpack.c.bf16 %v1454, %v1454
    %v1599 = vpack.c.bf16 %v1455, %v1455
    %v1600 = vpack.c.bf16 %v1456, %v1456
    %v1601 = vpack.c.bf16 %v1457, %v1457
    %v1602 = vpack.c.bf16 %v1458, %v1458
    %v1603 = vpack.c.bf16 %v1459, %v1459
    %v1604 = vpack.c.bf16 %v1460, %v1460
    %v1605 = vpack.c.bf16 %v1461, %v1461
    %v1606 = vpack.c.bf16 %v1462, %v1462
    %v1607 = vpack.c.bf16 %v1463, %v1463
    %v1608 = vpack.c.bf16 %v1464, %v1464
    %v1609 = vpack.c.bf16 %v1465, %v1465
    %v1610 = vpack.c.bf16 %v1466, %v1466
    %v1611 = vpack.c.bf16 %v1467, %v1467
    %v1612 = vpack.c.bf16 %v1468, %v1468
    %v1613 = vpack.c.bf16 %v1469, %v1469
    %v1614 = vpack.c.bf16 %v1470, %v1470
    %v1615 = vpack.c.bf16 %v1471, %v1471
    %v1616 = vpack.c.bf16 %v1472, %v1472
    %v1617 = vpack.c.bf16 %v1473, %v1473
    %v1618 = vunpack.c.l.bf16 %v1554
    %v1619 = vunpack.c.l.bf16 %v1555
    %v1620 = vunpack.c.l.bf16 %v1556
    %v1621 = vunpack.c.l.bf16 %v1557
    %v1622 = vunpack.c.l.bf16 %v1558
    %v1623 = vunpack.c.l.bf16 %v1559
    %v1624 = vunpack.c.l.bf16 %v1560
    %v1625 = vunpack.c.l.bf16 %v1561
    %v1626 = vunpack.c.l.bf16 %v1562
    %v1627 = vunpack.c.l.bf16 %v1563
    %v1628 = vunpack.c.l.bf16 %v1564
    %v1629 = vunpack.c.l.bf16 %v1565
    %v1630 = vunpack.c.l.bf16 %v1566
    %v1631 = vunpack.c.l.bf16 %v1567
    %v1632 = vunpack.c.l.bf16 %v1568
    %v1633 = vunpack.c.l.bf16 %v1569
    %v1634 = vunpack.c.l.bf16 %v1570
    %v1635 = vunpack.c.l.bf16 %v1571
    %v1636 = vunpack.c.l.bf16 %v1572
    %v1637 = vunpack.c.l.bf16 %v1573
    %v1638 = vunpack.c.l.bf16 %v1574
    %v1639 = vunpack.c.l.bf16 %v1575
    %v1640 = vunpack.c.l.bf16 %v1576
    %v1641 = vunpack.c.l.bf16 %v1577
    %v1642 = vunpack.c.l.bf16 %v1578
    %v1643 = vunpack.c.l.bf16 %v1579
    %v1644 = vunpack.c.l.bf16 %v1580
    %v1645 = vunpack.c.l.bf16 %v1581
    %v1646 = vunpack.c.l.bf16 %v1582
    %v1647 = vunpack.c.l.bf16 %v1583
    %v1648 = vunpack.c.l.bf16 %v1584
    %v1649 = vunpack.c.l.bf16 %v1585
    %v1650 = vunpack.c.l.bf16 %v1586
    %v1651 = vunpack.c.l.bf16 %v1587
    %v1652 = vunpack.c.l.bf16 %v1588
    %v1653 = vunpack.c.l.bf16 %v1589
    %v1654 = vunpack.c.l.bf16 %v1590
    %v1655 = vunpack.c.l.bf16 %v1591
    %v1656 = vunpack.c.l.bf16 %v1592
    %v1657 = vunpack.c.l.bf16 %v1593
    %v1658 = vunpack.c.l.bf16 %v1594
    %v1659 = vunpack.c.l.bf16 %v1595
    %v1660 = vunpack.c.l.bf16 %v1596
    %v1661 = vunpack.c.l.bf16 %v1597
    %v1662 = vunpack.c.l.bf16 %v1598
    %v1663 = vunpack.c.l.bf16 %v1599
    %v1664 = vunpack.c.l.bf16 %v1600
    %v1665 = vunpack.c.l.bf16 %v1601
    %v1666 = vunpack.c.l.bf16 %v1602
    %v1667 = vunpack.c.l.bf16 %v1603
    %v1668 = vunpack.c.l.bf16 %v1604
    %v1669 = vunpack.c.l.bf16 %v1605
    %v1670 = vunpack.c.l.bf16 %v1606
    %v1671 = vunpack.c.l.bf16 %v1607
    %v1672 = vunpack.c.l.bf16 %v1608
    %v1673 = vunpack.c.l.bf16 %v1609
    %v1674 = vunpack.c.l.bf16 %v1610
    %v1675 = vunpack.c.l.bf16 %v1611
    %v1676 = vunpack.c.l.bf16 %v1612
    %v1677 = vunpack.c.l.bf16 %v1613
    %v1678 = vunpack.c.l.bf16 %v1614
    %v1679 = vunpack.c.l.bf16 %v1615
    %v1680 = vunpack.c.l.bf16 %v1616
    %v1681 = vunpack.c.l.bf16 %v1617
    %v1682 = vsub.f32 %v1410, %v1618
    %v1683 = vsub.f32 %v1411, %v1619
    %v1684 = vsub.f32 %v1412, %v1620
    %v1685 = vsub.f32 %v1413, %v1621
    %v1686 = vsub.f32 %v1414, %v1622
    %v1687 = vsub.f32 %v1415, %v1623
    %v1688 = vsub.f32 %v1416, %v1624
    %v1689 = vsub.f32 %v1417, %v1625
    %v1690 = vsub.f32 %v1418, %v1626
    %v1691 = vsub.f32 %v1419, %v1627
    %v1692 = vsub.f32 %v1420, %v1628
    %v1693 = vsub.f32 %v1421, %v1629
    %v1694 = vsub.f32 %v1422, %v1630
    %v1695 = vsub.f32 %v1423, %v1631
    %v1696 = vsub.f32 %v1424, %v1632
    %v1697 = vsub.f32 %v1425, %v1633
    %v1698 = vsub.f32 %v1426, %v1634
    %v1699 = vsub.f32 %v1427, %v1635
    %v1700 = vsub.f32 %v1428, %v1636
    %v1701 = vsub.f32 %v1429, %v1637
    %v1702 = vsub.f32 %v1430, %v1638
    %v1703 = vsub.f32 %v1431, %v1639
    %v1704 = vsub.f32 %v1432, %v1640
    %v1705 = vsub.f32 %v1433, %v1641
    %v1706 = vsub.f32 %v1434, %v1642
    %v1707 = vsub.f32 %v1435, %v1643
    %v1708 = vsub.f32 %v1436, %v1644
    %v1709 = vsub.f32 %v1437, %v1645
    %v1710 = vsub.f32 %v1438, %v1646
    %v1711 = vsub.f32 %v1439, %v1647
    %v1712 = vsub.f32 %v1440, %v1648
    %v1713 = vsub.f32 %v1441, %v1649
    %v1714 = vsub.f32 %v1442, %v1650
    %v1715 = vsub.f32 %v1443, %v1651
    %v1716 = vsub.f32 %v1444, %v1652
    %v1717 = vsub.f32 %v1445, %v1653
    %v1718 = vsub.f32 %v1446, %v1654
    %v1719 = vsub.f32 %v1447, %v1655
    %v1720 = vsub.f32 %v1448, %v1656
    %v1721 = vsub.f32 %v1449, %v1657
    %v1722 = vsub.f32 %v1450, %v1658
    %v1723 = vsub.f32 %v1451, %v1659
    %v1724 = vsub.f32 %v1452, %v1660
    %v1725 = vsub.f32 %v1453, %v1661
    %v1726 = vsub.f32 %v1454, %v1662
    %v1727 = vsub.f32 %v1455, %v1663
    %v1728 = vsub.f32 %v1456, %v1664
    %v1729 = vsub.f32 %v1457, %v1665
    %v1730 = vsub.f32 %v1458, %v1666
    %v1731 = vsub.f32 %v1459, %v1667
    %v1732 = vsub.f32 %v1460, %v1668
    %v1733 = vsub.f32 %v1461, %v1669
    %v1734 = vsub.f32 %v1462, %v1670
    %v1735 = vsub.f32 %v1463, %v1671
    %v1736 = vsub.f32 %v1464, %v1672
    %v1737 = vsub.f32 %v1465, %v1673
    %v1738 = vsub.f32 %v1466, %v1674
    %v1739 = vsub.f32 %v1467, %v1675
    %v1740 = vsub.f32 %v1468, %v1676
    %v1741 = vsub.f32 %v1469, %v1677
    %v1742 = vsub.f32 %v1470, %v1678
    %v1743 = vsub.f32 %v1471, %v1679
    %v1744 = vsub.f32 %v1472, %v1680
    %v1745 = vsub.f32 %v1473, %v1681
    %1746 = vxpose.xlu0.b32.start [1/16] %v1618, 128
    %1747 = vxpose.xlu0.b32.cont [2/16] %v1619, 128
    %1748 = vxpose.xlu0.b32.cont [3/16] %v1620, 128
    %1749 = vxpose.xlu0.b32.cont [4/16] %v1621, 128
    %1750 = vxpose.xlu0.b32.cont [5/16] %v1622, 128
    %1751 = vxpose.xlu0.b32.cont [6/16] %v1623, 128
    %1752 = vxpose.xlu0.b32.cont [7/16] %v1624, 128
    %1753 = vxpose.xlu0.b32.cont [8/16] %v1625, 128
    %1754 = vxpose.xlu0.b32.cont [9/16] %v1626, 128
    %1755 = vxpose.xlu0.b32.cont [10/16] %v1627, 128
    %1756 = vxpose.xlu0.b32.cont [11/16] %v1628, 128
    %1757 = vxpose.xlu0.b32.cont [12/16] %v1629, 128
    %1758 = vxpose.xlu0.b32.cont [13/16] %v1630, 128
    %1759 = vxpose.xlu0.b32.cont [14/16] %v1631, 128
    %1760 = vxpose.xlu0.b32.cont [15/16] %v1632, 128
    %1761 = vxpose.xlu0.b32.end [16/16] %v1633, 128
    %v1762 = vpop.trf.xlu0
    %v1763 = vpop.trf.xlu0
    %v1764 = vpop.trf.xlu0
    %v1765 = vpop.trf.xlu0
    %v1766 = vpop.trf.xlu0
    %v1767 = vpop.trf.xlu0
    %v1768 = vpop.trf.xlu0
    %v1769 = vpop.trf.xlu0
    %v1770 = vpop.trf.xlu0
    %v1771 = vpop.trf.xlu0
    %v1772 = vpop.trf.xlu0
    %v1773 = vpop.trf.xlu0
    %v1774 = vpop.trf.xlu0
    %v1775 = vpop.trf.xlu0
    %v1776 = vpop.trf.xlu0
    %v1777 = vpop.trf.xlu0
    %1778 = vxpose.xlu0.b32.start [1/16] %v1634, 128
    %1779 = vxpose.xlu0.b32.cont [2/16] %v1635, 128
    %1780 = vxpose.xlu0.b32.cont [3/16] %v1636, 128
    %1781 = vxpose.xlu0.b32.cont [4/16] %v1637, 128
    %1782 = vxpose.xlu0.b32.cont [5/16] %v1638, 128
    %1783 = vxpose.xlu0.b32.cont [6/16] %v1639, 128
    %1784 = vxpose.xlu0.b32.cont [7/16] %v1640, 128
    %1785 = vxpose.xlu0.b32.cont [8/16] %v1641, 128
    %1786 = vxpose.xlu0.b32.cont [9/16] %v1642, 128
    %1787 = vxpose.xlu0.b32.cont [10/16] %v1643, 128
    %1788 = vxpose.xlu0.b32.cont [11/16] %v1644, 128
    %1789 = vxpose.xlu0.b32.cont [12/16] %v1645, 128
    %1790 = vxpose.xlu0.b32.cont [13/16] %v1646, 128
    %1791 = vxpose.xlu0.b32.cont [14/16] %v1647, 128
    %1792 = vxpose.xlu0.b32.cont [15/16] %v1648, 128
    %1793 = vxpose.xlu0.b32.end [16/16] %v1649, 128
    %v1794 = vpop.trf.xlu0
    %v1795 = vpop.trf.xlu0
    %v1796 = vpop.trf.xlu0
    %v1797 = vpop.trf.xlu0
    %v1798 = vpop.trf.xlu0
    %v1799 = vpop.trf.xlu0
    %v1800 = vpop.trf.xlu0
    %v1801 = vpop.trf.xlu0
    %v1802 = vpop.trf.xlu0
    %v1803 = vpop.trf.xlu0
    %v1804 = vpop.trf.xlu0
    %v1805 = vpop.trf.xlu0
    %v1806 = vpop.trf.xlu0
    %v1807 = vpop.trf.xlu0
    %v1808 = vpop.trf.xlu0
    %v1809 = vpop.trf.xlu0
    %1810 = vxpose.xlu0.b32.start [1/16] %v1650, 128
    %1811 = vxpose.xlu0.b32.cont [2/16] %v1651, 128
    %1812 = vxpose.xlu0.b32.cont [3/16] %v1652, 128
    %1813 = vxpose.xlu0.b32.cont [4/16] %v1653, 128
    %1814 = vxpose.xlu0.b32.cont [5/16] %v1654, 128
    %1815 = vxpose.xlu0.b32.cont [6/16] %v1655, 128
    %1816 = vxpose.xlu0.b32.cont [7/16] %v1656, 128
    %1817 = vxpose.xlu0.b32.cont [8/16] %v1657, 128
    %1818 = vxpose.xlu0.b32.cont [9/16] %v1658, 128
    %1819 = vxpose.xlu0.b32.cont [10/16] %v1659, 128
    %1820 = vxpose.xlu0.b32.cont [11/16] %v1660, 128
    %1821 = vxpose.xlu0.b32.cont [12/16] %v1661, 128
    %1822 = vxpose.xlu0.b32.cont [13/16] %v1662, 128
    %1823 = vxpose.xlu0.b32.cont [14/16] %v1663, 128
    %1824 = vxpose.xlu0.b32.cont [15/16] %v1664, 128
    %1825 = vxpose.xlu0.b32.end [16/16] %v1665, 128
    %v1826 = vpop.trf.xlu0
    %v1827 = vpop.trf.xlu0
    %v1828 = vpop.trf.xlu0
    %v1829 = vpop.trf.xlu0
    %v1830 = vpop.trf.xlu0
    %v1831 = vpop.trf.xlu0
    %v1832 = vpop.trf.xlu0
    %v1833 = vpop.trf.xlu0
    %v1834 = vpop.trf.xlu0
    %v1835 = vpop.trf.xlu0
    %v1836 = vpop.trf.xlu0
    %v1837 = vpop.trf.xlu0
    %v1838 = vpop.trf.xlu0
    %v1839 = vpop.trf.xlu0
    %v1840 = vpop.trf.xlu0
    %v1841 = vpop.trf.xlu0
    %1842 = vxpose.xlu0.b32.start [1/16] %v1666, 128
    %1843 = vxpose.xlu0.b32.cont [2/16] %v1667, 128
    %1844 = vxpose.xlu0.b32.cont [3/16] %v1668, 128
    %1845 = vxpose.xlu0.b32.cont [4/16] %v1669, 128
    %1846 = vxpose.xlu0.b32.cont [5/16] %v1670, 128
    %1847 = vxpose.xlu0.b32.cont [6/16] %v1671, 128
    %1848 = vxpose.xlu0.b32.cont [7/16] %v1672, 128
    %1849 = vxpose.xlu0.b32.cont [8/16] %v1673, 128
    %1850 = vxpose.xlu0.b32.cont [9/16] %v1674, 128
    %1851 = vxpose.xlu0.b32.cont [10/16] %v1675, 128
    %1852 = vxpose.xlu0.b32.cont [11/16] %v1676, 128
    %1853 = vxpose.xlu0.b32.cont [12/16] %v1677, 128
    %1854 = vxpose.xlu0.b32.cont [13/16] %v1678, 128
    %1855 = vxpose.xlu0.b32.cont [14/16] %v1679, 128
    %1856 = vxpose.xlu0.b32.cont [15/16] %v1680, 128
    %1857 = vxpose.xlu0.b32.end [16/16] %v1681, 128
    %v1858 = vpop.trf.xlu0
    %v1859 = vpop.trf.xlu0
    %v1860 = vpop.trf.xlu0
    %v1861 = vpop.trf.xlu0
    %v1862 = vpop.trf.xlu0
    %v1863 = vpop.trf.xlu0
    %v1864 = vpop.trf.xlu0
    %v1865 = vpop.trf.xlu0
    %v1866 = vpop.trf.xlu0
    %v1867 = vpop.trf.xlu0
    %v1868 = vpop.trf.xlu0
    %v1869 = vpop.trf.xlu0
    %v1870 = vpop.trf.xlu0
    %v1871 = vpop.trf.xlu0
    %v1872 = vpop.trf.xlu0
    %v1873 = vpop.trf.xlu0
    %1874 = vmatpush.msra.mxu0 %v1697
    %1875 = vmatpush.msra.mxu0 %v1696
    %1876 = vmatpush.msra.mxu0 %v1695
    %1877 = vmatpush.msra.mxu0 %v1694
    %1878 = vmatpush.msra.mxu0 %v1693
    %1879 = vmatpush.msra.mxu0 %v1692
    %1880 = vmatpush.msra.mxu0 %v1691
    %1881 = vmatpush.msra.mxu0 %v1690
    %1882 = vmatpush.msra.mxu0 %v1689
    %1883 = vmatpush.msra.mxu0 %v1688
    %1884 = vmatpush.msra.mxu0 %v1687
    %1885 = vmatpush.msra.mxu0 %v1686
    %1886 = vmatpush.msra.mxu0 %v1685
    %1887 = vmatpush.msra.mxu0 %v1684
    %1888 = vmatpush.msra.mxu0 %v1683
    %1889 = vmatpush.msra.mxu0 %v1682
    %1890 = vmatmul.f32.gmra.mxu0 %v1762
    %v1891 = vpop.f32.mrf.mxu0
    %v1892 = vadd.f32 0.0, %v1891
    %1893 = vmatmul.f32.gmra.mxu0 %v1763
    %v1894 = vpop.f32.mrf.mxu0
    %v1895 = vadd.f32 0.0, %v1894
    %1896 = vmatmul.f32.gmra.mxu0 %v1764
    %v1897 = vpop.f32.mrf.mxu0
    %v1898 = vadd.f32 0.0, %v1897
    %1899 = vmatmul.f32.gmra.mxu0 %v1765
    %v1900 = vpop.f32.mrf.mxu0
    %v1901 = vadd.f32 0.0, %v1900
    %1902 = vmatmul.f32.gmra.mxu0 %v1766
    %v1903 = vpop.f32.mrf.mxu0
    %v1904 = vadd.f32 0.0, %v1903
    %1905 = vmatmul.f32.gmra.mxu0 %v1767
    %v1906 = vpop.f32.mrf.mxu0
    %v1907 = vadd.f32 0.0, %v1906
    %1908 = vmatmul.f32.gmra.mxu0 %v1768
    %v1909 = vpop.f32.mrf.mxu0
    %v1910 = vadd.f32 0.0, %v1909
    %1911 = vmatmul.f32.gmra.mxu0 %v1769
    %v1912 = vpop.f32.mrf.mxu0
    %v1913 = vadd.f32 0.0, %v1912
    %1914 = vmatmul.f32.gmra.mxu0 %v1770
    %v1915 = vpop.f32.mrf.mxu0
    %v1916 = vadd.f32 0.0, %v1915
    %1917 = vmatmul.f32.gmra.mxu0 %v1771
    %v1918 = vpop.f32.mrf.mxu0
    %v1919 = vadd.f32 0.0, %v1918
    %1920 = vmatmul.f32.gmra.mxu0 %v1772
    %v1921 = vpop.f32.mrf.mxu0
    %v1922 = vadd.f32 0.0, %v1921
    %1923 = vmatmul.f32.gmra.mxu0 %v1773
    %v1924 = vpop.f32.mrf.mxu0
    %v1925 = vadd.f32 0.0, %v1924
    %1926 = vmatmul.f32.gmra.mxu0 %v1774
    %v1927 = vpop.f32.mrf.mxu0
    %v1928 = vadd.f32 0.0, %v1927
    %1929 = vmatmul.f32.gmra.mxu0 %v1775
    %v1930 = vpop.f32.mrf.mxu0
    %v1931 = vadd.f32 0.0, %v1930
    %1932 = vmatmul.f32.gmra.mxu0 %v1776
    %v1933 = vpop.f32.mrf.mxu0
    %v1934 = vadd.f32 0.0, %v1933
    %1935 = vmatmul.f32.gmra.mxu0 %v1777
    %v1936 = vpop.f32.mrf.mxu0
    %v1937 = vadd.f32 0.0, %v1936
    %1938 = vdwg.mxu0
    %1939 = vmatpush.msra.mxu0 %v1713
    %1940 = vmatpush.msra.mxu0 %v1712
    %1941 = vmatpush.msra.mxu0 %v1711
    %1942 = vmatpush.msra.mxu0 %v1710
    %1943 = vmatpush.msra.mxu0 %v1709
    %1944 = vmatpush.msra.mxu0 %v1708
    %1945 = vmatpush.msra.mxu0 %v1707
    %1946 = vmatpush.msra.mxu0 %v1706
    %1947 = vmatpush.msra.mxu0 %v1705
    %1948 = vmatpush.msra.mxu0 %v1704
    %1949 = vmatpush.msra.mxu0 %v1703
    %1950 = vmatpush.msra.mxu0 %v1702
    %1951 = vmatpush.msra.mxu0 %v1701
    %1952 = vmatpush.msra.mxu0 %v1700
    %1953 = vmatpush.msra.mxu0 %v1699
    %1954 = vmatpush.msra.mxu0 %v1698
    %1955 = vmatmul.f32.gmra.mxu0 %v1794
    %v1956 = vpop.f32.mrf.mxu0
    %v1957 = vadd.f32 %v1892, %v1956
    %1958 = vmatmul.f32.gmra.mxu0 %v1795
    %v1959 = vpop.f32.mrf.mxu0
    %v1960 = vadd.f32 %v1895, %v1959
    %1961 = vmatmul.f32.gmra.mxu0 %v1796
    %v1962 = vpop.f32.mrf.mxu0
    %v1963 = vadd.f32 %v1898, %v1962
    %1964 = vmatmul.f32.gmra.mxu0 %v1797
    %v1965 = vpop.f32.mrf.mxu0
    %v1966 = vadd.f32 %v1901, %v1965
    %1967 = vmatmul.f32.gmra.mxu0 %v1798
    %v1968 = vpop.f32.mrf.mxu0
    %v1969 = vadd.f32 %v1904, %v1968
    %1970 = vmatmul.f32.gmra.mxu0 %v1799
    %v1971 = vpop.f32.mrf.mxu0
    %v1972 = vadd.f32 %v1907, %v1971
    %1973 = vmatmul.f32.gmra.mxu0 %v1800
    %v1974 = vpop.f32.mrf.mxu0
    %v1975 = vadd.f32 %v1910, %v1974
    %1976 = vmatmul.f32.gmra.mxu0 %v1801
    %v1977 = vpop.f32.mrf.mxu0
    %v1978 = vadd.f32 %v1913, %v1977
    %1979 = vmatmul.f32.gmra.mxu0 %v1802
    %v1980 = vpop.f32.mrf.mxu0
    %v1981 = vadd.f32 %v1916, %v1980
    %1982 = vmatmul.f32.gmra.mxu0 %v1803
    %v1983 = vpop.f32.mrf.mxu0
    %v1984 = vadd.f32 %v1919, %v1983
    %1985 = vmatmul.f32.gmra.mxu0 %v1804
    %v1986 = vpop.f32.mrf.mxu0
    %v1987 = vadd.f32 %v1922, %v1986
    %1988 = vmatmul.f32.gmra.mxu0 %v1805
    %v1989 = vpop.f32.mrf.mxu0
    %v1990 = vadd.f32 %v1925, %v1989
    %1991 = vmatmul.f32.gmra.mxu0 %v1806
    %v1992 = vpop.f32.mrf.mxu0
    %v1993 = vadd.f32 %v1928, %v1992
    %1994 = vmatmul.f32.gmra.mxu0 %v1807
    %v1995 = vpop.f32.mrf.mxu0
    %v1996 = vadd.f32 %v1931, %v1995
    %1997 = vmatmul.f32.gmra.mxu0 %v1808
    %v1998 = vpop.f32.mrf.mxu0
    %v1999 = vadd.f32 %v1934, %v1998
    %2000 = vmatmul.f32.gmra.mxu0 %v1809
    %v2001 = vpop.f32.mrf.mxu0
    %v2002 = vadd.f32 %v1937, %v2001
    %2003 = vdwg.mxu0
    %2004 = vmatpush.msra.mxu0 %v1729
    %2005 = vmatpush.msra.mxu0 %v1728
    %2006 = vmatpush.msra.mxu0 %v1727
    %2007 = vmatpush.msra.mxu0 %v1726
    %2008 = vmatpush.msra.mxu0 %v1725
    %2009 = vmatpush.msra.mxu0 %v1724
    %2010 = vmatpush.msra.mxu0 %v1723
    %2011 = vmatpush.msra.mxu0 %v1722
    %2012 = vmatpush.msra.mxu0 %v1721
    %2013 = vmatpush.msra.mxu0 %v1720
    %2014 = vmatpush.msra.mxu0 %v1719
    %2015 = vmatpush.msra.mxu0 %v1718
    %2016 = vmatpush.msra.mxu0 %v1717
    %2017 = vmatpush.msra.mxu0 %v1716
    %2018 = vmatpush.msra.mxu0 %v1715
    %2019 = vmatpush.msra.mxu0 %v1714
    %2020 = vmatmul.f32.gmra.mxu0 %v1826
    %v2021 = vpop.f32.mrf.mxu0
    %v2022 = vadd.f32 %v1957, %v2021
    %2023 = vmatmul.f32.gmra.mxu0 %v1827
    %v2024 = vpop.f32.mrf.mxu0
    %v2025 = vadd.f32 %v1960, %v2024
    %2026 = vmatmul.f32.gmra.mxu0 %v1828
    %v2027 = vpop.f32.mrf.mxu0
    %v2028 = vadd.f32 %v1963, %v2027
    %2029 = vmatmul.f32.gmra.mxu0 %v1829
    %v2030 = vpop.f32.mrf.mxu0
    %v2031 = vadd.f32 %v1966, %v2030
    %2032 = vmatmul.f32.gmra.mxu0 %v1830
    %v2033 = vpop.f32.mrf.mxu0
    %v2034 = vadd.f32 %v1969, %v2033
    %2035 = vmatmul.f32.gmra.mxu0 %v1831
    %v2036 = vpop.f32.mrf.mxu0
    %v2037 = vadd.f32 %v1972, %v2036
    %2038 = vmatmul.f32.gmra.mxu0 %v1832
    %v2039 = vpop.f32.mrf.mxu0
    %v2040 = vadd.f32 %v1975, %v2039
    %2041 = vmatmul.f32.gmra.mxu0 %v1833
    %v2042 = vpop.f32.mrf.mxu0
    %v2043 = vadd.f32 %v1978, %v2042
    %2044 = vmatmul.f32.gmra.mxu0 %v1834
    %v2045 = vpop.f32.mrf.mxu0
    %v2046 = vadd.f32 %v1981, %v2045
    %2047 = vmatmul.f32.gmra.mxu0 %v1835
    %v2048 = vpop.f32.mrf.mxu0
    %v2049 = vadd.f32 %v1984, %v2048
    %2050 = vmatmul.f32.gmra.mxu0 %v1836
    %v2051 = vpop.f32.mrf.mxu0
    %v2052 = vadd.f32 %v1987, %v2051
    %2053 = vmatmul.f32.gmra.mxu0 %v1837
    %v2054 = vpop.f32.mrf.mxu0
    %v2055 = vadd.f32 %v1990, %v2054
    %2056 = vmatmul.f32.gmra.mxu0 %v1838
    %v2057 = vpop.f32.mrf.mxu0
    %v2058 = vadd.f32 %v1993, %v2057
    %2059 = vmatmul.f32.gmra.mxu0 %v1839
    %v2060 = vpop.f32.mrf.mxu0
    %v2061 = vadd.f32 %v1996, %v2060
    %2062 = vmatmul.f32.gmra.mxu0 %v1840
    %v2063 = vpop.f32.mrf.mxu0
    %v2064 = vadd.f32 %v1999, %v2063
    %2065 = vmatmul.f32.gmra.mxu0 %v1841
    %v2066 = vpop.f32.mrf.mxu0
    %v2067 = vadd.f32 %v2002, %v2066
    %2068 = vdwg.mxu0
    %2069 = vmatpush.msra.mxu0 %v1745
    %2070 = vmatpush.msra.mxu0 %v1744
    %2071 = vmatpush.msra.mxu0 %v1743
    %2072 = vmatpush.msra.mxu0 %v1742
    %2073 = vmatpush.msra.mxu0 %v1741
    %2074 = vmatpush.msra.mxu0 %v1740
    %2075 = vmatpush.msra.mxu0 %v1739
    %2076 = vmatpush.msra.mxu0 %v1738
    %2077 = vmatpush.msra.mxu0 %v1737
    %2078 = vmatpush.msra.mxu0 %v1736
    %2079 = vmatpush.msra.mxu0 %v1735
    %2080 = vmatpush.msra.mxu0 %v1734
    %2081 = vmatpush.msra.mxu0 %v1733
    %2082 = vmatpush.msra.mxu0 %v1732
    %2083 = vmatpush.msra.mxu0 %v1731
    %2084 = vmatpush.msra.mxu0 %v1730
    %2085 = vmatmul.f32.gmra.mxu0 %v1858
    %v2086 = vpop.f32.mrf.mxu0
    %v2087 = vadd.f32 %v2022, %v2086
    %2088 = vmatmul.f32.gmra.mxu0 %v1859
    %v2089 = vpop.f32.mrf.mxu0
    %v2090 = vadd.f32 %v2025, %v2089
    %2091 = vmatmul.f32.gmra.mxu0 %v1860
    %v2092 = vpop.f32.mrf.mxu0
    %v2093 = vadd.f32 %v2028, %v2092
    %2094 = vmatmul.f32.gmra.mxu0 %v1861
    %v2095 = vpop.f32.mrf.mxu0
    %v2096 = vadd.f32 %v2031, %v2095
    %2097 = vmatmul.f32.gmra.mxu0 %v1862
    %v2098 = vpop.f32.mrf.mxu0
    %v2099 = vadd.f32 %v2034, %v2098
    %2100 = vmatmul.f32.gmra.mxu0 %v1863
    %v2101 = vpop.f32.mrf.mxu0
    %v2102 = vadd.f32 %v2037, %v2101
    %2103 = vmatmul.f32.gmra.mxu0 %v1864
    %v2104 = vpop.f32.mrf.mxu0
    %v2105 = vadd.f32 %v2040, %v2104
    %2106 = vmatmul.f32.gmra.mxu0 %v1865
    %v2107 = vpop.f32.mrf.mxu0
    %v2108 = vadd.f32 %v2043, %v2107
    %2109 = vmatmul.f32.gmra.mxu0 %v1866
    %v2110 = vpop.f32.mrf.mxu0
    %v2111 = vadd.f32 %v2046, %v2110
    %2112 = vmatmul.f32.gmra.mxu0 %v1867
    %v2113 = vpop.f32.mrf.mxu0
    %v2114 = vadd.f32 %v2049, %v2113
    %2115 = vmatmul.f32.gmra.mxu0 %v1868
    %v2116 = vpop.f32.mrf.mxu0
    %v2117 = vadd.f32 %v2052, %v2116
    %2118 = vmatmul.f32.gmra.mxu0 %v1869
    %v2119 = vpop.f32.mrf.mxu0
    %v2120 = vadd.f32 %v2055, %v2119
    %2121 = vmatmul.f32.gmra.mxu0 %v1870
    %v2122 = vpop.f32.mrf.mxu0
    %v2123 = vadd.f32 %v2058, %v2122
    %2124 = vmatmul.f32.gmra.mxu0 %v1871
    %v2125 = vpop.f32.mrf.mxu0
    %v2126 = vadd.f32 %v2061, %v2125
    %2127 = vmatmul.f32.gmra.mxu0 %v1872
    %v2128 = vpop.f32.mrf.mxu0
    %v2129 = vadd.f32 %v2064, %v2128
    %2130 = vmatmul.f32.gmra.mxu0 %v1873
    %v2131 = vpop.f32.mrf.mxu0
    %v2132 = vadd.f32 %v2067, %v2131
    %2133 = vdwg.mxu0
    %2134 = vmatpush.msra.mxu0 %v1633
    %2135 = vmatpush.msra.mxu0 %v1632
    %2136 = vmatpush.msra.mxu0 %v1631
    %2137 = vmatpush.msra.mxu0 %v1630
    %2138 = vmatpush.msra.mxu0 %v1629
    %2139 = vmatpush.msra.mxu0 %v1628
    %2140 = vmatpush.msra.mxu0 %v1627
    %2141 = vmatpush.msra.mxu0 %v1626
    %2142 = vmatpush.msra.mxu0 %v1625
    %2143 = vmatpush.msra.mxu0 %v1624
    %2144 = vmatpush.msra.mxu0 %v1623
    %2145 = vmatpush.msra.mxu0 %v1622
    %2146 = vmatpush.msra.mxu0 %v1621
    %2147 = vmatpush.msra.mxu0 %v1620
    %2148 = vmatpush.msra.mxu0 %v1619
    %2149 = vmatpush.msra.mxu0 %v1618
    %2150 = vmatmul.f32.gmra.mxu0 %v1762
    %v2151 = vpop.f32.mrf.mxu0
    %v2152 = vadd.f32 %v2087, %v2151
    %2153 = vmatmul.f32.gmra.mxu0 %v1763
    %v2154 = vpop.f32.mrf.mxu0
    %v2155 = vadd.f32 %v2090, %v2154
    %2156 = vmatmul.f32.gmra.mxu0 %v1764
    %v2157 = vpop.f32.mrf.mxu0
    %v2158 = vadd.f32 %v2093, %v2157
    %2159 = vmatmul.f32.gmra.mxu0 %v1765
    %v2160 = vpop.f32.mrf.mxu0
    %v2161 = vadd.f32 %v2096, %v2160
    %2162 = vmatmul.f32.gmra.mxu0 %v1766
    %v2163 = vpop.f32.mrf.mxu0
    %v2164 = vadd.f32 %v2099, %v2163
    %2165 = vmatmul.f32.gmra.mxu0 %v1767
    %v2166 = vpop.f32.mrf.mxu0
    %v2167 = vadd.f32 %v2102, %v2166
    %2168 = vmatmul.f32.gmra.mxu0 %v1768
    %v2169 = vpop.f32.mrf.mxu0
    %v2170 = vadd.f32 %v2105, %v2169
    %2171 = vmatmul.f32.gmra.mxu0 %v1769
    %v2172 = vpop.f32.mrf.mxu0
    %v2173 = vadd.f32 %v2108, %v2172
    %2174 = vmatmul.f32.gmra.mxu0 %v1770
    %v2175 = vpop.f32.mrf.mxu0
    %v2176 = vadd.f32 %v2111, %v2175
    %2177 = vmatmul.f32.gmra.mxu0 %v1771
    %v2178 = vpop.f32.mrf.mxu0
    %v2179 = vadd.f32 %v2114, %v2178
    %2180 = vmatmul.f32.gmra.mxu0 %v1772
    %v2181 = vpop.f32.mrf.mxu0
    %v2182 = vadd.f32 %v2117, %v2181
    %2183 = vmatmul.f32.gmra.mxu0 %v1773
    %v2184 = vpop.f32.mrf.mxu0
    %v2185 = vadd.f32 %v2120, %v2184
    %2186 = vmatmul.f32.gmra.mxu0 %v1774
    %v2187 = vpop.f32.mrf.mxu0
    %v2188 = vadd.f32 %v2123, %v2187
    %2189 = vmatmul.f32.gmra.mxu0 %v1775
    %v2190 = vpop.f32.mrf.mxu0
    %v2191 = vadd.f32 %v2126, %v2190
    %2192 = vmatmul.f32.gmra.mxu0 %v1776
    %v2193 = vpop.f32.mrf.mxu0
    %v2194 = vadd.f32 %v2129, %v2193
    %2195 = vmatmul.f32.gmra.mxu0 %v1777
    %v2196 = vpop.f32.mrf.mxu0
    %v2197 = vadd.f32 %v2132, %v2196
    %2198 = vdwg.mxu0
    %2199 = vmatpush.msra.mxu0 %v1649
    %2200 = vmatpush.msra.mxu0 %v1648
    %2201 = vmatpush.msra.mxu0 %v1647
    %2202 = vmatpush.msra.mxu0 %v1646
    %2203 = vmatpush.msra.mxu0 %v1645
    %2204 = vmatpush.msra.mxu0 %v1644
    %2205 = vmatpush.msra.mxu0 %v1643
    %2206 = vmatpush.msra.mxu0 %v1642
    %2207 = vmatpush.msra.mxu0 %v1641
    %2208 = vmatpush.msra.mxu0 %v1640
    %2209 = vmatpush.msra.mxu0 %v1639
    %2210 = vmatpush.msra.mxu0 %v1638
    %2211 = vmatpush.msra.mxu0 %v1637
    %2212 = vmatpush.msra.mxu0 %v1636
    %2213 = vmatpush.msra.mxu0 %v1635
    %2214 = vmatpush.msra.mxu0 %v1634
    %2215 = vmatmul.f32.gmra.mxu0 %v1794
    %v2216 = vpop.f32.mrf.mxu0
    %v2217 = vadd.f32 %v2152, %v2216
    %2218 = vmatmul.f32.gmra.mxu0 %v1795
    %v2219 = vpop.f32.mrf.mxu0
    %v2220 = vadd.f32 %v2155, %v2219
    %2221 = vmatmul.f32.gmra.mxu0 %v1796
    %v2222 = vpop.f32.mrf.mxu0
    %v2223 = vadd.f32 %v2158, %v2222
    %2224 = vmatmul.f32.gmra.mxu0 %v1797
    %v2225 = vpop.f32.mrf.mxu0
    %v2226 = vadd.f32 %v2161, %v2225
    %2227 = vmatmul.f32.gmra.mxu0 %v1798
    %v2228 = vpop.f32.mrf.mxu0
    %v2229 = vadd.f32 %v2164, %v2228
    %2230 = vmatmul.f32.gmra.mxu0 %v1799
    %v2231 = vpop.f32.mrf.mxu0
    %v2232 = vadd.f32 %v2167, %v2231
    %2233 = vmatmul.f32.gmra.mxu0 %v1800
    %v2234 = vpop.f32.mrf.mxu0
    %v2235 = vadd.f32 %v2170, %v2234
    %2236 = vmatmul.f32.gmra.mxu0 %v1801
    %v2237 = vpop.f32.mrf.mxu0
    %v2238 = vadd.f32 %v2173, %v2237
    %2239 = vmatmul.f32.gmra.mxu0 %v1802
    %v2240 = vpop.f32.mrf.mxu0
    %v2241 = vadd.f32 %v2176, %v2240
    %2242 = vmatmul.f32.gmra.mxu0 %v1803
    %v2243 = vpop.f32.mrf.mxu0
    %v2244 = vadd.f32 %v2179, %v2243
    %2245 = vmatmul.f32.gmra.mxu0 %v1804
    %v2246 = vpop.f32.mrf.mxu0
    %v2247 = vadd.f32 %v2182, %v2246
    %2248 = vmatmul.f32.gmra.mxu0 %v1805
    %v2249 = vpop.f32.mrf.mxu0
    %v2250 = vadd.f32 %v2185, %v2249
    %2251 = vmatmul.f32.gmra.mxu0 %v1806
    %v2252 = vpop.f32.mrf.mxu0
    %v2253 = vadd.f32 %v2188, %v2252
    %2254 = vmatmul.f32.gmra.mxu0 %v1807
    %v2255 = vpop.f32.mrf.mxu0
    %v2256 = vadd.f32 %v2191, %v2255
    %2257 = vmatmul.f32.gmra.mxu0 %v1808
    %v2258 = vpop.f32.mrf.mxu0
    %v2259 = vadd.f32 %v2194, %v2258
    %2260 = vmatmul.f32.gmra.mxu0 %v1809
    %v2261 = vpop.f32.mrf.mxu0
    %v2262 = vadd.f32 %v2197, %v2261
    %2263 = vdwg.mxu0
    %2264 = vmatpush.msra.mxu0 %v1665
    %2265 = vmatpush.msra.mxu0 %v1664
    %2266 = vmatpush.msra.mxu0 %v1663
    %2267 = vmatpush.msra.mxu0 %v1662
    %2268 = vmatpush.msra.mxu0 %v1661
    %2269 = vmatpush.msra.mxu0 %v1660
    %2270 = vmatpush.msra.mxu0 %v1659
    %2271 = vmatpush.msra.mxu0 %v1658
    %2272 = vmatpush.msra.mxu0 %v1657
    %2273 = vmatpush.msra.mxu0 %v1656
    %2274 = vmatpush.msra.mxu0 %v1655
    %2275 = vmatpush.msra.mxu0 %v1654
    %2276 = vmatpush.msra.mxu0 %v1653
    %2277 = vmatpush.msra.mxu0 %v1652
    %2278 = vmatpush.msra.mxu0 %v1651
    %2279 = vmatpush.msra.mxu0 %v1650
    %2280 = vmatmul.f32.gmra.mxu0 %v1826
    %v2281 = vpop.f32.mrf.mxu0
    %v2282 = vadd.f32 %v2217, %v2281
    %2283 = vmatmul.f32.gmra.mxu0 %v1827
    %v2284 = vpop.f32.mrf.mxu0
    %v2285 = vadd.f32 %v2220, %v2284
    %2286 = vmatmul.f32.gmra.mxu0 %v1828
    %v2287 = vpop.f32.mrf.mxu0
    %v2288 = vadd.f32 %v2223, %v2287
    %2289 = vmatmul.f32.gmra.mxu0 %v1829
    %v2290 = vpop.f32.mrf.mxu0
    %v2291 = vadd.f32 %v2226, %v2290
    %2292 = vmatmul.f32.gmra.mxu0 %v1830
    %v2293 = vpop.f32.mrf.mxu0
    %v2294 = vadd.f32 %v2229, %v2293
    %2295 = vmatmul.f32.gmra.mxu0 %v1831
    %v2296 = vpop.f32.mrf.mxu0
    %v2297 = vadd.f32 %v2232, %v2296
    %2298 = vmatmul.f32.gmra.mxu0 %v1832
    %v2299 = vpop.f32.mrf.mxu0
    %v2300 = vadd.f32 %v2235, %v2299
    %2301 = vmatmul.f32.gmra.mxu0 %v1833
    %v2302 = vpop.f32.mrf.mxu0
    %v2303 = vadd.f32 %v2238, %v2302
    %2304 = vmatmul.f32.gmra.mxu0 %v1834
    %v2305 = vpop.f32.mrf.mxu0
    %v2306 = vadd.f32 %v2241, %v2305
    %2307 = vmatmul.f32.gmra.mxu0 %v1835
    %v2308 = vpop.f32.mrf.mxu0
    %v2309 = vadd.f32 %v2244, %v2308
    %2310 = vmatmul.f32.gmra.mxu0 %v1836
    %v2311 = vpop.f32.mrf.mxu0
    %v2312 = vadd.f32 %v2247, %v2311
    %2313 = vmatmul.f32.gmra.mxu0 %v1837
    %v2314 = vpop.f32.mrf.mxu0
    %v2315 = vadd.f32 %v2250, %v2314
    %2316 = vmatmul.f32.gmra.mxu0 %v1838
    %v2317 = vpop.f32.mrf.mxu0
    %v2318 = vadd.f32 %v2253, %v2317
    %2319 = vmatmul.f32.gmra.mxu0 %v1839
    %v2320 = vpop.f32.mrf.mxu0
    %v2321 = vadd.f32 %v2256, %v2320
    %2322 = vmatmul.f32.gmra.mxu0 %v1840
    %v2323 = vpop.f32.mrf.mxu0
    %v2324 = vadd.f32 %v2259, %v2323
    %2325 = vmatmul.f32.gmra.mxu0 %v1841
    %v2326 = vpop.f32.mrf.mxu0
    %v2327 = vadd.f32 %v2262, %v2326
    %2328 = vdwg.mxu0
    %2329 = vmatpush.msra.mxu0 %v1681
    %2330 = vmatpush.msra.mxu0 %v1680
    %2331 = vmatpush.msra.mxu0 %v1679
    %2332 = vmatpush.msra.mxu0 %v1678
    %2333 = vmatpush.msra.mxu0 %v1677
    %2334 = vmatpush.msra.mxu0 %v1676
    %2335 = vmatpush.msra.mxu0 %v1675
    %2336 = vmatpush.msra.mxu0 %v1674
    %2337 = vmatpush.msra.mxu0 %v1673
    %2338 = vmatpush.msra.mxu0 %v1672
    %2339 = vmatpush.msra.mxu0 %v1671
    %2340 = vmatpush.msra.mxu0 %v1670
    %2341 = vmatpush.msra.mxu0 %v1669
    %2342 = vmatpush.msra.mxu0 %v1668
    %2343 = vmatpush.msra.mxu0 %v1667
    %2344 = vmatpush.msra.mxu0 %v1666
    %2345 = vmatmul.f32.gmra.mxu0 %v1858
    %v2346 = vpop.f32.mrf.mxu0
    %v2347 = vadd.f32 %v2282, %v2346
    %2348 = vmatmul.f32.gmra.mxu0 %v1859
    %v2349 = vpop.f32.mrf.mxu0
    %v2350 = vadd.f32 %v2285, %v2349
    %2351 = vmatmul.f32.gmra.mxu0 %v1860
    %v2352 = vpop.f32.mrf.mxu0
    %v2353 = vadd.f32 %v2288, %v2352
    %2354 = vmatmul.f32.gmra.mxu0 %v1861
    %v2355 = vpop.f32.mrf.mxu0
    %v2356 = vadd.f32 %v2291, %v2355
    %2357 = vmatmul.f32.gmra.mxu0 %v1862
    %v2358 = vpop.f32.mrf.mxu0
    %v2359 = vadd.f32 %v2294, %v2358
    %2360 = vmatmul.f32.gmra.mxu0 %v1863
    %v2361 = vpop.f32.mrf.mxu0
    %v2362 = vadd.f32 %v2297, %v2361
    %2363 = vmatmul.f32.gmra.mxu0 %v1864
    %v2364 = vpop.f32.mrf.mxu0
    %v2365 = vadd.f32 %v2300, %v2364
    %2366 = vmatmul.f32.gmra.mxu0 %v1865
    %v2367 = vpop.f32.mrf.mxu0
    %v2368 = vadd.f32 %v2303, %v2367
    %2369 = vmatmul.f32.gmra.mxu0 %v1866
    %v2370 = vpop.f32.mrf.mxu0
    %v2371 = vadd.f32 %v2306, %v2370
    %2372 = vmatmul.f32.gmra.mxu0 %v1867
    %v2373 = vpop.f32.mrf.mxu0
    %v2374 = vadd.f32 %v2309, %v2373
    %2375 = vmatmul.f32.gmra.mxu0 %v1868
    %v2376 = vpop.f32.mrf.mxu0
    %v2377 = vadd.f32 %v2312, %v2376
    %2378 = vmatmul.f32.gmra.mxu0 %v1869
    %v2379 = vpop.f32.mrf.mxu0
    %v2380 = vadd.f32 %v2315, %v2379
    %2381 = vmatmul.f32.gmra.mxu0 %v1870
    %v2382 = vpop.f32.mrf.mxu0
    %v2383 = vadd.f32 %v2318, %v2382
    %2384 = vmatmul.f32.gmra.mxu0 %v1871
    %v2385 = vpop.f32.mrf.mxu0
    %v2386 = vadd.f32 %v2321, %v2385
    %2387 = vmatmul.f32.gmra.mxu0 %v1872
    %v2388 = vpop.f32.mrf.mxu0
    %v2389 = vadd.f32 %v2324, %v2388
    %2390 = vmatmul.f32.gmra.mxu0 %v1873
    %v2391 = vpop.f32.mrf.mxu0
    %v2392 = vadd.f32 %v2327, %v2391
    %2393 = vdwg.mxu0
    %2394 = vxpose.xlu0.b32.start [1/16] %v1682, 128
    %2395 = vxpose.xlu0.b32.cont [2/16] %v1683, 128
    %2396 = vxpose.xlu0.b32.cont [3/16] %v1684, 128
    %2397 = vxpose.xlu0.b32.cont [4/16] %v1685, 128
    %2398 = vxpose.xlu0.b32.cont [5/16] %v1686, 128
    %2399 = vxpose.xlu0.b32.cont [6/16] %v1687, 128
    %2400 = vxpose.xlu0.b32.cont [7/16] %v1688, 128
    %2401 = vxpose.xlu0.b32.cont [8/16] %v1689, 128
    %2402 = vxpose.xlu0.b32.cont [9/16] %v1690, 128
    %2403 = vxpose.xlu0.b32.cont [10/16] %v1691, 128
    %2404 = vxpose.xlu0.b32.cont [11/16] %v1692, 128
    %2405 = vxpose.xlu0.b32.cont [12/16] %v1693, 128
    %2406 = vxpose.xlu0.b32.cont [13/16] %v1694, 128
    %2407 = vxpose.xlu0.b32.cont [14/16] %v1695, 128
    %2408 = vxpose.xlu0.b32.cont [15/16] %v1696, 128
    %2409 = vxpose.xlu0.b32.end [16/16] %v1697, 128
    %v2410 = vpop.trf.xlu0
    %v2411 = vpop.trf.xlu0
    %v2412 = vpop.trf.xlu0
    %v2413 = vpop.trf.xlu0
    %v2414 = vpop.trf.xlu0
    %v2415 = vpop.trf.xlu0
    %v2416 = vpop.trf.xlu0
    %v2417 = vpop.trf.xlu0
    %v2418 = vpop.trf.xlu0
    %v2419 = vpop.trf.xlu0
    %v2420 = vpop.trf.xlu0
    %v2421 = vpop.trf.xlu0
    %v2422 = vpop.trf.xlu0
    %v2423 = vpop.trf.xlu0
    %v2424 = vpop.trf.xlu0
    %v2425 = vpop.trf.xlu0
    %2426 = vxpose.xlu0.b32.start [1/16] %v1698, 128
    %2427 = vxpose.xlu0.b32.cont [2/16] %v1699, 128
    %2428 = vxpose.xlu0.b32.cont [3/16] %v1700, 128
    %2429 = vxpose.xlu0.b32.cont [4/16] %v1701, 128
    %2430 = vxpose.xlu0.b32.cont [5/16] %v1702, 128
    %2431 = vxpose.xlu0.b32.cont [6/16] %v1703, 128
    %2432 = vxpose.xlu0.b32.cont [7/16] %v1704, 128
    %2433 = vxpose.xlu0.b32.cont [8/16] %v1705, 128
    %2434 = vxpose.xlu0.b32.cont [9/16] %v1706, 128
    %2435 = vxpose.xlu0.b32.cont [10/16] %v1707, 128
    %2436 = vxpose.xlu0.b32.cont [11/16] %v1708, 128
    %2437 = vxpose.xlu0.b32.cont [12/16] %v1709, 128
    %2438 = vxpose.xlu0.b32.cont [13/16] %v1710, 128
    %2439 = vxpose.xlu0.b32.cont [14/16] %v1711, 128
    %2440 = vxpose.xlu0.b32.cont [15/16] %v1712, 128
    %2441 = vxpose.xlu0.b32.end [16/16] %v1713, 128
    %v2442 = vpop.trf.xlu0
    %v2443 = vpop.trf.xlu0
    %v2444 = vpop.trf.xlu0
    %v2445 = vpop.trf.xlu0
    %v2446 = vpop.trf.xlu0
    %v2447 = vpop.trf.xlu0
    %v2448 = vpop.trf.xlu0
    %v2449 = vpop.trf.xlu0
    %v2450 = vpop.trf.xlu0
    %v2451 = vpop.trf.xlu0
    %v2452 = vpop.trf.xlu0
    %v2453 = vpop.trf.xlu0
    %v2454 = vpop.trf.xlu0
    %v2455 = vpop.trf.xlu0
    %v2456 = vpop.trf.xlu0
    %v2457 = vpop.trf.xlu0
    %2458 = vxpose.xlu0.b32.start [1/16] %v1714, 128
    %2459 = vxpose.xlu0.b32.cont [2/16] %v1715, 128
    %2460 = vxpose.xlu0.b32.cont [3/16] %v1716, 128
    %2461 = vxpose.xlu0.b32.cont [4/16] %v1717, 128
    %2462 = vxpose.xlu0.b32.cont [5/16] %v1718, 128
    %2463 = vxpose.xlu0.b32.cont [6/16] %v1719, 128
    %2464 = vxpose.xlu0.b32.cont [7/16] %v1720, 128
    %2465 = vxpose.xlu0.b32.cont [8/16] %v1721, 128
    %2466 = vxpose.xlu0.b32.cont [9/16] %v1722, 128
    %2467 = vxpose.xlu0.b32.cont [10/16] %v1723, 128
    %2468 = vxpose.xlu0.b32.cont [11/16] %v1724, 128
    %2469 = vxpose.xlu0.b32.cont [12/16] %v1725, 128
    %2470 = vxpose.xlu0.b32.cont [13/16] %v1726, 128
    %2471 = vxpose.xlu0.b32.cont [14/16] %v1727, 128
    %2472 = vxpose.xlu0.b32.cont [15/16] %v1728, 128
    %2473 = vxpose.xlu0.b32.end [16/16] %v1729, 128
    %v2474 = vpop.trf.xlu0
    %v2475 = vpop.trf.xlu0
    %v2476 = vpop.trf.xlu0
    %v2477 = vpop.trf.xlu0
    %v2478 = vpop.trf.xlu0
    %v2479 = vpop.trf.xlu0
    %v2480 = vpop.trf.xlu0
    %v2481 = vpop.trf.xlu0
    %v2482 = vpop.trf.xlu0
    %v2483 = vpop.trf.xlu0
    %v2484 = vpop.trf.xlu0
    %v2485 = vpop.trf.xlu0
    %v2486 = vpop.trf.xlu0
    %v2487 = vpop.trf.xlu0
    %v2488 = vpop.trf.xlu0
    %v2489 = vpop.trf.xlu0
    %2490 = vxpose.xlu0.b32.start [1/16] %v1730, 128
    %2491 = vxpose.xlu0.b32.cont [2/16] %v1731, 128
    %2492 = vxpose.xlu0.b32.cont [3/16] %v1732, 128
    %2493 = vxpose.xlu0.b32.cont [4/16] %v1733, 128
    %2494 = vxpose.xlu0.b32.cont [5/16] %v1734, 128
    %2495 = vxpose.xlu0.b32.cont [6/16] %v1735, 128
    %2496 = vxpose.xlu0.b32.cont [7/16] %v1736, 128
    %2497 = vxpose.xlu0.b32.cont [8/16] %v1737, 128
    %2498 = vxpose.xlu0.b32.cont [9/16] %v1738, 128
    %2499 = vxpose.xlu0.b32.cont [10/16] %v1739, 128
    %2500 = vxpose.xlu0.b32.cont [11/16] %v1740, 128
    %2501 = vxpose.xlu0.b32.cont [12/16] %v1741, 128
    %2502 = vxpose.xlu0.b32.cont [13/16] %v1742, 128
    %2503 = vxpose.xlu0.b32.cont [14/16] %v1743, 128
    %2504 = vxpose.xlu0.b32.cont [15/16] %v1744, 128
    %2505 = vxpose.xlu0.b32.end [16/16] %v1745, 128
    %v2506 = vpop.trf.xlu0
    %v2507 = vpop.trf.xlu0
    %v2508 = vpop.trf.xlu0
    %v2509 = vpop.trf.xlu0
    %v2510 = vpop.trf.xlu0
    %v2511 = vpop.trf.xlu0
    %v2512 = vpop.trf.xlu0
    %v2513 = vpop.trf.xlu0
    %v2514 = vpop.trf.xlu0
    %v2515 = vpop.trf.xlu0
    %v2516 = vpop.trf.xlu0
    %v2517 = vpop.trf.xlu0
    %v2518 = vpop.trf.xlu0
    %v2519 = vpop.trf.xlu0
    %v2520 = vpop.trf.xlu0
    %v2521 = vpop.trf.xlu0
    %2522 = vmatpush.msra.mxu0 %v1633
    %2523 = vmatpush.msra.mxu0 %v1632
    %2524 = vmatpush.msra.mxu0 %v1631
    %2525 = vmatpush.msra.mxu0 %v1630
    %2526 = vmatpush.msra.mxu0 %v1629
    %2527 = vmatpush.msra.mxu0 %v1628
    %2528 = vmatpush.msra.mxu0 %v1627
    %2529 = vmatpush.msra.mxu0 %v1626
    %2530 = vmatpush.msra.mxu0 %v1625
    %2531 = vmatpush.msra.mxu0 %v1624
    %2532 = vmatpush.msra.mxu0 %v1623
    %2533 = vmatpush.msra.mxu0 %v1622
    %2534 = vmatpush.msra.mxu0 %v1621
    %2535 = vmatpush.msra.mxu0 %v1620
    %2536 = vmatpush.msra.mxu0 %v1619
    %2537 = vmatpush.msra.mxu0 %v1618
    %2538 = vmatmul.f32.gmra.mxu0 %v2410
    %v2539 = vpop.f32.mrf.mxu0
    %v2540 = vadd.f32 0.0, %v2539
    %2541 = vmatmul.f32.gmra.mxu0 %v2411
    %v2542 = vpop.f32.mrf.mxu0
    %v2543 = vadd.f32 0.0, %v2542
    %2544 = vmatmul.f32.gmra.mxu0 %v2412
    %v2545 = vpop.f32.mrf.mxu0
    %v2546 = vadd.f32 0.0, %v2545
    %2547 = vmatmul.f32.gmra.mxu0 %v2413
    %v2548 = vpop.f32.mrf.mxu0
    %v2549 = vadd.f32 0.0, %v2548
    %2550 = vmatmul.f32.gmra.mxu0 %v2414
    %v2551 = vpop.f32.mrf.mxu0
    %v2552 = vadd.f32 0.0, %v2551
    %2553 = vmatmul.f32.gmra.mxu0 %v2415
    %v2554 = vpop.f32.mrf.mxu0
    %v2555 = vadd.f32 0.0, %v2554
    %2556 = vmatmul.f32.gmra.mxu0 %v2416
    %v2557 = vpop.f32.mrf.mxu0
    %v2558 = vadd.f32 0.0, %v2557
    %2559 = vmatmul.f32.gmra.mxu0 %v2417
    %v2560 = vpop.f32.mrf.mxu0
    %v2561 = vadd.f32 0.0, %v2560
    %2562 = vmatmul.f32.gmra.mxu0 %v2418
    %v2563 = vpop.f32.mrf.mxu0
    %v2564 = vadd.f32 0.0, %v2563
    %2565 = vmatmul.f32.gmra.mxu0 %v2419
    %v2566 = vpop.f32.mrf.mxu0
    %v2567 = vadd.f32 0.0, %v2566
    %2568 = vmatmul.f32.gmra.mxu0 %v2420
    %v2569 = vpop.f32.mrf.mxu0
    %v2570 = vadd.f32 0.0, %v2569
    %2571 = vmatmul.f32.gmra.mxu0 %v2421
    %v2572 = vpop.f32.mrf.mxu0
    %v2573 = vadd.f32 0.0, %v2572
    %2574 = vmatmul.f32.gmra.mxu0 %v2422
    %v2575 = vpop.f32.mrf.mxu0
    %v2576 = vadd.f32 0.0, %v2575
    %2577 = vmatmul.f32.gmra.mxu0 %v2423
    %v2578 = vpop.f32.mrf.mxu0
    %v2579 = vadd.f32 0.0, %v2578
    %2580 = vmatmul.f32.gmra.mxu0 %v2424
    %v2581 = vpop.f32.mrf.mxu0
    %v2582 = vadd.f32 0.0, %v2581
    %2583 = vmatmul.f32.gmra.mxu0 %v2425
    %v2584 = vpop.f32.mrf.mxu0
    %v2585 = vadd.f32 0.0, %v2584
    %2586 = vdwg.mxu0
    %2587 = vmatpush.msra.mxu0 %v1649
    %2588 = vmatpush.msra.mxu0 %v1648
    %2589 = vmatpush.msra.mxu0 %v1647
    %2590 = vmatpush.msra.mxu0 %v1646
    %2591 = vmatpush.msra.mxu0 %v1645
    %2592 = vmatpush.msra.mxu0 %v1644
    %2593 = vmatpush.msra.mxu0 %v1643
    %2594 = vmatpush.msra.mxu0 %v1642
    %2595 = vmatpush.msra.mxu0 %v1641
    %2596 = vmatpush.msra.mxu0 %v1640
    %2597 = vmatpush.msra.mxu0 %v1639
    %2598 = vmatpush.msra.mxu0 %v1638
    %2599 = vmatpush.msra.mxu0 %v1637
    %2600 = vmatpush.msra.mxu0 %v1636
    %2601 = vmatpush.msra.mxu0 %v1635
    %2602 = vmatpush.msra.mxu0 %v1634
    %2603 = vmatmul.f32.gmra.mxu0 %v2442
    %v2604 = vpop.f32.mrf.mxu0
    %v2605 = vadd.f32 %v2540, %v2604
    %2606 = vmatmul.f32.gmra.mxu0 %v2443
    %v2607 = vpop.f32.mrf.mxu0
    %v2608 = vadd.f32 %v2543, %v2607
    %2609 = vmatmul.f32.gmra.mxu0 %v2444
    %v2610 = vpop.f32.mrf.mxu0
    %v2611 = vadd.f32 %v2546, %v2610
    %2612 = vmatmul.f32.gmra.mxu0 %v2445
    %v2613 = vpop.f32.mrf.mxu0
    %v2614 = vadd.f32 %v2549, %v2613
    %2615 = vmatmul.f32.gmra.mxu0 %v2446
    %v2616 = vpop.f32.mrf.mxu0
    %v2617 = vadd.f32 %v2552, %v2616
    %2618 = vmatmul.f32.gmra.mxu0 %v2447
    %v2619 = vpop.f32.mrf.mxu0
    %v2620 = vadd.f32 %v2555, %v2619
    %2621 = vmatmul.f32.gmra.mxu0 %v2448
    %v2622 = vpop.f32.mrf.mxu0
    %v2623 = vadd.f32 %v2558, %v2622
    %2624 = vmatmul.f32.gmra.mxu0 %v2449
    %v2625 = vpop.f32.mrf.mxu0
    %v2626 = vadd.f32 %v2561, %v2625
    %2627 = vmatmul.f32.gmra.mxu0 %v2450
    %v2628 = vpop.f32.mrf.mxu0
    %v2629 = vadd.f32 %v2564, %v2628
    %2630 = vmatmul.f32.gmra.mxu0 %v2451
    %v2631 = vpop.f32.mrf.mxu0
    %v2632 = vadd.f32 %v2567, %v2631
    %2633 = vmatmul.f32.gmra.mxu0 %v2452
    %v2634 = vpop.f32.mrf.mxu0
    %v2635 = vadd.f32 %v2570, %v2634
    %2636 = vmatmul.f32.gmra.mxu0 %v2453
    %v2637 = vpop.f32.mrf.mxu0
    %v2638 = vadd.f32 %v2573, %v2637
    %2639 = vmatmul.f32.gmra.mxu0 %v2454
    %v2640 = vpop.f32.mrf.mxu0
    %v2641 = vadd.f32 %v2576, %v2640
    %2642 = vmatmul.f32.gmra.mxu0 %v2455
    %v2643 = vpop.f32.mrf.mxu0
    %v2644 = vadd.f32 %v2579, %v2643
    %2645 = vmatmul.f32.gmra.mxu0 %v2456
    %v2646 = vpop.f32.mrf.mxu0
    %v2647 = vadd.f32 %v2582, %v2646
    %2648 = vmatmul.f32.gmra.mxu0 %v2457
    %v2649 = vpop.f32.mrf.mxu0
    %v2650 = vadd.f32 %v2585, %v2649
    %2651 = vdwg.mxu0
    %2652 = vmatpush.msra.mxu0 %v1665
    %2653 = vmatpush.msra.mxu0 %v1664
    %2654 = vmatpush.msra.mxu0 %v1663
    %2655 = vmatpush.msra.mxu0 %v1662
    %2656 = vmatpush.msra.mxu0 %v1661
    %2657 = vmatpush.msra.mxu0 %v1660
    %2658 = vmatpush.msra.mxu0 %v1659
    %2659 = vmatpush.msra.mxu0 %v1658
    %2660 = vmatpush.msra.mxu0 %v1657
    %2661 = vmatpush.msra.mxu0 %v1656
    %2662 = vmatpush.msra.mxu0 %v1655
    %2663 = vmatpush.msra.mxu0 %v1654
    %2664 = vmatpush.msra.mxu0 %v1653
    %2665 = vmatpush.msra.mxu0 %v1652
    %2666 = vmatpush.msra.mxu0 %v1651
    %2667 = vmatpush.msra.mxu0 %v1650
    %2668 = vmatmul.f32.gmra.mxu0 %v2474
    %v2669 = vpop.f32.mrf.mxu0
    %v2670 = vadd.f32 %v2605, %v2669
    %2671 = vmatmul.f32.gmra.mxu0 %v2475
    %v2672 = vpop.f32.mrf.mxu0
    %v2673 = vadd.f32 %v2608, %v2672
    %2674 = vmatmul.f32.gmra.mxu0 %v2476
    %v2675 = vpop.f32.mrf.mxu0
    %v2676 = vadd.f32 %v2611, %v2675
    %2677 = vmatmul.f32.gmra.mxu0 %v2477
    %v2678 = vpop.f32.mrf.mxu0
    %v2679 = vadd.f32 %v2614, %v2678
    %2680 = vmatmul.f32.gmra.mxu0 %v2478
    %v2681 = vpop.f32.mrf.mxu0
    %v2682 = vadd.f32 %v2617, %v2681
    %2683 = vmatmul.f32.gmra.mxu0 %v2479
    %v2684 = vpop.f32.mrf.mxu0
    %v2685 = vadd.f32 %v2620, %v2684
    %2686 = vmatmul.f32.gmra.mxu0 %v2480
    %v2687 = vpop.f32.mrf.mxu0
    %v2688 = vadd.f32 %v2623, %v2687
    %2689 = vmatmul.f32.gmra.mxu0 %v2481
    %v2690 = vpop.f32.mrf.mxu0
    %v2691 = vadd.f32 %v2626, %v2690
    %2692 = vmatmul.f32.gmra.mxu0 %v2482
    %v2693 = vpop.f32.mrf.mxu0
    %v2694 = vadd.f32 %v2629, %v2693
    %2695 = vmatmul.f32.gmra.mxu0 %v2483
    %v2696 = vpop.f32.mrf.mxu0
    %v2697 = vadd.f32 %v2632, %v2696
    %2698 = vmatmul.f32.gmra.mxu0 %v2484
    %v2699 = vpop.f32.mrf.mxu0
    %v2700 = vadd.f32 %v2635, %v2699
    %2701 = vmatmul.f32.gmra.mxu0 %v2485
    %v2702 = vpop.f32.mrf.mxu0
    %v2703 = vadd.f32 %v2638, %v2702
    %2704 = vmatmul.f32.gmra.mxu0 %v2486
    %v2705 = vpop.f32.mrf.mxu0
    %v2706 = vadd.f32 %v2641, %v2705
    %2707 = vmatmul.f32.gmra.mxu0 %v2487
    %v2708 = vpop.f32.mrf.mxu0
    %v2709 = vadd.f32 %v2644, %v2708
    %2710 = vmatmul.f32.gmra.mxu0 %v2488
    %v2711 = vpop.f32.mrf.mxu0
    %v2712 = vadd.f32 %v2647, %v2711
    %2713 = vmatmul.f32.gmra.mxu0 %v2489
    %v2714 = vpop.f32.mrf.mxu0
    %v2715 = vadd.f32 %v2650, %v2714
    %2716 = vdwg.mxu0
    %2717 = vmatpush.msra.mxu0 %v1681
    %2718 = vmatpush.msra.mxu0 %v1680
    %2719 = vmatpush.msra.mxu0 %v1679
    %2720 = vmatpush.msra.mxu0 %v1678
    %2721 = vmatpush.msra.mxu0 %v1677
    %2722 = vmatpush.msra.mxu0 %v1676
    %2723 = vmatpush.msra.mxu0 %v1675
    %2724 = vmatpush.msra.mxu0 %v1674
    %2725 = vmatpush.msra.mxu0 %v1673
    %2726 = vmatpush.msra.mxu0 %v1672
    %2727 = vmatpush.msra.mxu0 %v1671
    %2728 = vmatpush.msra.mxu0 %v1670
    %2729 = vmatpush.msra.mxu0 %v1669
    %2730 = vmatpush.msra.mxu0 %v1668
    %2731 = vmatpush.msra.mxu0 %v1667
    %2732 = vmatpush.msra.mxu0 %v1666
    %2733 = vmatmul.f32.gmra.mxu0 %v2506
    %v2734 = vpop.f32.mrf.mxu0
    %v2735 = vadd.f32 %v2670, %v2734
    %2736 = vmatmul.f32.gmra.mxu0 %v2507
    %v2737 = vpop.f32.mrf.mxu0
    %v2738 = vadd.f32 %v2673, %v2737
    %2739 = vmatmul.f32.gmra.mxu0 %v2508
    %v2740 = vpop.f32.mrf.mxu0
    %v2741 = vadd.f32 %v2676, %v2740
    %2742 = vmatmul.f32.gmra.mxu0 %v2509
    %v2743 = vpop.f32.mrf.mxu0
    %v2744 = vadd.f32 %v2679, %v2743
    %2745 = vmatmul.f32.gmra.mxu0 %v2510
    %v2746 = vpop.f32.mrf.mxu0
    %v2747 = vadd.f32 %v2682, %v2746
    %2748 = vmatmul.f32.gmra.mxu0 %v2511
    %v2749 = vpop.f32.mrf.mxu0
    %v2750 = vadd.f32 %v2685, %v2749
    %2751 = vmatmul.f32.gmra.mxu0 %v2512
    %v2752 = vpop.f32.mrf.mxu0
    %v2753 = vadd.f32 %v2688, %v2752
    %2754 = vmatmul.f32.gmra.mxu0 %v2513
    %v2755 = vpop.f32.mrf.mxu0
    %v2756 = vadd.f32 %v2691, %v2755
    %2757 = vmatmul.f32.gmra.mxu0 %v2514
    %v2758 = vpop.f32.mrf.mxu0
    %v2759 = vadd.f32 %v2694, %v2758
    %2760 = vmatmul.f32.gmra.mxu0 %v2515
    %v2761 = vpop.f32.mrf.mxu0
    %v2762 = vadd.f32 %v2697, %v2761
    %2763 = vmatmul.f32.gmra.mxu0 %v2516
    %v2764 = vpop.f32.mrf.mxu0
    %v2765 = vadd.f32 %v2700, %v2764
    %2766 = vmatmul.f32.gmra.mxu0 %v2517
    %v2767 = vpop.f32.mrf.mxu0
    %v2768 = vadd.f32 %v2703, %v2767
    %2769 = vmatmul.f32.gmra.mxu0 %v2518
    %v2770 = vpop.f32.mrf.mxu0
    %v2771 = vadd.f32 %v2706, %v2770
    %2772 = vmatmul.f32.gmra.mxu0 %v2519
    %v2773 = vpop.f32.mrf.mxu0
    %v2774 = vadd.f32 %v2709, %v2773
    %2775 = vmatmul.f32.gmra.mxu0 %v2520
    %v2776 = vpop.f32.mrf.mxu0
    %v2777 = vadd.f32 %v2712, %v2776
    %2778 = vmatmul.f32.gmra.mxu0 %v2521
    %v2779 = vpop.f32.mrf.mxu0
    %v2780 = vadd.f32 %v2715, %v2779
    %2781 = vdwg.mxu0
    %v2782 = vadd.f32 %v2347, %v2735
    %v2783 = vadd.f32 %v2350, %v2738
    %v2784 = vadd.f32 %v2353, %v2741
    %v2785 = vadd.f32 %v2356, %v2744
    %v2786 = vadd.f32 %v2359, %v2747
    %v2787 = vadd.f32 %v2362, %v2750
    %v2788 = vadd.f32 %v2365, %v2753
    %v2789 = vadd.f32 %v2368, %v2756
    %v2790 = vadd.f32 %v2371, %v2759
    %v2791 = vadd.f32 %v2374, %v2762
    %v2792 = vadd.f32 %v2377, %v2765
    %v2793 = vadd.f32 %v2380, %v2768
    %v2794 = vadd.f32 %v2383, %v2771
    %v2795 = vadd.f32 %v2386, %v2774
    %v2796 = vadd.f32 %v2389, %v2777
    %v2797 = vadd.f32 %v2392, %v2780
    %v2798 = vadd.f32 %v1538, %v2782
    %v2799 = vadd.f32 %v1539, %v2783
    %v2800 = vadd.f32 %v1540, %v2784
    %v2801 = vadd.f32 %v1541, %v2785
    %v2802 = vadd.f32 %v1542, %v2786
    %v2803 = vadd.f32 %v1543, %v2787
    %v2804 = vadd.f32 %v1544, %v2788
    %v2805 = vadd.f32 %v1545, %v2789
    %v2806 = vadd.f32 %v1546, %v2790
    %v2807 = vadd.f32 %v1547, %v2791
    %v2808 = vadd.f32 %v1548, %v2792
    %v2809 = vadd.f32 %v1549, %v2793
    %v2810 = vadd.f32 %v1550, %v2794
    %v2811 = vadd.f32 %v1551, %v2795
    %v2812 = vadd.f32 %v1552, %v2796
    %v2813 = vadd.f32 %v1553, %v2797
    %2814 = vst [vmem:[#allocation5] sm:$0xff] %v2798
    %2815 = vst [vmem:[#allocation5 + $0x8] sm:$0xff] %v2799
    %2816 = vst [vmem:[#allocation5 + $0x10] sm:$0xff] %v2800
    %2817 = vst [vmem:[#allocation5 + $0x18] sm:$0xff] %v2801
    %2818 = vst [vmem:[#allocation5 + $0x20] sm:$0xff] %v2802
    %2819 = vst [vmem:[#allocation5 + $0x28] sm:$0xff] %v2803
    %2820 = vst [vmem:[#allocation5 + $0x30] sm:$0xff] %v2804
    %2821 = vst [vmem:[#allocation5 + $0x38] sm:$0xff] %v2805
    %2822 = vst [vmem:[#allocation5 + $0x40] sm:$0xff] %v2806
    %2823 = vst [vmem:[#allocation5 + $0x48] sm:$0xff] %v2807
    %2824 = vst [vmem:[#allocation5 + $0x50] sm:$0xff] %v2808
    %2825 = vst [vmem:[#allocation5 + $0x58] sm:$0xff] %v2809
    %2826 = vst [vmem:[#allocation5 + $0x60] sm:$0xff] %v2810
    %2827 = vst [vmem:[#allocation5 + $0x68] sm:$0xff] %v2811
    %2828 = vst [vmem:[#allocation5 + $0x70] sm:$0xff] %v2812
    %2829 = vst [vmem:[#allocation5 + $0x78] sm:$0xff] %v2813
    %v2830 = vld [vmem:[#allocation6] sm:$0x3]
    %v2831 = vpack.c.bf16 %v1474, %v1474
    %v2832 = vpack.c.bf16 %v1475, %v1475
    %v2833 = vpack.c.bf16 %v1476, %v1476
    %v2834 = vpack.c.bf16 %v1477, %v1477
    %v2835 = vpack.c.bf16 %v1478, %v1478
    %v2836 = vpack.c.bf16 %v1479, %v1479
    %v2837 = vpack.c.bf16 %v1480, %v1480
    %v2838 = vpack.c.bf16 %v1481, %v1481
    %v2839 = vpack.c.bf16 %v1482, %v1482
    %v2840 = vpack.c.bf16 %v1483, %v1483
    %v2841 = vpack.c.bf16 %v1484, %v1484
    %v2842 = vpack.c.bf16 %v1485, %v1485
    %v2843 = vpack.c.bf16 %v1486, %v1486
    %v2844 = vpack.c.bf16 %v1487, %v1487
    %v2845 = vpack.c.bf16 %v1488, %v1488
    %v2846 = vpack.c.bf16 %v1489, %v1489
    %v2847 = vpack.c.bf16 %v1490, %v1490
    %v2848 = vpack.c.bf16 %v1491, %v1491
    %v2849 = vpack.c.bf16 %v1492, %v1492
    %v2850 = vpack.c.bf16 %v1493, %v1493
    %v2851 = vpack.c.bf16 %v1494, %v1494
    %v2852 = vpack.c.bf16 %v1495, %v1495
    %v2853 = vpack.c.bf16 %v1496, %v1496
    %v2854 = vpack.c.bf16 %v1497, %v1497
    %v2855 = vpack.c.bf16 %v1498, %v1498
    %v2856 = vpack.c.bf16 %v1499, %v1499
    %v2857 = vpack.c.bf16 %v1500, %v1500
    %v2858 = vpack.c.bf16 %v1501, %v1501
    %v2859 = vpack.c.bf16 %v1502, %v1502
    %v2860 = vpack.c.bf16 %v1503, %v1503
    %v2861 = vpack.c.bf16 %v1504, %v1504
    %v2862 = vpack.c.bf16 %v1505, %v1505
    %v2863 = vpack.c.bf16 %v1506, %v1506
    %v2864 = vpack.c.bf16 %v1507, %v1507
    %v2865 = vpack.c.bf16 %v1508, %v1508
    %v2866 = vpack.c.bf16 %v1509, %v1509
    %v2867 = vpack.c.bf16 %v1510, %v1510
    %v2868 = vpack.c.bf16 %v1511, %v1511
    %v2869 = vpack.c.bf16 %v1512, %v1512
    %v2870 = vpack.c.bf16 %v1513, %v1513
    %v2871 = vpack.c.bf16 %v1514, %v1514
    %v2872 = vpack.c.bf16 %v1515, %v1515
    %v2873 = vpack.c.bf16 %v1516, %v1516
    %v2874 = vpack.c.bf16 %v1517, %v1517
    %v2875 = vpack.c.bf16 %v1518, %v1518
    %v2876 = vpack.c.bf16 %v1519, %v1519
    %v2877 = vpack.c.bf16 %v1520, %v1520
    %v2878 = vpack.c.bf16 %v1521, %v1521
    %v2879 = vpack.c.bf16 %v1522, %v1522
    %v2880 = vpack.c.bf16 %v1523, %v1523
    %v2881 = vpack.c.bf16 %v1524, %v1524
    %v2882 = vpack.c.bf16 %v1525, %v1525
    %v2883 = vpack.c.bf16 %v1526, %v1526
    %v2884 = vpack.c.bf16 %v1527, %v1527
    %v2885 = vpack.c.bf16 %v1528, %v1528
    %v2886 = vpack.c.bf16 %v1529, %v1529
    %v2887 = vpack.c.bf16 %v1530, %v1530
    %v2888 = vpack.c.bf16 %v1531, %v1531
    %v2889 = vpack.c.bf16 %v1532, %v1532
    %v2890 = vpack.c.bf16 %v1533, %v1533
    %v2891 = vpack.c.bf16 %v1534, %v1534
    %v2892 = vpack.c.bf16 %v1535, %v1535
    %v2893 = vpack.c.bf16 %v1536, %v1536
    %v2894 = vpack.c.bf16 %v1537, %v1537
    %v2895 = vunpack.c.l.bf16 %v2831
    %v2896 = vunpack.c.l.bf16 %v2832
    %v2897 = vunpack.c.l.bf16 %v2833
    %v2898 = vunpack.c.l.bf16 %v2834
    %v2899 = vunpack.c.l.bf16 %v2835
    %v2900 = vunpack.c.l.bf16 %v2836
    %v2901 = vunpack.c.l.bf16 %v2837
    %v2902 = vunpack.c.l.bf16 %v2838
    %v2903 = vunpack.c.l.bf16 %v2839
    %v2904 = vunpack.c.l.bf16 %v2840
    %v2905 = vunpack.c.l.bf16 %v2841
    %v2906 = vunpack.c.l.bf16 %v2842
    %v2907 = vunpack.c.l.bf16 %v2843
    %v2908 = vunpack.c.l.bf16 %v2844
    %v2909 = vunpack.c.l.bf16 %v2845
    %v2910 = vunpack.c.l.bf16 %v2846
    %v2911 = vunpack.c.l.bf16 %v2847
    %v2912 = vunpack.c.l.bf16 %v2848
    %v2913 = vunpack.c.l.bf16 %v2849
    %v2914 = vunpack.c.l.bf16 %v2850
    %v2915 = vunpack.c.l.bf16 %v2851
    %v2916 = vunpack.c.l.bf16 %v2852
    %v2917 = vunpack.c.l.bf16 %v2853
    %v2918 = vunpack.c.l.bf16 %v2854
    %v2919 = vunpack.c.l.bf16 %v2855
    %v2920 = vunpack.c.l.bf16 %v2856
    %v2921 = vunpack.c.l.bf16 %v2857
    %v2922 = vunpack.c.l.bf16 %v2858
    %v2923 = vunpack.c.l.bf16 %v2859
    %v2924 = vunpack.c.l.bf16 %v2860
    %v2925 = vunpack.c.l.bf16 %v2861
    %v2926 = vunpack.c.l.bf16 %v2862
    %v2927 = vunpack.c.l.bf16 %v2863
    %v2928 = vunpack.c.l.bf16 %v2864
    %v2929 = vunpack.c.l.bf16 %v2865
    %v2930 = vunpack.c.l.bf16 %v2866
    %v2931 = vunpack.c.l.bf16 %v2867
    %v2932 = vunpack.c.l.bf16 %v2868
    %v2933 = vunpack.c.l.bf16 %v2869
    %v2934 = vunpack.c.l.bf16 %v2870
    %v2935 = vunpack.c.l.bf16 %v2871
    %v2936 = vunpack.c.l.bf16 %v2872
    %v2937 = vunpack.c.l.bf16 %v2873
    %v2938 = vunpack.c.l.bf16 %v2874
    %v2939 = vunpack.c.l.bf16 %v2875
    %v2940 = vunpack.c.l.bf16 %v2876
    %v2941 = vunpack.c.l.bf16 %v2877
    %v2942 = vunpack.c.l.bf16 %v2878
    %v2943 = vunpack.c.l.bf16 %v2879
    %v2944 = vunpack.c.l.bf16 %v2880
    %v2945 = vunpack.c.l.bf16 %v2881
    %v2946 = vunpack.c.l.bf16 %v2882
    %v2947 = vunpack.c.l.bf16 %v2883
    %v2948 = vunpack.c.l.bf16 %v2884
    %v2949 = vunpack.c.l.bf16 %v2885
    %v2950 = vunpack.c.l.bf16 %v2886
    %v2951 = vunpack.c.l.bf16 %v2887
    %v2952 = vunpack.c.l.bf16 %v2888
    %v2953 = vunpack.c.l.bf16 %v2889
    %v2954 = vunpack.c.l.bf16 %v2890
    %v2955 = vunpack.c.l.bf16 %v2891
    %v2956 = vunpack.c.l.bf16 %v2892
    %v2957 = vunpack.c.l.bf16 %v2893
    %v2958 = vunpack.c.l.bf16 %v2894
    %v2959 = vsub.f32 %v1474, %v2895
    %v2960 = vsub.f32 %v1475, %v2896
    %v2961 = vsub.f32 %v1476, %v2897
    %v2962 = vsub.f32 %v1477, %v2898
    %v2963 = vsub.f32 %v1478, %v2899
    %v2964 = vsub.f32 %v1479, %v2900
    %v2965 = vsub.f32 %v1480, %v2901
    %v2966 = vsub.f32 %v1481, %v2902
    %v2967 = vsub.f32 %v1482, %v2903
    %v2968 = vsub.f32 %v1483, %v2904
    %v2969 = vsub.f32 %v1484, %v2905
    %v2970 = vsub.f32 %v1485, %v2906
    %v2971 = vsub.f32 %v1486, %v2907
    %v2972 = vsub.f32 %v1487, %v2908
    %v2973 = vsub.f32 %v1488, %v2909
    %v2974 = vsub.f32 %v1489, %v2910
    %v2975 = vsub.f32 %v1490, %v2911
    %v2976 = vsub.f32 %v1491, %v2912
    %v2977 = vsub.f32 %v1492, %v2913
    %v2978 = vsub.f32 %v1493, %v2914
    %v2979 = vsub.f32 %v1494, %v2915
    %v2980 = vsub.f32 %v1495, %v2916
    %v2981 = vsub.f32 %v1496, %v2917
    %v2982 = vsub.f32 %v1497, %v2918
    %v2983 = vsub.f32 %v1498, %v2919
    %v2984 = vsub.f32 %v1499, %v2920
    %v2985 = vsub.f32 %v1500, %v2921
    %v2986 = vsub.f32 %v1501, %v2922
    %v2987 = vsub.f32 %v1502, %v2923
    %v2988 = vsub.f32 %v1503, %v2924
    %v2989 = vsub.f32 %v1504, %v2925
    %v2990 = vsub.f32 %v1505, %v2926
    %v2991 = vsub.f32 %v1506, %v2927
    %v2992 = vsub.f32 %v1507, %v2928
    %v2993 = vsub.f32 %v1508, %v2929
    %v2994 = vsub.f32 %v1509, %v2930
    %v2995 = vsub.f32 %v1510, %v2931
    %v2996 = vsub.f32 %v1511, %v2932
    %v2997 = vsub.f32 %v1512, %v2933
    %v2998 = vsub.f32 %v1513, %v2934
    %v2999 = vsub.f32 %v1514, %v2935
    %v3000 = vsub.f32 %v1515, %v2936
    %v3001 = vsub.f32 %v1516, %v2937
    %v3002 = vsub.f32 %v1517, %v2938
    %v3003 = vsub.f32 %v1518, %v2939
    %v3004 = vsub.f32 %v1519, %v2940
    %v3005 = vsub.f32 %v1520, %v2941
    %v3006 = vsub.f32 %v1521, %v2942
    %v3007 = vsub.f32 %v1522, %v2943
    %v3008 = vsub.f32 %v1523, %v2944
    %v3009 = vsub.f32 %v1524, %v2945
    %v3010 = vsub.f32 %v1525, %v2946
    %v3011 = vsub.f32 %v1526, %v2947
    %v3012 = vsub.f32 %v1527, %v2948
    %v3013 = vsub.f32 %v1528, %v2949
    %v3014 = vsub.f32 %v1529, %v2950
    %v3015 = vsub.f32 %v1530, %v2951
    %v3016 = vsub.f32 %v1531, %v2952
    %v3017 = vsub.f32 %v1532, %v2953
    %v3018 = vsub.f32 %v1533, %v2954
    %v3019 = vsub.f32 %v1534, %v2955
    %v3020 = vsub.f32 %v1535, %v2956
    %v3021 = vsub.f32 %v1536, %v2957
    %v3022 = vsub.f32 %v1537, %v2958
    %3023 = vxpose.xlu0.b32.start [1/16] %v2895, 128
    %3024 = vxpose.xlu0.b32.cont [2/16] %v2896, 128
    %3025 = vxpose.xlu0.b32.cont [3/16] %v2897, 128
    %3026 = vxpose.xlu0.b32.cont [4/16] %v2898, 128
    %3027 = vxpose.xlu0.b32.cont [5/16] %v2899, 128
    %3028 = vxpose.xlu0.b32.cont [6/16] %v2900, 128
    %3029 = vxpose.xlu0.b32.cont [7/16] %v2901, 128
    %3030 = vxpose.xlu0.b32.cont [8/16] %v2902, 128
    %3031 = vxpose.xlu0.b32.cont [9/16] %v2903, 128
    %3032 = vxpose.xlu0.b32.cont [10/16] %v2904, 128
    %3033 = vxpose.xlu0.b32.cont [11/16] %v2905, 128
    %3034 = vxpose.xlu0.b32.cont [12/16] %v2906, 128
    %3035 = vxpose.xlu0.b32.cont [13/16] %v2907, 128
    %3036 = vxpose.xlu0.b32.cont [14/16] %v2908, 128
    %3037 = vxpose.xlu0.b32.cont [15/16] %v2909, 128
    %3038 = vxpose.xlu0.b32.end [16/16] %v2910, 128
    %v3039 = vpop.trf.xlu0
    %v3040 = vpop.trf.xlu0
    %v3041 = vpop.trf.xlu0
    %v3042 = vpop.trf.xlu0
    %v3043 = vpop.trf.xlu0
    %v3044 = vpop.trf.xlu0
    %v3045 = vpop.trf.xlu0
    %v3046 = vpop.trf.xlu0
    %v3047 = vpop.trf.xlu0
    %v3048 = vpop.trf.xlu0
    %v3049 = vpop.trf.xlu0
    %v3050 = vpop.trf.xlu0
    %v3051 = vpop.trf.xlu0
    %v3052 = vpop.trf.xlu0
    %v3053 = vpop.trf.xlu0
    %v3054 = vpop.trf.xlu0
    %3055 = vxpose.xlu0.b32.start [1/16] %v2911, 128
    %3056 = vxpose.xlu0.b32.cont [2/16] %v2912, 128
    %3057 = vxpose.xlu0.b32.cont [3/16] %v2913, 128
    %3058 = vxpose.xlu0.b32.cont [4/16] %v2914, 128
    %3059 = vxpose.xlu0.b32.cont [5/16] %v2915, 128
    %3060 = vxpose.xlu0.b32.cont [6/16] %v2916, 128
    %3061 = vxpose.xlu0.b32.cont [7/16] %v2917, 128
    %3062 = vxpose.xlu0.b32.cont [8/16] %v2918, 128
    %3063 = vxpose.xlu0.b32.cont [9/16] %v2919, 128
    %3064 = vxpose.xlu0.b32.cont [10/16] %v2920, 128
    %3065 = vxpose.xlu0.b32.cont [11/16] %v2921, 128
    %3066 = vxpose.xlu0.b32.cont [12/16] %v2922, 128
    %3067 = vxpose.xlu0.b32.cont [13/16] %v2923, 128
    %3068 = vxpose.xlu0.b32.cont [14/16] %v2924, 128
    %3069 = vxpose.xlu0.b32.cont [15/16] %v2925, 128
    %3070 = vxpose.xlu0.b32.end [16/16] %v2926, 128
    %v3071 = vpop.trf.xlu0
    %v3072 = vpop.trf.xlu0
    %v3073 = vpop.trf.xlu0
    %v3074 = vpop.trf.xlu0
    %v3075 = vpop.trf.xlu0
    %v3076 = vpop.trf.xlu0
    %v3077 = vpop.trf.xlu0
    %v3078 = vpop.trf.xlu0
    %v3079 = vpop.trf.xlu0
    %v3080 = vpop.trf.xlu0
    %v3081 = vpop.trf.xlu0
    %v3082 = vpop.trf.xlu0
    %v3083 = vpop.trf.xlu0
    %v3084 = vpop.trf.xlu0
    %v3085 = vpop.trf.xlu0
    %v3086 = vpop.trf.xlu0
    %3087 = vxpose.xlu0.b32.start [1/16] %v2927, 128
    %3088 = vxpose.xlu0.b32.cont [2/16] %v2928, 128
    %3089 = vxpose.xlu0.b32.cont [3/16] %v2929, 128
    %3090 = vxpose.xlu0.b32.cont [4/16] %v2930, 128
    %3091 = vxpose.xlu0.b32.cont [5/16] %v2931, 128
    %3092 = vxpose.xlu0.b32.cont [6/16] %v2932, 128
    %3093 = vxpose.xlu0.b32.cont [7/16] %v2933, 128
    %3094 = vxpose.xlu0.b32.cont [8/16] %v2934, 128
    %3095 = vxpose.xlu0.b32.cont [9/16] %v2935, 128
    %3096 = vxpose.xlu0.b32.cont [10/16] %v2936, 128
    %3097 = vxpose.xlu0.b32.cont [11/16] %v2937, 128
    %3098 = vxpose.xlu0.b32.cont [12/16] %v2938, 128
    %3099 = vxpose.xlu0.b32.cont [13/16] %v2939, 128
    %3100 = vxpose.xlu0.b32.cont [14/16] %v2940, 128
    %3101 = vxpose.xlu0.b32.cont [15/16] %v2941, 128
    %3102 = vxpose.xlu0.b32.end [16/16] %v2942, 128
    %v3103 = vpop.trf.xlu0
    %v3104 = vpop.trf.xlu0
    %v3105 = vpop.trf.xlu0
    %v3106 = vpop.trf.xlu0
    %v3107 = vpop.trf.xlu0
    %v3108 = vpop.trf.xlu0
    %v3109 = vpop.trf.xlu0
    %v3110 = vpop.trf.xlu0
    %v3111 = vpop.trf.xlu0
    %v3112 = vpop.trf.xlu0
    %v3113 = vpop.trf.xlu0
    %v3114 = vpop.trf.xlu0
    %v3115 = vpop.trf.xlu0
    %v3116 = vpop.trf.xlu0
    %v3117 = vpop.trf.xlu0
    %v3118 = vpop.trf.xlu0
    %3119 = vxpose.xlu0.b32.start [1/16] %v2943, 128
    %3120 = vxpose.xlu0.b32.cont [2/16] %v2944, 128
    %3121 = vxpose.xlu0.b32.cont [3/16] %v2945, 128
    %3122 = vxpose.xlu0.b32.cont [4/16] %v2946, 128
    %3123 = vxpose.xlu0.b32.cont [5/16] %v2947, 128
    %3124 = vxpose.xlu0.b32.cont [6/16] %v2948, 128
    %3125 = vxpose.xlu0.b32.cont [7/16] %v2949, 128
    %3126 = vxpose.xlu0.b32.cont [8/16] %v2950, 128
    %3127 = vxpose.xlu0.b32.cont [9/16] %v2951, 128
    %3128 = vxpose.xlu0.b32.cont [10/16] %v2952, 128
    %3129 = vxpose.xlu0.b32.cont [11/16] %v2953, 128
    %3130 = vxpose.xlu0.b32.cont [12/16] %v2954, 128
    %3131 = vxpose.xlu0.b32.cont [13/16] %v2955, 128
    %3132 = vxpose.xlu0.b32.cont [14/16] %v2956, 128
    %3133 = vxpose.xlu0.b32.cont [15/16] %v2957, 128
    %3134 = vxpose.xlu0.b32.end [16/16] %v2958, 128
    %v3135 = vpop.trf.xlu0
    %v3136 = vpop.trf.xlu0
    %v3137 = vpop.trf.xlu0
    %v3138 = vpop.trf.xlu0
    %v3139 = vpop.trf.xlu0
    %v3140 = vpop.trf.xlu0
    %v3141 = vpop.trf.xlu0
    %v3142 = vpop.trf.xlu0
    %v3143 = vpop.trf.xlu0
    %v3144 = vpop.trf.xlu0
    %v3145 = vpop.trf.xlu0
    %v3146 = vpop.trf.xlu0
    %v3147 = vpop.trf.xlu0
    %v3148 = vpop.trf.xlu0
    %v3149 = vpop.trf.xlu0
    %v3150 = vpop.trf.xlu0
    %3151 = vmatpush.msra.mxu0 %v1697
    %3152 = vmatpush.msra.mxu0 %v1696
    %3153 = vmatpush.msra.mxu0 %v1695
    %3154 = vmatpush.msra.mxu0 %v1694
    %3155 = vmatpush.msra.mxu0 %v1693
    %3156 = vmatpush.msra.mxu0 %v1692
    %3157 = vmatpush.msra.mxu0 %v1691
    %3158 = vmatpush.msra.mxu0 %v1690
    %3159 = vmatpush.msra.mxu0 %v1689
    %3160 = vmatpush.msra.mxu0 %v1688
    %3161 = vmatpush.msra.mxu0 %v1687
    %3162 = vmatpush.msra.mxu0 %v1686
    %3163 = vmatpush.msra.mxu0 %v1685
    %3164 = vmatpush.msra.mxu0 %v1684
    %3165 = vmatpush.msra.mxu0 %v1683
    %3166 = vmatpush.msra.mxu0 %v1682
    %3167 = vmatmul.f32.gmra.mxu0 %v3039
    %v3168 = vpop.f32.mrf.mxu0
    %v3169 = vadd.f32 0.0, %v3168
    %3170 = vdwg.mxu0
    %3171 = vmatpush.msra.mxu0 %v1713
    %3172 = vmatpush.msra.mxu0 %v1712
    %3173 = vmatpush.msra.mxu0 %v1711
    %3174 = vmatpush.msra.mxu0 %v1710
    %3175 = vmatpush.msra.mxu0 %v1709
    %3176 = vmatpush.msra.mxu0 %v1708
    %3177 = vmatpush.msra.mxu0 %v1707
    %3178 = vmatpush.msra.mxu0 %v1706
    %3179 = vmatpush.msra.mxu0 %v1705
    %3180 = vmatpush.msra.mxu0 %v1704
    %3181 = vmatpush.msra.mxu0 %v1703
    %3182 = vmatpush.msra.mxu0 %v1702
    %3183 = vmatpush.msra.mxu0 %v1701
    %3184 = vmatpush.msra.mxu0 %v1700
    %3185 = vmatpush.msra.mxu0 %v1699
    %3186 = vmatpush.msra.mxu0 %v1698
    %3187 = vmatmul.f32.gmra.mxu0 %v3071
    %v3188 = vpop.f32.mrf.mxu0
    %v3189 = vadd.f32 %v3169, %v3188
    %3190 = vdwg.mxu0
    %3191 = vmatpush.msra.mxu0 %v1729
    %3192 = vmatpush.msra.mxu0 %v1728
    %3193 = vmatpush.msra.mxu0 %v1727
    %3194 = vmatpush.msra.mxu0 %v1726
    %3195 = vmatpush.msra.mxu0 %v1725
    %3196 = vmatpush.msra.mxu0 %v1724
    %3197 = vmatpush.msra.mxu0 %v1723
    %3198 = vmatpush.msra.mxu0 %v1722
    %3199 = vmatpush.msra.mxu0 %v1721
    %3200 = vmatpush.msra.mxu0 %v1720
    %3201 = vmatpush.msra.mxu0 %v1719
    %3202 = vmatpush.msra.mxu0 %v1718
    %3203 = vmatpush.msra.mxu0 %v1717
    %3204 = vmatpush.msra.mxu0 %v1716
    %3205 = vmatpush.msra.mxu0 %v1715
    %3206 = vmatpush.msra.mxu0 %v1714
    %3207 = vmatmul.f32.gmra.mxu0 %v3103
    %v3208 = vpop.f32.mrf.mxu0
    %v3209 = vadd.f32 %v3189, %v3208
    %3210 = vdwg.mxu0
    %3211 = vmatpush.msra.mxu0 %v1745
    %3212 = vmatpush.msra.mxu0 %v1744
    %3213 = vmatpush.msra.mxu0 %v1743
    %3214 = vmatpush.msra.mxu0 %v1742
    %3215 = vmatpush.msra.mxu0 %v1741
    %3216 = vmatpush.msra.mxu0 %v1740
    %3217 = vmatpush.msra.mxu0 %v1739
    %3218 = vmatpush.msra.mxu0 %v1738
    %3219 = vmatpush.msra.mxu0 %v1737
    %3220 = vmatpush.msra.mxu0 %v1736
    %3221 = vmatpush.msra.mxu0 %v1735
    %3222 = vmatpush.msra.mxu0 %v1734
    %3223 = vmatpush.msra.mxu0 %v1733
    %3224 = vmatpush.msra.mxu0 %v1732
    %3225 = vmatpush.msra.mxu0 %v1731
    %3226 = vmatpush.msra.mxu0 %v1730
    %3227 = vmatmul.f32.gmra.mxu0 %v3135
    %v3228 = vpop.f32.mrf.mxu0
    %v3229 = vadd.f32 %v3209, %v3228
    %3230 = vdwg.mxu0
    %3231 = vmatpush.msra.mxu0 %v1633
    %3232 = vmatpush.msra.mxu0 %v1632
    %3233 = vmatpush.msra.mxu0 %v1631
    %3234 = vmatpush.msra.mxu0 %v1630
    %3235 = vmatpush.msra.mxu0 %v1629
    %3236 = vmatpush.msra.mxu0 %v1628
    %3237 = vmatpush.msra.mxu0 %v1627
    %3238 = vmatpush.msra.mxu0 %v1626
    %3239 = vmatpush.msra.mxu0 %v1625
    %3240 = vmatpush.msra.mxu0 %v1624
    %3241 = vmatpush.msra.mxu0 %v1623
    %3242 = vmatpush.msra.mxu0 %v1622
    %3243 = vmatpush.msra.mxu0 %v1621
    %3244 = vmatpush.msra.mxu0 %v1620
    %3245 = vmatpush.msra.mxu0 %v1619
    %3246 = vmatpush.msra.mxu0 %v1618
    %3247 = vmatmul.f32.gmra.mxu0 %v3039
    %v3248 = vpop.f32.mrf.mxu0
    %v3249 = vadd.f32 %v3229, %v3248
    %3250 = vdwg.mxu0
    %3251 = vmatpush.msra.mxu0 %v1649
    %3252 = vmatpush.msra.mxu0 %v1648
    %3253 = vmatpush.msra.mxu0 %v1647
    %3254 = vmatpush.msra.mxu0 %v1646
    %3255 = vmatpush.msra.mxu0 %v1645
    %3256 = vmatpush.msra.mxu0 %v1644
    %3257 = vmatpush.msra.mxu0 %v1643
    %3258 = vmatpush.msra.mxu0 %v1642
    %3259 = vmatpush.msra.mxu0 %v1641
    %3260 = vmatpush.msra.mxu0 %v1640
    %3261 = vmatpush.msra.mxu0 %v1639
    %3262 = vmatpush.msra.mxu0 %v1638
    %3263 = vmatpush.msra.mxu0 %v1637
    %3264 = vmatpush.msra.mxu0 %v1636
    %3265 = vmatpush.msra.mxu0 %v1635
    %3266 = vmatpush.msra.mxu0 %v1634
    %3267 = vmatmul.f32.gmra.mxu0 %v3071
    %v3268 = vpop.f32.mrf.mxu0
    %v3269 = vadd.f32 %v3249, %v3268
    %3270 = vdwg.mxu0
    %3271 = vmatpush.msra.mxu0 %v1665
    %3272 = vmatpush.msra.mxu0 %v1664
    %3273 = vmatpush.msra.mxu0 %v1663
    %3274 = vmatpush.msra.mxu0 %v1662
    %3275 = vmatpush.msra.mxu0 %v1661
    %3276 = vmatpush.msra.mxu0 %v1660
    %3277 = vmatpush.msra.mxu0 %v1659
    %3278 = vmatpush.msra.mxu0 %v1658
    %3279 = vmatpush.msra.mxu0 %v1657
    %3280 = vmatpush.msra.mxu0 %v1656
    %3281 = vmatpush.msra.mxu0 %v1655
    %3282 = vmatpush.msra.mxu0 %v1654
    %3283 = vmatpush.msra.mxu0 %v1653
    %3284 = vmatpush.msra.mxu0 %v1652
    %3285 = vmatpush.msra.mxu0 %v1651
    %3286 = vmatpush.msra.mxu0 %v1650
    %3287 = vmatmul.f32.gmra.mxu0 %v3103
    %v3288 = vpop.f32.mrf.mxu0
    %v3289 = vadd.f32 %v3269, %v3288
    %3290 = vdwg.mxu0
    %3291 = vmatpush.msra.mxu0 %v1681
    %3292 = vmatpush.msra.mxu0 %v1680
    %3293 = vmatpush.msra.mxu0 %v1679
    %3294 = vmatpush.msra.mxu0 %v1678
    %3295 = vmatpush.msra.mxu0 %v1677
    %3296 = vmatpush.msra.mxu0 %v1676
    %3297 = vmatpush.msra.mxu0 %v1675
    %3298 = vmatpush.msra.mxu0 %v1674
    %3299 = vmatpush.msra.mxu0 %v1673
    %3300 = vmatpush.msra.mxu0 %v1672
    %3301 = vmatpush.msra.mxu0 %v1671
    %3302 = vmatpush.msra.mxu0 %v1670
    %3303 = vmatpush.msra.mxu0 %v1669
    %3304 = vmatpush.msra.mxu0 %v1668
    %3305 = vmatpush.msra.mxu0 %v1667
    %3306 = vmatpush.msra.mxu0 %v1666
    %3307 = vmatmul.f32.gmra.mxu0 %v3135
    %v3308 = vpop.f32.mrf.mxu0
    %v3309 = vadd.f32 %v3289, %v3308
    %3310 = vdwg.mxu0
    %3311 = vxpose.xlu0.b32.start [1/16] %v2959, 128
    %3312 = vxpose.xlu0.b32.cont [2/16] %v2960, 128
    %3313 = vxpose.xlu0.b32.cont [3/16] %v2961, 128
    %3314 = vxpose.xlu0.b32.cont [4/16] %v2962, 128
    %3315 = vxpose.xlu0.b32.cont [5/16] %v2963, 128
    %3316 = vxpose.xlu0.b32.cont [6/16] %v2964, 128
    %3317 = vxpose.xlu0.b32.cont [7/16] %v2965, 128
    %3318 = vxpose.xlu0.b32.cont [8/16] %v2966, 128
    %3319 = vxpose.xlu0.b32.cont [9/16] %v2967, 128
    %3320 = vxpose.xlu0.b32.cont [10/16] %v2968, 128
    %3321 = vxpose.xlu0.b32.cont [11/16] %v2969, 128
    %3322 = vxpose.xlu0.b32.cont [12/16] %v2970, 128
    %3323 = vxpose.xlu0.b32.cont [13/16] %v2971, 128
    %3324 = vxpose.xlu0.b32.cont [14/16] %v2972, 128
    %3325 = vxpose.xlu0.b32.cont [15/16] %v2973, 128
    %3326 = vxpose.xlu0.b32.end [16/16] %v2974, 128
    %v3327 = vpop.trf.xlu0
    %v3328 = vpop.trf.xlu0
    %v3329 = vpop.trf.xlu0
    %v3330 = vpop.trf.xlu0
    %v3331 = vpop.trf.xlu0
    %v3332 = vpop.trf.xlu0
    %v3333 = vpop.trf.xlu0
    %v3334 = vpop.trf.xlu0
    %v3335 = vpop.trf.xlu0
    %v3336 = vpop.trf.xlu0
    %v3337 = vpop.trf.xlu0
    %v3338 = vpop.trf.xlu0
    %v3339 = vpop.trf.xlu0
    %v3340 = vpop.trf.xlu0
    %v3341 = vpop.trf.xlu0
    %v3342 = vpop.trf.xlu0
    %3343 = vxpose.xlu0.b32.start [1/16] %v2975, 128
    %3344 = vxpose.xlu0.b32.cont [2/16] %v2976, 128
    %3345 = vxpose.xlu0.b32.cont [3/16] %v2977, 128
    %3346 = vxpose.xlu0.b32.cont [4/16] %v2978, 128
    %3347 = vxpose.xlu0.b32.cont [5/16] %v2979, 128
    %3348 = vxpose.xlu0.b32.cont [6/16] %v2980, 128
    %3349 = vxpose.xlu0.b32.cont [7/16] %v2981, 128
    %3350 = vxpose.xlu0.b32.cont [8/16] %v2982, 128
    %3351 = vxpose.xlu0.b32.cont [9/16] %v2983, 128
    %3352 = vxpose.xlu0.b32.cont [10/16] %v2984, 128
    %3353 = vxpose.xlu0.b32.cont [11/16] %v2985, 128
    %3354 = vxpose.xlu0.b32.cont [12/16] %v2986, 128
    %3355 = vxpose.xlu0.b32.cont [13/16] %v2987, 128
    %3356 = vxpose.xlu0.b32.cont [14/16] %v2988, 128
    %3357 = vxpose.xlu0.b32.cont [15/16] %v2989, 128
    %3358 = vxpose.xlu0.b32.end [16/16] %v2990, 128
    %v3359 = vpop.trf.xlu0
    %v3360 = vpop.trf.xlu0
    %v3361 = vpop.trf.xlu0
    %v3362 = vpop.trf.xlu0
    %v3363 = vpop.trf.xlu0
    %v3364 = vpop.trf.xlu0
    %v3365 = vpop.trf.xlu0
    %v3366 = vpop.trf.xlu0
    %v3367 = vpop.trf.xlu0
    %v3368 = vpop.trf.xlu0
    %v3369 = vpop.trf.xlu0
    %v3370 = vpop.trf.xlu0
    %v3371 = vpop.trf.xlu0
    %v3372 = vpop.trf.xlu0
    %v3373 = vpop.trf.xlu0
    %v3374 = vpop.trf.xlu0
    %3375 = vxpose.xlu0.b32.start [1/16] %v2991, 128
    %3376 = vxpose.xlu0.b32.cont [2/16] %v2992, 128
    %3377 = vxpose.xlu0.b32.cont [3/16] %v2993, 128
    %3378 = vxpose.xlu0.b32.cont [4/16] %v2994, 128
    %3379 = vxpose.xlu0.b32.cont [5/16] %v2995, 128
    %3380 = vxpose.xlu0.b32.cont [6/16] %v2996, 128
    %3381 = vxpose.xlu0.b32.cont [7/16] %v2997, 128
    %3382 = vxpose.xlu0.b32.cont [8/16] %v2998, 128
    %3383 = vxpose.xlu0.b32.cont [9/16] %v2999, 128
    %3384 = vxpose.xlu0.b32.cont [10/16] %v3000, 128
    %3385 = vxpose.xlu0.b32.cont [11/16] %v3001, 128
    %3386 = vxpose.xlu0.b32.cont [12/16] %v3002, 128
    %3387 = vxpose.xlu0.b32.cont [13/16] %v3003, 128
    %3388 = vxpose.xlu0.b32.cont [14/16] %v3004, 128
    %3389 = vxpose.xlu0.b32.cont [15/16] %v3005, 128
    %3390 = vxpose.xlu0.b32.end [16/16] %v3006, 128
    %v3391 = vpop.trf.xlu0
    %v3392 = vpop.trf.xlu0
    %v3393 = vpop.trf.xlu0
    %v3394 = vpop.trf.xlu0
    %v3395 = vpop.trf.xlu0
    %v3396 = vpop.trf.xlu0
    %v3397 = vpop.trf.xlu0
    %v3398 = vpop.trf.xlu0
    %v3399 = vpop.trf.xlu0
    %v3400 = vpop.trf.xlu0
    %v3401 = vpop.trf.xlu0
    %v3402 = vpop.trf.xlu0
    %v3403 = vpop.trf.xlu0
    %v3404 = vpop.trf.xlu0
    %v3405 = vpop.trf.xlu0
    %v3406 = vpop.trf.xlu0
    %3407 = vxpose.xlu0.b32.start [1/16] %v3007, 128
    %3408 = vxpose.xlu0.b32.cont [2/16] %v3008, 128
    %3409 = vxpose.xlu0.b32.cont [3/16] %v3009, 128
    %3410 = vxpose.xlu0.b32.cont [4/16] %v3010, 128
    %3411 = vxpose.xlu0.b32.cont [5/16] %v3011, 128
    %3412 = vxpose.xlu0.b32.cont [6/16] %v3012, 128
    %3413 = vxpose.xlu0.b32.cont [7/16] %v3013, 128
    %3414 = vxpose.xlu0.b32.cont [8/16] %v3014, 128
    %3415 = vxpose.xlu0.b32.cont [9/16] %v3015, 128
    %3416 = vxpose.xlu0.b32.cont [10/16] %v3016, 128
    %3417 = vxpose.xlu0.b32.cont [11/16] %v3017, 128
    %3418 = vxpose.xlu0.b32.cont [12/16] %v3018, 128
    %3419 = vxpose.xlu0.b32.cont [13/16] %v3019, 128
    %3420 = vxpose.xlu0.b32.cont [14/16] %v3020, 128
    %3421 = vxpose.xlu0.b32.cont [15/16] %v3021, 128
    %3422 = vxpose.xlu0.b32.end [16/16] %v3022, 128
    %v3423 = vpop.trf.xlu0
    %v3424 = vpop.trf.xlu0
    %v3425 = vpop.trf.xlu0
    %v3426 = vpop.trf.xlu0
    %v3427 = vpop.trf.xlu0
    %v3428 = vpop.trf.xlu0
    %v3429 = vpop.trf.xlu0
    %v3430 = vpop.trf.xlu0
    %v3431 = vpop.trf.xlu0
    %v3432 = vpop.trf.xlu0
    %v3433 = vpop.trf.xlu0
    %v3434 = vpop.trf.xlu0
    %v3435 = vpop.trf.xlu0
    %v3436 = vpop.trf.xlu0
    %v3437 = vpop.trf.xlu0
    %v3438 = vpop.trf.xlu0
    %3439 = vmatpush.msra.mxu0 %v1633
    %3440 = vmatpush.msra.mxu0 %v1632
    %3441 = vmatpush.msra.mxu0 %v1631
    %3442 = vmatpush.msra.mxu0 %v1630
    %3443 = vmatpush.msra.mxu0 %v1629
    %3444 = vmatpush.msra.mxu0 %v1628
    %3445 = vmatpush.msra.mxu0 %v1627
    %3446 = vmatpush.msra.mxu0 %v1626
    %3447 = vmatpush.msra.mxu0 %v1625
    %3448 = vmatpush.msra.mxu0 %v1624
    %3449 = vmatpush.msra.mxu0 %v1623
    %3450 = vmatpush.msra.mxu0 %v1622
    %3451 = vmatpush.msra.mxu0 %v1621
    %3452 = vmatpush.msra.mxu0 %v1620
    %3453 = vmatpush.msra.mxu0 %v1619
    %3454 = vmatpush.msra.mxu0 %v1618
    %3455 = vmatmul.f32.gmra.mxu0 %v3327
    %v3456 = vpop.f32.mrf.mxu0
    %v3457 = vadd.f32 0.0, %v3456
    %3458 = vdwg.mxu0
    %3459 = vmatpush.msra.mxu0 %v1649
    %3460 = vmatpush.msra.mxu0 %v1648
    %3461 = vmatpush.msra.mxu0 %v1647
    %3462 = vmatpush.msra.mxu0 %v1646
    %3463 = vmatpush.msra.mxu0 %v1645
    %3464 = vmatpush.msra.mxu0 %v1644
    %3465 = vmatpush.msra.mxu0 %v1643
    %3466 = vmatpush.msra.mxu0 %v1642
    %3467 = vmatpush.msra.mxu0 %v1641
    %3468 = vmatpush.msra.mxu0 %v1640
    %3469 = vmatpush.msra.mxu0 %v1639
    %3470 = vmatpush.msra.mxu0 %v1638
    %3471 = vmatpush.msra.mxu0 %v1637
    %3472 = vmatpush.msra.mxu0 %v1636
    %3473 = vmatpush.msra.mxu0 %v1635
    %3474 = vmatpush.msra.mxu0 %v1634
    %3475 = vmatmul.f32.gmra.mxu0 %v3359
    %v3476 = vpop.f32.mrf.mxu0
    %v3477 = vadd.f32 %v3457, %v3476
    %3478 = vdwg.mxu0
    %3479 = vmatpush.msra.mxu0 %v1665
    %3480 = vmatpush.msra.mxu0 %v1664
    %3481 = vmatpush.msra.mxu0 %v1663
    %3482 = vmatpush.msra.mxu0 %v1662
    %3483 = vmatpush.msra.mxu0 %v1661
    %3484 = vmatpush.msra.mxu0 %v1660
    %3485 = vmatpush.msra.mxu0 %v1659
    %3486 = vmatpush.msra.mxu0 %v1658
    %3487 = vmatpush.msra.mxu0 %v1657
    %3488 = vmatpush.msra.mxu0 %v1656
    %3489 = vmatpush.msra.mxu0 %v1655
    %3490 = vmatpush.msra.mxu0 %v1654
    %3491 = vmatpush.msra.mxu0 %v1653
    %3492 = vmatpush.msra.mxu0 %v1652
    %3493 = vmatpush.msra.mxu0 %v1651
    %3494 = vmatpush.msra.mxu0 %v1650
    %3495 = vmatmul.f32.gmra.mxu0 %v3391
    %v3496 = vpop.f32.mrf.mxu0
    %v3497 = vadd.f32 %v3477, %v3496
    %3498 = vdwg.mxu0
    %3499 = vmatpush.msra.mxu0 %v1681
    %3500 = vmatpush.msra.mxu0 %v1680
    %3501 = vmatpush.msra.mxu0 %v1679
    %3502 = vmatpush.msra.mxu0 %v1678
    %3503 = vmatpush.msra.mxu0 %v1677
    %3504 = vmatpush.msra.mxu0 %v1676
    %3505 = vmatpush.msra.mxu0 %v1675
    %3506 = vmatpush.msra.mxu0 %v1674
    %3507 = vmatpush.msra.mxu0 %v1673
    %3508 = vmatpush.msra.mxu0 %v1672
    %3509 = vmatpush.msra.mxu0 %v1671
    %3510 = vmatpush.msra.mxu0 %v1670
    %3511 = vmatpush.msra.mxu0 %v1669
    %3512 = vmatpush.msra.mxu0 %v1668
    %3513 = vmatpush.msra.mxu0 %v1667
    %3514 = vmatpush.msra.mxu0 %v1666
    %3515 = vmatmul.f32.gmra.mxu0 %v3423
    %v3516 = vpop.f32.mrf.mxu0
    %v3517 = vadd.f32 %v3497, %v3516
    %3518 = vdwg.mxu0
    %v3519 = vadd.f32 %v3309, %v3517
    %v3520 = vadd.f32 %v2830, %v3519
    %3521 = vst [vmem:[#allocation6] sm:$0x3] %v3520
    // Predicated region
    $region37: #{tpu_custom_call.1} parent=1 // pred_check
      %p3522 = pneg %p28
    $region38: #{tpu_custom_call.1} parent=1 // pred_check_branch
      %3524 = sbr.rel (%p3522) target = $region40
    $region39: #{tpu_custom_call.1} parent=1 // pred_region
      %v3525 = vld [vmem:[#allocation5] sm:$0xff]
      %v3526 = vld [vmem:[#allocation5 + $0x8] sm:$0xff]
      %v3527 = vld [vmem:[#allocation5 + $0x10] sm:$0xff]
      %v3528 = vld [vmem:[#allocation5 + $0x18] sm:$0xff]
      %v3529 = vld [vmem:[#allocation5 + $0x20] sm:$0xff]
      %v3530 = vld [vmem:[#allocation5 + $0x28] sm:$0xff]
      %v3531 = vld [vmem:[#allocation5 + $0x30] sm:$0xff]
      %v3532 = vld [vmem:[#allocation5 + $0x38] sm:$0xff]
      %v3533 = vld [vmem:[#allocation5 + $0x40] sm:$0xff]
      %v3534 = vld [vmem:[#allocation5 + $0x48] sm:$0xff]
      %v3535 = vld [vmem:[#allocation5 + $0x50] sm:$0xff]
      %v3536 = vld [vmem:[#allocation5 + $0x58] sm:$0xff]
      %v3537 = vld [vmem:[#allocation5 + $0x60] sm:$0xff]
      %v3538 = vld [vmem:[#allocation5 + $0x68] sm:$0xff]
      %v3539 = vld [vmem:[#allocation5 + $0x70] sm:$0xff]
      %v3540 = vld [vmem:[#allocation5 + $0x78] sm:$0xff]
      %3541 = vst [vmem:[#allocation7] sm:$0xff] %v3525
      %3542 = vst [vmem:[#allocation7 + $0x8] sm:$0xff] %v3526
      %3543 = vst [vmem:[#allocation7 + $0x10] sm:$0xff] %v3527
      %3544 = vst [vmem:[#allocation7 + $0x18] sm:$0xff] %v3528
      %3545 = vst [vmem:[#allocation7 + $0x20] sm:$0xff] %v3529
      %3546 = vst [vmem:[#allocation7 + $0x28] sm:$0xff] %v3530
      %3547 = vst [vmem:[#allocation7 + $0x30] sm:$0xff] %v3531
      %3548 = vst [vmem:[#allocation7 + $0x38] sm:$0xff] %v3532
      %3549 = vst [vmem:[#allocation7 + $0x40] sm:$0xff] %v3533
      %3550 = vst [vmem:[#allocation7 + $0x48] sm:$0xff] %v3534
      %3551 = vst [vmem:[#allocation7 + $0x50] sm:$0xff] %v3535
      %3552 = vst [vmem:[#allocation7 + $0x58] sm:$0xff] %v3536
      %3553 = vst [vmem:[#allocation7 + $0x60] sm:$0xff] %v3537
      %3554 = vst [vmem:[#allocation7 + $0x68] sm:$0xff] %v3538
      %3555 = vst [vmem:[#allocation7 + $0x70] sm:$0xff] %v3539
      %3556 = vst [vmem:[#allocation7 + $0x78] sm:$0xff] %v3540
      %v3557 = vld [vmem:[#allocation6] sm:$0x3]
      %3558 = vst [vmem:[#allocation9] sm:$0x3] %v3557
    $region40: #{tpu_custom_call.1} parent=1 // pred_fallthru
      _
    // Predicated region
    $region41: #{tpu_custom_call.1} parent=1 // pred_check
      _
    $region42: #{tpu_custom_call.1} parent=1 // pred_check_branch
      %3560 = sbr.rel (0) target = $region44
    $region43: #{tpu_custom_call.1} parent=1 // pred_region
      _
    $region44: #{tpu_custom_call.1} parent=1 // pred_fallthru
      _
    // Predicated region
    $region45: #{tpu_custom_call.1} parent=1 // pred_check
      _
    $region46: #{tpu_custom_call.1} parent=1 // pred_check_branch
      %3562 = sbr.rel (0) target = $region48
    $region47: #{tpu_custom_call.1} parent=1 // pred_region
      %3564 = vsyncadd [#allocation8], 0
      %s3565 = sshll.u32 [#allocation7], 4
      %s3566 = int_to_ptr.vmem [resolvable:$true] %s3565
      %s3567 = sshll.u32 %s7, 4
      %s3568 = int_to_ptr.hbm [resolvable:$true] %s3567
      %3573 = dma.vmem_to_hbm [thread:$0]  %s3566, 2048, %s3568, [#allocation8], 128, 128, 8
    $region48: #{tpu_custom_call.1} parent=1 // pred_fallthru
      _
    // Predicated region
    $region49: #{tpu_custom_call.1} parent=1 // pred_check
      _
    $region50: #{tpu_custom_call.1} parent=1 // pred_check_branch
      %3575 = sbr.rel (0) target = $region52
    $region51: #{tpu_custom_call.1} parent=1 // pred_region
      %3577 = vsyncadd [#allocation10], 0
      %s3579 = sshll.u32 [#allocation9], 4
      %s3580 = int_to_ptr.vmem [resolvable:$true] %s3579
      %s3581 = sshll.u32 %s8, 4
      %s3582 = int_to_ptr.hbm [resolvable:$true] %s3581
      %3584 = dma.vmem_to_hbm [thread:$0]  %s3580, 32, %s3582, [#allocation10]
    $region52: #{tpu_custom_call.1} parent=1 // pred_fallthru
      _
    // Predicated region
    $region53: #{tpu_custom_call.1} parent=1 // pred_check
      _
    $region54: #{tpu_custom_call.1} parent=1 // pred_check_branch
      %3586 = sbr.rel (0) target = $region56
    $region55: #{tpu_custom_call.1} parent=1 // pred_region
      _
    $region56: #{tpu_custom_call.1} parent=1 // pred_fallthru
      _
    // Predicated region
    $region57: #{tpu_custom_call.1} parent=1 // pred_check
      _
    $region58: #{tpu_custom_call.1} parent=1 // pred_check_branch
      %3588 = sbr.rel (0) target = $region60
    $region59: #{tpu_custom_call.1} parent=1 // pred_region
      %3590 = dma.done [#allocation8], 2048
    $region60: #{tpu_custom_call.1} parent=1 // pred_fallthru
      _
    // Predicated region
    $region61: #{tpu_custom_call.1} parent=1 // pred_check
      _
    $region62: #{tpu_custom_call.1} parent=1 // pred_check_branch
      %3592 = sbr.rel (0) target = $region64
    $region63: #{tpu_custom_call.1} parent=1 // pred_region
      %3594 = dma.done [#allocation10], 32
    $region64: #{tpu_custom_call.1} parent=1 // pred_fallthru
      _
    %3595 = vsyncpa [#allocation8], 1
    %3596 = vsyncpa [#allocation10], 1

</llo_original>
